<compile_context>
chip_gen: v5e
topology: v5e:2x2
jax: 0.10.0
libtpu: 0.0.40
codegen_flags: <defaults>
</compile_context>

<pallas_src>
import jax
import jax.numpy as jnp
from jax import lax
from jax.experimental import pallas as pl
from jax.experimental.pallas import tpu as pltpu

# ----------------------------------------------------------------------------- SAC parameter ranges
PARAM_NAMES = ["KC", "PCTIM", "ADIMP", "UZTWM", "UZFWM", "LZTWM", "LZFSM", "LZFPM",
               "RSERV", "PFREE", "RIVA", "ZPERC", "REXP", "UZK", "LZSK", "LZPK",
               "CI", "CGS", "CGP", "KE", "XE"]

# synthetic stand-in for MODEL_PARAM_DICT['sac']['param_range'] (lo, hi) per parameter
SAC_PARAM_RANGES = {
    "KC": (0.1, 1.2), "PCTIM": (0.0, 0.1), "ADIMP": (0.0, 0.3),
    "UZTWM": (1.0, 150.0), "UZFWM": (1.0, 150.0), "LZTWM": (1.0, 500.0),
    "LZFSM": (1.0, 1000.0), "LZFPM": (1.0, 1000.0), "RSERV": (0.0, 0.4),
    "PFREE": (0.0, 0.6), "RIVA": (0.0, 0.3), "ZPERC": (1.0, 250.0),
    "REXP": (1.0, 5.0), "UZK": (0.1, 0.75), "LZSK": (0.01, 0.35),
    "LZPK": (0.001, 0.05), "CI": (0.0, 0.9), "CGS": (0.5, 0.999),
    "CGP": (0.9, 0.999), "KE": (0.0, 1.0), "XE": (0.0, 0.5),
}

NP_RAW = 21        # number of SAC parameters produced by the LSTM head
NP_PAD = 128       # padded (sublane/lane friendly) parameter row count
BATCH_TILE = 128   # basins per lane tile (SAC lane axis / LSTM batch-tile)


def _round_up(n, m):
    return ((n + m - 1) // m) * m


def _pick_time_chunk(T, max_chunk):
    """Largest multiple-of-8 divisor of T that is <= max_chunk (or T itself)."""
    if T <= max_chunk:
        return T
    best = None
    for d in range(8, max_chunk + 1, 8):
        if T % d == 0:
            best = d
    return best if best is not None else T


# ----------------------------------------------------------------------------- LSTM kernel
def _lstm_kernel(z_ref, wih_ref, whh_ref, b_ref, wh_ref, bh_ref, lo_ref, span_ref,
                 out_ref, h_ref, c_ref):
    t_blk = pl.program_id(1)

    @pl.when(t_blk == 0)
    def _():
        h_ref[...] = jnp.zeros_like(h_ref)
        c_ref[...] = jnp.zeros_like(c_ref)

    wih = wih_ref[...]          # (I, 4H)  fused gate weights (gate order: i, f, g, o)
    whh = whh_ref[...]          # (H, 4H)
    b = b_ref[...]              # (1, 4H)
    H = h_ref.shape[1]
    n_steps = z_ref.shape[0]    # Tc

    def step(t, carry):
        h, c = carry
        x = z_ref[t]            # (B, I)
        # one lane-dense MXU dot per step instead of 8 tiny per-gate matmuls
        gates = (jnp.dot(x, wih, preferred_element_type=jnp.float32)
                 + jnp.dot(h, whh, preferred_element_type=jnp.float32)
                 + b)           # (B, 4H)
        i_g = jax.nn.sigmoid(gates[:, 0 * H:1 * H])
        f_g = jax.nn.sigmoid(gates[:, 1 * H:2 * H])
        g_g = jnp.tanh(gates[:, 2 * H:3 * H])
        o_g = jax.nn.sigmoid(gates[:, 3 * H:4 * H])
        c_new = f_g * c + i_g * g_g
        h_new = o_g * jnp.tanh(c_new)
        return h_new, c_new

    h_fin, c_fin = lax.fori_loop(0, n_steps, step, (h_ref[...], c_ref[...]))
    h_ref[...] = h_fin
    c_ref[...] = c_fin

    # final-period head + clamp + denormalization + transpose, fused into the last block
    @pl.when(t_blk == pl.num_programs(1) - 1)
    def _():
        gen = (jnp.dot(h_fin, wh_ref[...], preferred_element_type=jnp.float32)
               + bh_ref[...])                                # (B, NP_PAD)
        p01 = jnp.clip(gen, 0.0, 1.0)                        # param_limit_func == 'clamp'
        out_ref[...] = lo_ref[...] + p01.T * span_ref[...]   # (NP_PAD, B), denormalized


def lstm_scaled_params(z, wih_cat, whh_cat, b_cat, whead, bhead, lo, span, *,
                       time_chunk, batch_tile):
    """z: (T, B_pad, I). Returns denormalized SAC params in SAC layout: (NP_PAD, B_pad)."""
    T, B, I = z.shape
    H, H4 = whh_cat.shape
    NP = whead.shape[1]
    nB = B // batch_tile
    nT = T // time_chunk
    return pl.pallas_call(
        _lstm_kernel,
        out_shape=jax.ShapeDtypeStruct((NP, B), jnp.float32),
        grid_spec=pltpu.PrefetchScalarGridSpec(
            num_scalar_prefetch=0,
            grid=(nB, nT),
            in_specs=[
                pl.BlockSpec((time_chunk, batch_tile, I), lambda b, t: (t, b, 0)),
                pl.BlockSpec((I, H4), lambda b, t: (0, 0)),
                pl.BlockSpec((H, H4), lambda b, t: (0, 0)),
                pl.BlockSpec((1, H4), lambda b, t: (0, 0)),
                pl.BlockSpec((H, NP), lambda b, t: (0, 0)),
                pl.BlockSpec((1, NP), lambda b, t: (0, 0)),
                pl.BlockSpec((NP, 1), lambda b, t: (0, 0)),
                pl.BlockSpec((NP, 1), lambda b, t: (0, 0)),
            ],
            out_specs=pl.BlockSpec((NP, batch_tile), lambda b, t: (0, b)),
            scratch_shapes=[pltpu.VMEM((batch_tile, H), jnp.float32),
                            pltpu.VMEM((batch_tile, H), jnp.float32)],
        ),
        compiler_params=pltpu.CompilerParams(
            dimension_semantics=("parallel", "arbitrary")),
    )(z, wih_cat, whh_cat, b_cat, whead, bhead, lo, span)


# ----------------------------------------------------------------------------- SAC kernel
def _sac_kernel(params_ref, prcp_ref, pet_ref, q_ref, state_ref):
    t_blk = pl.program_id(1)

    @pl.when(t_blk == 0)
    def _():
        # warmup_length == 0 branch: all states (and mq) initialized to 0.01
        state_ref[...] = jnp.full(state_ref.shape, 0.01, jnp.float32)

    def prm(k):
        return params_ref[k:k + 1, :]                        # (1, B) single-row vld

    kc, pctim, adimp, uztwm, uzfwm, lztwm, lzfsm, lzfpm = (prm(i) for i in range(8))
    rserv, pfree, riva, zperc, rexp, uzk, lzsk, lzpk = (prm(i) for i in range(8, 16))
    ci, cgs, cgp, ke, xe = (prm(i) for i in range(16, 21))
    del riva   # riva only feeds e_sim (e4/et), which is not returned by DplLstmSac

    # ---- time-invariant per-basin quantities, hoisted out of the per-step body ----
    r_uztwm = 1.0 / uztwm
    r_lztwm = 1.0 / lztwm
    r_uzfwm = 1.0 / uzfwm
    r_uzlz = 1.0 / (uztwm + lztwm)
    sum_uz = uztwm + uzfwm
    r_sum_uz = 1.0 / sum_uz
    parea = 1.0 - pctim - adimp                 # unclamped (used for rs and u)
    parea_cl = jnp.maximum(parea, 0.0)          # clamped   (used for qs)
    u = parea * 1000.0
    pbase = lzfsm * lzsk + lzfpm * lzpk
    lz_sum = lzfsm + lzfpm
    lz_sum_t = lz_sum + lztwm
    r_lz_sum_t = 1.0 / lz_sum_t
    r_lzfpm = 1.0 / lzfpm
    coef_a = lzfpm / lz_sum
    zero_term = 1.0 - lzfsm / lzfsm             # == 0, kept verbatim from the reference
    saved = rserv * lz_sum
    r_ratio_den = 1.0 / (lz_sum - saved + lztwm)
    # Muskingum routing constants (hydrodt = 1 day, rivernumber == 1)
    dt = 12.0
    ko = ke * 24.0
    c1 = jnp.maximum(ko * (1.0 - xe) + dt, 0.0)
    r_c1 = 1.0 / c1
    c2 = jnp.maximum((-ko * xe + dt) * r_c1, 0.0)
    c3 = jnp.maximum((ko * (1.0 - xe) - dt) * r_c1, 0.0)
    c1_ = (ko * xe + dt) * r_c1

    n_steps = prcp_ref.shape[0]                 # Tc

    def step(t, carry):
        (auztw, alztw, uztw, uzfw, lztw, lzfs, lzfp,
         qs, qi, qgs, qgp, mq) = carry

        # ----- forcing for this step
        p = jnp.maximum(prcp_ref[pl.ds(t, 1), :], 0.0)
        pet_t = pet_ref[pl.ds(t, 1), :]
        finite = (pet_t == pet_t) & (jnp.abs(pet_t) < jnp.inf)   # nan_to_num(0, 0, 0)
        e = jnp.maximum(jnp.where(finite, pet_t, 0.0), 0.0)
        ep = kc * e

        # ----- runoff generation (reference loop 1); e_sim terms omitted (q only)
        roimp = pctim * p
        ae1 = jnp.minimum(auztw, ep * (auztw * r_uztwm))
        ae3 = jnp.maximum((ep - ae1) * (alztw * r_uzlz), 0.0)
        pav = jnp.maximum(p - (uztwm - (auztw - ae1)), 0.0)
        adsur = jnp.maximum(pav * ((alztw - ae3) * r_lztwm), 0.0)
        ars = jnp.maximum(pav - adsur + (alztw - ae3) - lztwm, 0.0)
        auztw_n = jnp.maximum(jnp.minimum(uztwm, auztw - ae1 + p), 0.0)
        alztw_n = jnp.maximum(jnp.minimum(lztwm, pav - adsur + (alztw - ae3)), 0.0)
        e1 = jnp.minimum(uztw, ep * (uztw * r_uztwm))
        e2 = jnp.maximum(jnp.minimum(uzfw, ep - e1), 0.0)
        e3 = jnp.maximum((ep - e1 - e2) * (lztw * r_uzlz), 0.0)
        lt1 = jnp.maximum(lztw - e3, 0.0)

        adsur_adimp = adsur * adimp
        ars_adimp = ars * adimp
        rs = jnp.maximum(p + (uztw + uzfw - e1 - e2) - sum_uz, 0.0) * parea
        ut = jnp.maximum(jnp.minimum(uztwm, uztw - e1 + p), 0.0)
        uf = jnp.maximum(jnp.minimum(uzfwm, p + (uztw + uzfw - e1 - e2) - ut), 0.0)
        ri = uf * uzk
        uf = jnp.maximum(uf - ri, 0.0)
        defr = jnp.maximum(1.0 - (lzfs + lzfp + lt1) * r_lz_sum_t, 0.0)
        # pow(defr, rexp) via exp/log on the EUP, guarded so pow(0, r>0) == 0
        defr_pow = jnp.where(defr > 0.0,
                             jnp.exp(rexp * jnp.log(jnp.where(defr > 0.0, defr, 1.0))),
                             0.0)
        perc = pbase * (1.0 + zperc * defr_pow) * uf * r_uzfwm
        rate = jnp.maximum(jnp.minimum(perc, lz_sum_t - (lzfs + lzfp + lt1)), 0.0)
        fx = jnp.maximum(jnp.minimum(lz_sum - (lzfs + lzfp),
                                     jnp.maximum(rate - (lztwm - lt1), rate * pfree)),
                         0.0)
        perct = jnp.maximum(rate - fx, 0.0)
        one_m = 1.0 - lzfp * r_lzfpm
        coef = coef_a * (2.0 * one_m / (one_m + zero_term))
        coef = jnp.minimum(jnp.maximum(coef, 0.0), 1.0)
        percp = jnp.maximum(jnp.minimum(lzfpm - lzfp,
                                        jnp.maximum(fx - (lzfsm - lzfs), coef * fx)),
                            0.0)
        percs = jnp.maximum(fx - percp, 0.0)
        lt2 = lt1 + perct
        ls = lzfs + percs
        lp = lzfp + percp
        rgs = ls * lzsk
        ls2 = jnp.maximum(ls - rgs, 0.0)
        rgp = lp * lzpk
        lp2 = jnp.maximum(lp - rgp, 0.0)
        utr = ut * r_uztwm
        ufr = uf * r_uzfwm
        utfr = (ut + uf) * r_sum_uz
        cond_u = utr < ufr
        uztw_n = jnp.where(cond_u, uztwm * utfr, ut)
        uzfw_n = jnp.where(cond_u, uzfwm * utfr, uf)
        ratio = jnp.maximum((ls + lp - saved + lt2) * r_ratio_den, 0.0)
        ltr = lt2 * r_lztwm
        cond_l = ltr < ratio
        lztw_n = jnp.where(cond_l, lztwm * ratio, lt2)
        lzfs_n = jnp.where(cond_l, jnp.maximum(ls - (lztw_n - lt2), 0.0), ls2)
        lzfp_n = jnp.where(cond_l, lp - jnp.maximum(lztw_n - lt2 - ls, 0.0), lp2)

        # ----- runoff concentration + Muskingum routing (reference loop 2, rivernumber==1)
        q_prev = qs + qi + qgs + qgp
        # NOTE: (adsur*adimp + ars*adimp) * adimp reproduces the reference verbatim.
        qs_n = (roimp + (adsur_adimp + ars_adimp) * adimp + rs * parea_cl) * 1000.0
        qi_n = jnp.maximum(ci * qi + (1.0 - ci) * ri * u, 0.0)
        qgs_n = jnp.maximum(cgs * qgs + (1.0 - cgs) * rgs * u, 0.0)
        qgp_n = jnp.maximum(cgp * qgp + (1.0 - cgp) * rgp * u, 0.0)
        q_new = qs_n + qi_n + qgs_n + qgp_n
        i2_ = c1_ * q_prev + c2 * q_new + c3 * mq
        mq_n = i2_

        q_ref[pl.ds(t, 1), :] = i2_          # full-lane, unmasked row store into resident block

        return (auztw_n, alztw_n, uztw_n, uzfw_n, lztw_n, lzfs_n, lzfp_n,
                qs_n, qi_n, qgs_n, qgp_n, mq_n)

    S = state_ref[...]                                        # one coalesced load per chunk
    init = tuple(S[k:k + 1, :] for k in range(12))
    final = lax.fori_loop(0, n_steps, step, init)
    state_ref[...] = jnp.concatenate(final, axis=0)           # one coalesced store per chunk


def sac_run(prcp, pet, scaled_params, *, time_chunk, batch_tile):
    """prcp, pet: (T, B_pad); scaled_params: (NP_PAD, B_pad). Returns q: (T, B_pad)."""
    T, B = prcp.shape
    NP = scaled_params.shape[0]
    nB = B // batch_tile
    nT = T // time_chunk
    return pl.pallas_call(
        _sac_kernel,
        out_shape=jax.ShapeDtypeStruct((T, B), jnp.float32),
        grid_spec=pltpu.PrefetchScalarGridSpec(
            num_scalar_prefetch=0,
            grid=(nB, nT),
            in_specs=[
                pl.BlockSpec((NP, batch_tile), lambda b, t: (0, b)),
                pl.BlockSpec((time_chunk, batch_tile), lambda b, t: (t, b)),
                pl.BlockSpec((time_chunk, batch_tile), lambda b, t: (t, b)),
            ],
            out_specs=pl.BlockSpec((time_chunk, batch_tile), lambda b, t: (t, b)),
            scratch_shapes=[pltpu.VMEM((12, batch_tile), jnp.float32)],
        ),
        compiler_params=pltpu.CompilerParams(
            dimension_semantics=("parallel", "arbitrary")),
    )(scaled_params, prcp, pet)


# ----------------------------------------------------------------------------- full forward
def dpl_lstm_sac_forward(x, z, lstm_weights, param_ranges, *,
                         time_chunk=64, batch_tile=BATCH_TILE):
    """
    x: [T, B, F_x] physical forcing (x[...,0]=prcp, x[...,1]=pet), not normalized
    z: [T, B, F_in] normalized DL input
    lstm_weights: (wih (4,I,H), whh (4,H,H), bias (4,1,H), whead (H,21), bhead (1,21))
    param_ranges: (21, 2) [lo, hi] per SAC parameter
    Returns q: [T, B, 1]
    """
    T, B, _ = x.shape
    I = z.shape[2]
    wih, whh, bias, whead, bhead = lstm_weights
    H = whh.shape[1]

    Tc = _pick_time_chunk(T, time_chunk)
    B_pad = _round_up(B, batch_tile)

    def pad_b(a, axis):
        if a.shape[axis] == B_pad:
            return a
        widths = [(0, 0)] * a.ndim
        widths[axis] = (0, B_pad - a.shape[axis])
        return jnp.pad(a, widths)

    # pad basins to a full 128-lane tile (padded basins are sliced off at the end)
    z_p = pad_b(z.astype(jnp.float32), 1)
    prcp = pad_b(x[:, :, 0].astype(jnp.float32), 1)
    pet = pad_b(x[:, :, 1].astype(jnp.float32), 1)

    # fuse the 4 per-gate weight blocks into lane-dense (.., 4H) matrices (gate order i,f,g,o)
    wih_cat = jnp.swapaxes(wih, 0, 1).reshape(I, 4 * H).astype(jnp.float32)
    whh_cat = jnp.swapaxes(whh, 0, 1).reshape(H, 4 * H).astype(jnp.float32)
    b_cat = jnp.swapaxes(bias, 0, 1).reshape(1, 4 * H).astype(jnp.float32)

    # pad the 21-parameter head / ranges to NP_PAD (sublane/lane friendly)
    whead_p = jnp.zeros((H, NP_PAD), jnp.float32).at[:, :NP_RAW].set(whead.astype(jnp.float32))
    bhead_p = jnp.zeros((1, NP_PAD), jnp.float32).at[:, :NP_RAW].set(bhead.astype(jnp.float32))
    lo = jnp.zeros((NP_PAD, 1), jnp.float32).at[:NP_RAW, 0].set(
        param_ranges[:, 0].astype(jnp.float32))
    span = jnp.zeros((NP_PAD, 1), jnp.float32).at[:NP_RAW, 0].set(
        (param_ranges[:, 1] - param_ranges[:, 0]).astype(jnp.float32))

    # LSTM -> clamp -> denormalize -> (NP_PAD, B_pad), already in SAC layout
    scaled = lstm_scaled_params(z_p, wih_cat, whh_cat, b_cat, whead_p, bhead_p, lo, span,
                                time_chunk=Tc, batch_tile=batch_tile)

    # TODO(synk): the reference raises ValueError on NaN in the LSTM output; that host-side
    # check would force a device sync between the two kernels, so it is done by the caller
    # on the final q instead (NaN params propagate to q).
    q = sac_run(prcp, pet, scaled, time_chunk=Tc, batch_tile=batch_tile)   # (T, B_pad)
    return q[:, :B, None]                                                  # (T, B, 1)


# ----------------------------------------------------------------------------- demo
if __name__ == "__main__":
    key = jax.random.PRNGKey(0)
    T, B = 32, 4                      # seq length, basins (batch)
    n_in, n_hidden, n_out = 8, 32, 21

    ks = jax.random.split(key, 9)
    z = jax.random.normal(ks[0], (T, B, n_in), jnp.float32)
    prcp = jax.random.uniform(ks[1], (T, B), jnp.float32, 0.0, 20.0)
    pet = jax.random.uniform(ks[2], (T, B), jnp.float32, 0.0, 5.0)
    extra = jax.random.normal(ks[3], (T, B, 1), jnp.float32)
    x = jnp.concatenate([prcp[..., None], pet[..., None], extra], axis=-1)   # (T, B, 3)

    s = 1.0 / (n_hidden ** 0.5)
    wih = jax.random.uniform(ks[4], (4, n_in, n_hidden), jnp.float32, -s, s)     # gates i,f,g,o
    whh = jax.random.uniform(ks[5], (4, n_hidden, n_hidden), jnp.float32, -s, s)
    bias = jax.random.uniform(ks[6], (4, 1, n_hidden), jnp.float32, -s, s)
    whead = jax.random.uniform(ks[7], (n_hidden, n_out), jnp.float32, -s, s)
    bhead = jax.random.uniform(ks[8], (1, n_out), jnp.float32, -s, s)

    ranges = jnp.array([SAC_PARAM_RANGES[k] for k in PARAM_NAMES], jnp.float32)  # (21, 2)

    fwd = jax.jit(dpl_lstm_sac_forward, static_argnames=("time_chunk", "batch_tile"))
    q = fwd(x, z, (wih, whh, bias, whead, bhead), ranges, time_chunk=8)
    q = jax.block_until_ready(q)

    assert q.shape == (T, B, 1), q.shape
    assert q.dtype == jnp.float32
    assert not bool(jnp.isnan(q).any())
    print("KERNEL_OK")
</pallas_src>

<mosaic_0001>
module attributes {stable_mosaic.version = 11 : i64} {
  func.func @_lstm_kernel(%arg0: i32, %arg1: i32, %arg2: memref<8x128x8xf32, #tpu.memory_space<vmem>>, %arg3: memref<8x128xf32, #tpu.memory_space<vmem>>, %arg4: memref<32x128xf32, #tpu.memory_space<vmem>>, %arg5: memref<1x128xf32, #tpu.memory_space<vmem>>, %arg6: memref<32x128xf32, #tpu.memory_space<vmem>>, %arg7: memref<1x128xf32, #tpu.memory_space<vmem>>, %arg8: memref<128x1xf32, #tpu.memory_space<vmem>>, %arg9: memref<128x1xf32, #tpu.memory_space<vmem>>, %arg10: memref<128x128xf32, #tpu.memory_space<vmem>>, %arg11: memref<128x32xf32, #tpu.memory_space<vmem>>, %arg12: memref<128x32xf32, #tpu.memory_space<vmem>>) attributes {dimension_semantics = [#tpu.dimension_semantics<parallel>, #tpu.dimension_semantics<arbitrary>], iteration_bounds = array<i64: 1, 4>, scalar_prefetch = 0 : i64, scratch_operands = 2 : i64, tpu.core_type = #tpu.core_type<tc>, window_params = [{transform_indices = @transform_0, window_bounds = array<i64: 8, 128, 8>}, {pipeline_mode = #tpu.pipeline_mode<synchronous>, transform_indices = @transform_1, window_bounds = array<i64: 8, 128>}, {pipeline_mode = #tpu.pipeline_mode<synchronous>, transform_indices = @transform_2, window_bounds = array<i64: 32, 128>}, {pipeline_mode = #tpu.pipeline_mode<synchronous>, transform_indices = @transform_3, window_bounds = array<i64: 1, 128>}, {pipeline_mode = #tpu.pipeline_mode<synchronous>, transform_indices = @transform_4, window_bounds = array<i64: 32, 128>}, {pipeline_mode = #tpu.pipeline_mode<synchronous>, transform_indices = @transform_5, window_bounds = array<i64: 1, 128>}, {pipeline_mode = #tpu.pipeline_mode<synchronous>, transform_indices = @transform_6, window_bounds = array<i64: 128, 1>}, {pipeline_mode = #tpu.pipeline_mode<synchronous>, transform_indices = @transform_7, window_bounds = array<i64: 128, 1>}, {transform_indices = @transform_8, window_bounds = array<i64: 128, 128>}]} {
    %c0_i32 = arith.constant 0 : i32
    %0 = arith.cmpi eq, %arg1, %c0_i32 : i32
    %1 = arith.extui %0 : i1 to i32
    %c0_i32_0 = arith.constant 0 : i32
    %2 = arith.cmpi ne, %1, %c0_i32_0 : i32
    scf.if %2 {
      %cst = arith.constant 0.000000e+00 : f32
      %15 = vector.broadcast %cst : f32 to vector<128x32xf32>
      %c0_17 = arith.constant 0 : index
      %c0_18 = arith.constant 0 : index
      %16 = vector.load %arg11[%c0_17, %c0_18] : memref<128x32xf32, #tpu.memory_space<vmem>>, vector<128x32xf32>
      tpu.vector_store %arg11[%c0_17, %c0_18], %15 {strides = array<i32>} : memref<128x32xf32, #tpu.memory_space<vmem>>, vector<128x32xf32>,
      %cst_19 = arith.constant 0.000000e+00 : f32
      %17 = vector.broadcast %cst_19 : f32 to vector<128x32xf32>
      %c0_20 = arith.constant 0 : index
      %c0_21 = arith.constant 0 : index
      %18 = vector.load %arg12[%c0_20, %c0_21] : memref<128x32xf32, #tpu.memory_space<vmem>>, vector<128x32xf32>
      tpu.vector_store %arg12[%c0_20, %c0_21], %17 {strides = array<i32>} : memref<128x32xf32, #tpu.memory_space<vmem>>, vector<128x32xf32>,
    } else {
    }
    %c0 = arith.constant 0 : index
    %c0_1 = arith.constant 0 : index
    %3 = vector.load %arg3[%c0, %c0_1] : memref<8x128xf32, #tpu.memory_space<vmem>>, vector<8x128xf32>
    %c0_2 = arith.constant 0 : index
    %c0_3 = arith.constant 0 : index
    %4 = vector.load %arg4[%c0_2, %c0_3] : memref<32x128xf32, #tpu.memory_space<vmem>>, vector<32x128xf32>
    %c0_4 = arith.constant 0 : index
    %c0_5 = arith.constant 0 : index
    %5 = vector.load %arg5[%c0_4, %c0_5] : memref<1x128xf32, #tpu.memory_space<vmem>>, vector<1x128xf32>
    %c0_6 = arith.constant 0 : index
    %c0_7 = arith.constant 0 : index
    %6 = vector.load %arg11[%c0_6, %c0_7] : memref<128x32xf32, #tpu.memory_space<vmem>>, vector<128x32xf32>
    %c0_8 = arith.constant 0 : index
    %c0_9 = arith.constant 0 : index
    %7 = vector.load %arg12[%c0_8, %c0_9] : memref<128x32xf32, #tpu.memory_space<vmem>>, vector<128x32xf32>
    %c0_i32_10 = arith.constant 0 : i32
    %c8_i32 = arith.constant 8 : i32
    %8 = arith.addi %c0_i32_10, %c8_i32 : i32
    %c1_i32 = arith.constant 1 : i32
    %9:2 = scf.for %arg13 = %c0_i32_10 to %8 step %c1_i32 iter_args(%arg14 = %6, %arg15 = %7) -> (vector<128x32xf32>, vector<128x32xf32>)  : i32 {
      %15 = arith.index_cast %arg13 : i32 to index
      %c0_17 = arith.constant 0 : index
      %c0_18 = arith.constant 0 : index
      %16 = vector.load %arg2[%15, %c0_17, %c0_18] : memref<8x128x8xf32, #tpu.memory_space<vmem>>, vector<1x128x8xf32>
      %17 = vector.shape_cast %16 : vector<1x128x8xf32> to vector<128x8xf32>
      %cst = arith.constant dense<0.000000e+00> : vector<128x128xf32>
      %18 = tpu.matmul %17, %3, %cst {dimension_numbers = #tpu.dot_dimension_numbers<[1], [0], [0], [1], [0, 0, 1, 1], [], []>} : vector<128x8xf32>, vector<8x128xf32>, vector<128x128xf32> -> vector<128x128xf32>
      %cst_19 = arith.constant dense<0.000000e+00> : vector<128x128xf32>
      %19 = tpu.matmul %arg14, %4, %cst_19 {dimension_numbers = #tpu.dot_dimension_numbers<[1], [0], [0], [1], [0, 0, 1, 1], [], []>} : vector<128x32xf32>, vector<32x128xf32>, vector<128x128xf32> -> vector<128x128xf32>
      %20 = arith.addf %18, %19 : vector<128x128xf32>
      %21 = vector.broadcast %5 : vector<1x128xf32> to vector<128x128xf32>
      %22 = arith.addf %20, %21 : vector<128x128xf32>
      %23 = vector.extract_strided_slice %22 {offsets = [0, 0], sizes = [128, 32], strides = [1, 1]} : vector<128x128xf32> to vector<128x32xf32>
      %24 = arith.negf %23 : vector<128x32xf32>
      %25 = math.exp %24 : vector<128x32xf32>
      %cst_20 = arith.constant 1.000000e+00 : f32
      %26 = vector.broadcast %cst_20 : f32 to vector<128x32xf32>
      %27 = arith.addf %26, %25 : vector<128x32xf32>
      %28 = arith.divf %26, %27 : vector<128x32xf32>
      %29 = vector.extract_strided_slice %22 {offsets = [0, 32], sizes = [128, 32], strides = [1, 1]} : vector<128x128xf32> to vector<128x32xf32>
      %30 = arith.negf %29 : vector<128x32xf32>
      %31 = math.exp %30 : vector<128x32xf32>
      %cst_21 = arith.constant 1.000000e+00 : f32
      %32 = vector.broadcast %cst_21 : f32 to vector<128x32xf32>
      %33 = arith.addf %32, %31 : vector<128x32xf32>
      %34 = arith.divf %32, %33 : vector<128x32xf32>
      %35 = vector.extract_strided_slice %22 {offsets = [0, 64], sizes = [128, 32], strides = [1, 1]} : vector<128x128xf32> to vector<128x32xf32>
      %36 = math.tanh %35 : vector<128x32xf32>
      %37 = vector.extract_strided_slice %22 {offsets = [0, 96], sizes = [128, 32], strides = [1, 1]} : vector<128x128xf32> to vector<128x32xf32>
      %38 = arith.negf %37 : vector<128x32xf32>
      %39 = math.exp %38 : vector<128x32xf32>
      %cst_22 = arith.constant 1.000000e+00 : f32
      %40 = vector.broadcast %cst_22 : f32 to vector<128x32xf32>
      %41 = arith.addf %40, %39 : vector<128x32xf32>
      %42 = arith.divf %40, %41 : vector<128x32xf32>
      %43 = arith.mulf %34, %arg15 : vector<128x32xf32>
      %44 = arith.mulf %28, %36 : vector<128x32xf32>
      %45 = arith.addf %43, %44 : vector<128x32xf32>
      %46 = math.tanh %45 : vector<128x32xf32>
      %47 = arith.mulf %42, %46 : vector<128x32xf32>
      scf.yield %47, %45 : vector<128x32xf32>, vector<128x32xf32>
    }
    %c8_i32_11 = arith.constant 8 : i32
    %c0_12 = arith.constant 0 : index
    %c0_13 = arith.constant 0 : index
    %10 = vector.load %arg11[%c0_12, %c0_13] : memref<128x32xf32, #tpu.memory_space<vmem>>, vector<128x32xf32>
    tpu.vector_store %arg11[%c0_12, %c0_13], %9#0 {strides = array<i32>} : memref<128x32xf32, #tpu.memory_space<vmem>>, vector<128x32xf32>,
    %c0_14 = arith.constant 0 : index
    %c0_15 = arith.constant 0 : index
    %11 = vector.load %arg12[%c0_14, %c0_15] : memref<128x32xf32, #tpu.memory_space<vmem>>, vector<128x32xf32>
    tpu.vector_store %arg12[%c0_14, %c0_15], %9#1 {strides = array<i32>} : memref<128x32xf32, #tpu.memory_space<vmem>>, vector<128x32xf32>,
    %c3_i32 = arith.constant 3 : i32
    %12 = arith.cmpi eq, %arg1, %c3_i32 : i32
    %13 = arith.extui %12 : i1 to i32
    %c0_i32_16 = arith.constant 0 : i32
    %14 = arith.cmpi ne, %13, %c0_i32_16 : i32
    scf.if %14 {
      %c0_17 = arith.constant 0 : index
      %c0_18 = arith.constant 0 : index
      %15 = vector.load %arg6[%c0_17, %c0_18] : memref<32x128xf32, #tpu.memory_space<vmem>>, vector<32x128xf32>
      %cst = arith.constant dense<0.000000e+00> : vector<128x128xf32>
      %16 = tpu.matmul %9#0, %15, %cst {dimension_numbers = #tpu.dot_dimension_numbers<[1], [0], [0], [1], [0, 0, 1, 1], [], []>} : vector<128x32xf32>, vector<32x128xf32>, vector<128x128xf32> -> vector<128x128xf32>
      %c0_19 = arith.constant 0 : index
      %c0_20 = arith.constant 0 : index
      %17 = vector.load %arg7[%c0_19, %c0_20] : memref<1x128xf32, #tpu.memory_space<vmem>>, vector<1x128xf32>
      %18 = vector.broadcast %17 : vector<1x128xf32> to vector<128x128xf32>
      %19 = arith.addf %16, %18 : vector<128x128xf32>
      %cst_21 = arith.constant 0.000000e+00 : f32
      %cst_22 = arith.constant 1.000000e+00 : f32
      %20 = vector.broadcast %cst_21 : f32 to vector<128x128xf32>
      %21 = arith.maximumf %20, %19 : vector<128x128xf32>
      %22 = vector.broadcast %cst_22 : f32 to vector<128x128xf32>
      %23 = arith.minimumf %22, %21 : vector<128x128xf32>
      %c0_23 = arith.constant 0 : index
      %c0_24 = arith.constant 0 : index
      %24 = vector.load %arg8[%c0_23, %c0_24] : memref<128x1xf32, #tpu.memory_space<vmem>>, vector<128x1xf32>
      %25 = tpu.transpose %23, [1, 0] : vector<128x128xf32> -> vector<128x128xf32>
      %c0_25 = arith.constant 0 : index
      %c0_26 = arith.constant 0 : index
      %26 = vector.load %arg9[%c0_25, %c0_26] : memref<128x1xf32, #tpu.memory_space<vmem>>, vector<128x1xf32>
      %27 = vector.broadcast %26 : vector<128x1xf32> to vector<128x128xf32>
      %28 = arith.mulf %25, %27 : vector<128x128xf32>
      %29 = vector.broadcast %24 : vector<128x1xf32> to vector<128x128xf32>
      %30 = arith.addf %29, %28 : vector<128x128xf32>
      %c0_27 = arith.constant 0 : index
      %c0_28 = arith.constant 0 : index
      %31 = vector.load %arg10[%c0_27, %c0_28] : memref<128x128xf32, #tpu.memory_space<vmem>>, vector<128x128xf32>
      tpu.vector_store %arg10[%c0_27, %c0_28], %30 {strides = array<i32>} : memref<128x128xf32, #tpu.memory_space<vmem>>, vector<128x128xf32>,
    } else {
    }
    return
  }
  func.func @transform_0(%arg0: i32, %arg1: i32) -> (i32, i32, i32) {
    %c0_i32 = arith.constant 0 : i32
    %c0_i32_0 = arith.constant 0 : i32
    return %arg1, %arg0, %c0_i32 : i32, i32, i32
  }
  func.func @transform_1(%arg0: i32, %arg1: i32) -> (i32, i32) {
    %c0_i32 = arith.constant 0 : i32
    %c0_i32_0 = arith.constant 0 : i32
    %c0_i32_1 = arith.constant 0 : i32
    return %c0_i32, %c0_i32_0 : i32, i32
  }
  func.func @transform_2(%arg0: i32, %arg1: i32) -> (i32, i32) {
    %c0_i32 = arith.constant 0 : i32
    %c0_i32_0 = arith.constant 0 : i32
    %c0_i32_1 = arith.constant 0 : i32
    return %c0_i32, %c0_i32_0 : i32, i32
  }
  func.func @transform_3(%arg0: i32, %arg1: i32) -> (i32, i32) {
    %c0_i32 = arith.constant 0 : i32
    %c0_i32_0 = arith.constant 0 : i32
    %c0_i32_1 = arith.constant 0 : i32
    return %c0_i32, %c0_i32_0 : i32, i32
  }
  func.func @transform_4(%arg0: i32, %arg1: i32) -> (i32, i32) {
    %c0_i32 = arith.constant 0 : i32
    %c0_i32_0 = arith.constant 0 : i32
    %c0_i32_1 = arith.constant 0 : i32
    return %c0_i32, %c0_i32_0 : i32, i32
  }
  func.func @transform_5(%arg0: i32, %arg1: i32) -> (i32, i32) {
    %c0_i32 = arith.constant 0 : i32
    %c0_i32_0 = arith.constant 0 : i32
    %c0_i32_1 = arith.constant 0 : i32
    return %c0_i32, %c0_i32_0 : i32, i32
  }
  func.func @transform_6(%arg0: i32, %arg1: i32) -> (i32, i32) {
    %c0_i32 = arith.constant 0 : i32
    %c0_i32_0 = arith.constant 0 : i32
    %c0_i32_1 = arith.constant 0 : i32
    return %c0_i32, %c0_i32_0 : i32, i32
  }
  func.func @transform_7(%arg0: i32, %arg1: i32) -> (i32, i32) {
    %c0_i32 = arith.constant 0 : i32
    %c0_i32_0 = arith.constant 0 : i32
    %c0_i32_1 = arith.constant 0 : i32
    return %c0_i32, %c0_i32_0 : i32, i32
  }
  func.func @transform_8(%arg0: i32, %arg1: i32) -> (i32, i32) {
    %c0_i32 = arith.constant 0 : i32
    %c0_i32_0 = arith.constant 0 : i32
    return %c0_i32, %arg0 : i32, i32
  }
}

module attributes {stable_mosaic.version = 11 : i64} {
  func.func @_sac_kernel(%arg0: i32, %arg1: i32, %arg2: memref<128x128xf32, #tpu.memory_space<vmem>>, %arg3: memref<8x128xf32, #tpu.memory_space<vmem>>, %arg4: memref<8x128xf32, #tpu.memory_space<vmem>>, %arg5: memref<8x128xf32, #tpu.memory_space<vmem>>, %arg6: memref<12x128xf32, #tpu.memory_space<vmem>>) attributes {dimension_semantics = [#tpu.dimension_semantics<parallel>, #tpu.dimension_semantics<arbitrary>], iteration_bounds = array<i64: 1, 4>, scalar_prefetch = 0 : i64, scratch_operands = 1 : i64, tpu.core_type = #tpu.core_type<tc>, window_params = [{transform_indices = @transform_0, window_bounds = array<i64: 128, 128>}, {transform_indices = @transform_1, window_bounds = array<i64: 8, 128>}, {transform_indices = @transform_2, window_bounds = array<i64: 8, 128>}, {transform_indices = @transform_3, window_bounds = array<i64: 8, 128>}]} {
    %c0_i32 = arith.constant 0 : i32
    %0 = arith.cmpi eq, %arg1, %c0_i32 : i32
    %1 = arith.extui %0 : i1 to i32
    %c0_i32_0 = arith.constant 0 : i32
    %2 = arith.cmpi ne, %1, %c0_i32_0 : i32
    scf.if %2 {
      %cst_50 = arith.constant 0.00999999977 : f32
      %108 = vector.broadcast %cst_50 : f32 to vector<12x128xf32>
      %c0_51 = arith.constant 0 : index
      %c0_52 = arith.constant 0 : index
      %109 = vector.load %arg6[%c0_51, %c0_52] : memref<12x128xf32, #tpu.memory_space<vmem>>, vector<12x128xf32>
      tpu.vector_store %arg6[%c0_51, %c0_52], %108 {strides = array<i32>} : memref<12x128xf32, #tpu.memory_space<vmem>>, vector<12x128xf32>,
    } else {
    }
    %c0 = arith.constant 0 : index
    %c0_1 = arith.constant 0 : index
    %3 = vector.load %arg2[%c0, %c0_1] : memref<128x128xf32, #tpu.memory_space<vmem>>, vector<1x128xf32>
    %c1 = arith.constant 1 : index
    %c0_2 = arith.constant 0 : index
    %4 = vector.load %arg2[%c1, %c0_2] : memref<128x128xf32, #tpu.memory_space<vmem>>, vector<1x128xf32>
    %c2 = arith.constant 2 : index
    %c0_3 = arith.constant 0 : index
    %5 = vector.load %arg2[%c2, %c0_3] : memref<128x128xf32, #tpu.memory_space<vmem>>, vector<1x128xf32>
    %c3 = arith.constant 3 : index
    %c0_4 = arith.constant 0 : index
    %6 = vector.load %arg2[%c3, %c0_4] : memref<128x128xf32, #tpu.memory_space<vmem>>, vector<1x128xf32>
    %c4 = arith.constant 4 : index
    %c0_5 = arith.constant 0 : index
    %7 = vector.load %arg2[%c4, %c0_5] : memref<128x128xf32, #tpu.memory_space<vmem>>, vector<1x128xf32>
    %c5 = arith.constant 5 : index
    %c0_6 = arith.constant 0 : index
    %8 = vector.load %arg2[%c5, %c0_6] : memref<128x128xf32, #tpu.memory_space<vmem>>, vector<1x128xf32>
    %c6 = arith.constant 6 : index
    %c0_7 = arith.constant 0 : index
    %9 = vector.load %arg2[%c6, %c0_7] : memref<128x128xf32, #tpu.memory_space<vmem>>, vector<1x128xf32>
    %c7 = arith.constant 7 : index
    %c0_8 = arith.constant 0 : index
    %10 = vector.load %arg2[%c7, %c0_8] : memref<128x128xf32, #tpu.memory_space<vmem>>, vector<1x128xf32>
    %c8 = arith.constant 8 : index
    %c0_9 = arith.constant 0 : index
    %11 = vector.load %arg2[%c8, %c0_9] : memref<128x128xf32, #tpu.memory_space<vmem>>, vector<1x128xf32>
    %c9 = arith.constant 9 : index
    %c0_10 = arith.constant 0 : index
    %12 = vector.load %arg2[%c9, %c0_10] : memref<128x128xf32, #tpu.memory_space<vmem>>, vector<1x128xf32>
    %c11 = arith.constant 11 : index
    %c0_11 = arith.constant 0 : index
    %13 = vector.load %arg2[%c11, %c0_11] : memref<128x128xf32, #tpu.memory_space<vmem>>, vector<1x128xf32>
    %c12 = arith.constant 12 : index
    %c0_12 = arith.constant 0 : index
    %14 = vector.load %arg2[%c12, %c0_12] : memref<128x128xf32, #tpu.memory_space<vmem>>, vector<1x128xf32>
    %c13 = arith.constant 13 : index
    %c0_13 = arith.constant 0 : index
    %15 = vector.load %arg2[%c13, %c0_13] : memref<128x128xf32, #tpu.memory_space<vmem>>, vector<1x128xf32>
    %c14 = arith.constant 14 : index
    %c0_14 = arith.constant 0 : index
    %16 = vector.load %arg2[%c14, %c0_14] : memref<128x128xf32, #tpu.memory_space<vmem>>, vector<1x128xf32>
    %c15 = arith.constant 15 : index
    %c0_15 = arith.constant 0 : index
    %17 = vector.load %arg2[%c15, %c0_15] : memref<128x128xf32, #tpu.memory_space<vmem>>, vector<1x128xf32>
    %c16 = arith.constant 16 : index
    %c0_16 = arith.constant 0 : index
    %18 = vector.load %arg2[%c16, %c0_16] : memref<128x128xf32, #tpu.memory_space<vmem>>, vector<1x128xf32>
    %c17 = arith.constant 17 : index
    %c0_17 = arith.constant 0 : index
    %19 = vector.load %arg2[%c17, %c0_17] : memref<128x128xf32, #tpu.memory_space<vmem>>, vector<1x128xf32>
    %c18 = arith.constant 18 : index
    %c0_18 = arith.constant 0 : index
    %20 = vector.load %arg2[%c18, %c0_18] : memref<128x128xf32, #tpu.memory_space<vmem>>, vector<1x128xf32>
    %c19 = arith.constant 19 : index
    %c0_19 = arith.constant 0 : index
    %21 = vector.load %arg2[%c19, %c0_19] : memref<128x128xf32, #tpu.memory_space<vmem>>, vector<1x128xf32>
    %c20 = arith.constant 20 : index
    %c0_20 = arith.constant 0 : index
    %22 = vector.load %arg2[%c20, %c0_20] : memref<128x128xf32, #tpu.memory_space<vmem>>, vector<1x128xf32>
    %cst = arith.constant 1.000000e+00 : f32
    %23 = vector.broadcast %cst : f32 to vector<1x128xf32>
    %24 = arith.divf %23, %6 : vector<1x128xf32>
    %cst_21 = arith.constant 1.000000e+00 : f32
    %25 = vector.broadcast %cst_21 : f32 to vector<1x128xf32>
    %26 = arith.divf %25, %8 : vector<1x128xf32>
    %cst_22 = arith.constant 1.000000e+00 : f32
    %27 = vector.broadcast %cst_22 : f32 to vector<1x128xf32>
    %28 = arith.divf %27, %7 : vector<1x128xf32>
    %29 = arith.addf %6, %8 : vector<1x128xf32>
    %cst_23 = arith.constant 1.000000e+00 : f32
    %30 = vector.broadcast %cst_23 : f32 to vector<1x128xf32>
    %31 = arith.divf %30, %29 : vector<1x128xf32>
    %32 = arith.addf %6, %7 : vector<1x128xf32>
    %cst_24 = arith.constant 1.000000e+00 : f32
    %33 = vector.broadcast %cst_24 : f32 to vector<1x128xf32>
    %34 = arith.divf %33, %32 : vector<1x128xf32>
    %cst_25 = arith.constant 1.000000e+00 : f32
    %35 = vector.broadcast %cst_25 : f32 to vector<1x128xf32>
    %36 = arith.subf %35, %4 : vector<1x128xf32>
    %37 = arith.subf %36, %5 : vector<1x128xf32>
    %cst_26 = arith.constant 0.000000e+00 : f32
    %38 = vector.broadcast %cst_26 : f32 to vector<1x128xf32>
    %39 = arith.maximumf %37, %38 : vector<1x128xf32>
    %cst_27 = arith.constant 1.000000e+03 : f32
    %40 = vector.broadcast %cst_27 : f32 to vector<1x128xf32>
    %41 = arith.mulf %37, %40 : vector<1x128xf32>
    %42 = arith.mulf %9, %16 : vector<1x128xf32>
    %43 = arith.mulf %10, %17 : vector<1x128xf32>
    %44 = arith.addf %42, %43 : vector<1x128xf32>
    %45 = arith.addf %9, %10 : vector<1x128xf32>
    %46 = arith.addf %45, %8 : vector<1x128xf32>
    %cst_28 = arith.constant 1.000000e+00 : f32
    %47 = vector.broadcast %cst_28 : f32 to vector<1x128xf32>
    %48 = arith.divf %47, %46 : vector<1x128xf32>
    %cst_29 = arith.constant 1.000000e+00 : f32
    %49 = vector.broadcast %cst_29 : f32 to vector<1x128xf32>
    %50 = arith.divf %49, %10 : vector<1x128xf32>
    %51 = arith.divf %10, %45 : vector<1x128xf32>
    %52 = arith.divf %9, %9 : vector<1x128xf32>
    %cst_30 = arith.constant 1.000000e+00 : f32
    %53 = vector.broadcast %cst_30 : f32 to vector<1x128xf32>
    %54 = arith.subf %53, %52 : vector<1x128xf32>
    %55 = arith.mulf %11, %45 : vector<1x128xf32>
    %56 = arith.subf %45, %55 : vector<1x128xf32>
    %57 = arith.addf %56, %8 : vector<1x128xf32>
    %cst_31 = arith.constant 1.000000e+00 : f32
    %58 = vector.broadcast %cst_31 : f32 to vector<1x128xf32>
    %59 = arith.divf %58, %57 : vector<1x128xf32>
    %cst_32 = arith.constant 2.400000e+01 : f32
    %60 = vector.broadcast %cst_32 : f32 to vector<1x128xf32>
    %61 = arith.mulf %21, %60 : vector<1x128xf32>
    %cst_33 = arith.constant 1.000000e+00 : f32
    %62 = vector.broadcast %cst_33 : f32 to vector<1x128xf32>
    %63 = arith.subf %62, %22 : vector<1x128xf32>
    %64 = arith.mulf %61, %63 : vector<1x128xf32>
    %cst_34 = arith.constant 1.200000e+01 : f32
    %65 = vector.broadcast %cst_34 : f32 to vector<1x128xf32>
    %66 = arith.addf %64, %65 : vector<1x128xf32>
    %cst_35 = arith.constant 0.000000e+00 : f32
    %67 = vector.broadcast %cst_35 : f32 to vector<1x128xf32>
    %68 = arith.maximumf %66, %67 : vector<1x128xf32>
    %cst_36 = arith.constant 1.000000e+00 : f32
    %69 = vector.broadcast %cst_36 : f32 to vector<1x128xf32>
    %70 = arith.divf %69, %68 : vector<1x128xf32>
    %cst_37 = arith.constant 0.000000e+00 : f32
    %71 = vector.broadcast %cst_37 : f32 to vector<1x128xf32>
    %72 = arith.subf %71, %61 : vector<1x128xf32>
    %73 = arith.mulf %72, %22 : vector<1x128xf32>
    %cst_38 = arith.constant 1.200000e+01 : f32
    %74 = vector.broadcast %cst_38 : f32 to vector<1x128xf32>
    %75 = arith.addf %73, %74 : vector<1x128xf32>
    %76 = arith.mulf %75, %70 : vector<1x128xf32>
    %cst_39 = arith.constant 0.000000e+00 : f32
    %77 = vector.broadcast %cst_39 : f32 to vector<1x128xf32>
    %78 = arith.maximumf %76, %77 : vector<1x128xf32>
    %cst_40 = arith.constant 1.000000e+00 : f32
    %79 = vector.broadcast %cst_40 : f32 to vector<1x128xf32>
    %80 = arith.subf %79, %22 : vector<1x128xf32>
    %81 = arith.mulf %61, %80 : vector<1x128xf32>
    %cst_41 = arith.constant 1.200000e+01 : f32
    %82 = vector.broadcast %cst_41 : f32 to vector<1x128xf32>
    %83 = arith.subf %81, %82 : vector<1x128xf32>
    %84 = arith.mulf %83, %70 : vector<1x128xf32>
    %cst_42 = arith.constant 0.000000e+00 : f32
    %85 = vector.broadcast %cst_42 : f32 to vector<1x128xf32>
    %86 = arith.maximumf %84, %85 : vector<1x128xf32>
    %87 = arith.mulf %61, %22 : vector<1x128xf32>
    %cst_43 = arith.constant 1.200000e+01 : f32
    %88 = vector.broadcast %cst_43 : f32 to vector<1x128xf32>
    %89 = arith.addf %87, %88 : vector<1x128xf32>
    %90 = arith.mulf %89, %70 : vector<1x128xf32>
    %c0_44 = arith.constant 0 : index
    %c0_45 = arith.constant 0 : index
    %91 = vector.load %arg6[%c0_44, %c0_45] : memref<12x128xf32, #tpu.memory_space<vmem>>, vector<12x128xf32>
    %92 = vector.extract_strided_slice %91 {offsets = [0, 0], sizes = [1, 128], strides = [1, 1]} : vector<12x128xf32> to vector<1x128xf32>
    %93 = vector.extract_strided_slice %91 {offsets = [1, 0], sizes = [1, 128], strides = [1, 1]} : vector<12x128xf32> to vector<1x128xf32>
    %94 = vector.extract_strided_slice %91 {offsets = [2, 0], sizes = [1, 128], strides = [1, 1]} : vector<12x128xf32> to vector<1x128xf32>
    %95 = vector.extract_strided_slice %91 {offsets = [3, 0], sizes = [1, 128], strides = [1, 1]} : vector<12x128xf32> to vector<1x128xf32>
    %96 = vector.extract_strided_slice %91 {offsets = [4, 0], sizes = [1, 128], strides = [1, 1]} : vector<12x128xf32> to vector<1x128xf32>
    %97 = vector.extract_strided_slice %91 {offsets = [5, 0], sizes = [1, 128], strides = [1, 1]} : vector<12x128xf32> to vector<1x128xf32>
    %98 = vector.extract_strided_slice %91 {offsets = [6, 0], sizes = [1, 128], strides = [1, 1]} : vector<12x128xf32> to vector<1x128xf32>
    %99 = vector.extract_strided_slice %91 {offsets = [7, 0], sizes = [1, 128], strides = [1, 1]} : vector<12x128xf32> to vector<1x128xf32>
    %100 = vector.extract_strided_slice %91 {offsets = [8, 0], sizes = [1, 128], strides = [1, 1]} : vector<12x128xf32> to vector<1x128xf32>
    %101 = vector.extract_strided_slice %91 {offsets = [9, 0], sizes = [1, 128], strides = [1, 1]} : vector<12x128xf32> to vector<1x128xf32>
    %102 = vector.extract_strided_slice %91 {offsets = [10, 0], sizes = [1, 128], strides = [1, 1]} : vector<12x128xf32> to vector<1x128xf32>
    %103 = vector.extract_strided_slice %91 {offsets = [11, 0], sizes = [1, 128], strides = [1, 1]} : vector<12x128xf32> to vector<1x128xf32>
    %c0_i32_46 = arith.constant 0 : i32
    %c8_i32 = arith.constant 8 : i32
    %104 = arith.addi %c0_i32_46, %c8_i32 : i32
    %c1_i32 = arith.constant 1 : i32
    %105:12 = scf.for %arg7 = %c0_i32_46 to %104 step %c1_i32 iter_args(%arg8 = %92, %arg9 = %93, %arg10 = %94, %arg11 = %95, %arg12 = %96, %arg13 = %97, %arg14 = %98, %arg15 = %99, %arg16 = %100, %arg17 = %101, %arg18 = %102, %arg19 = %103) -> (vector<1x128xf32>, vector<1x128xf32>, vector<1x128xf32>, vector<1x128xf32>, vector<1x128xf32>, vector<1x128xf32>, vector<1x128xf32>, vector<1x128xf32>, vector<1x128xf32>, vector<1x128xf32>, vector<1x128xf32>, vector<1x128xf32>)  : i32 {
      %108 = arith.index_cast %arg7 : i32 to index
      %c0_50 = arith.constant 0 : index
      %109 = vector.load %arg3[%108, %c0_50] : memref<8x128xf32, #tpu.memory_space<vmem>>, vector<1x128xf32>
      %cst_51 = arith.constant 0.000000e+00 : f32
      %110 = vector.broadcast %cst_51 : f32 to vector<1x128xf32>
      %111 = arith.maximumf %109, %110 : vector<1x128xf32>
      %112 = arith.index_cast %arg7 : i32 to index
      %c0_52 = arith.constant 0 : index
      %113 = vector.load %arg4[%112, %c0_52] : memref<8x128xf32, #tpu.memory_space<vmem>>, vector<1x128xf32>
      %114 = arith.cmpf oeq, %113, %113 : vector<1x128xf32>
      %115 = math.absf %113 : vector<1x128xf32>
      %cst_53 = arith.constant 0x7F800000 : f32
      %116 = vector.broadcast %cst_53 : f32 to vector<1x128xf32>
      %117 = arith.cmpf olt, %115, %116 : vector<1x128xf32>
      %118 = arith.andi %114, %117 : vector<1x128xi1>
      %cst_54 = arith.constant 0.000000e+00 : f32
      %119 = vector.broadcast %cst_54 : f32 to vector<1x128xf32>
      %120 = arith.select %118, %113, %119 : vector<1x128xi1>, vector<1x128xf32>
      %cst_55 = arith.constant 0.000000e+00 : f32
      %121 = vector.broadcast %cst_55 : f32 to vector<1x128xf32>
      %122 = arith.maximumf %120, %121 : vector<1x128xf32>
      %123 = arith.mulf %3, %122 : vector<1x128xf32>
      %124 = arith.mulf %4, %111 : vector<1x128xf32>
      %125 = arith.mulf %arg8, %24 : vector<1x128xf32>
      %126 = arith.mulf %123, %125 : vector<1x128xf32>
      %127 = arith.minimumf %arg8, %126 : vector<1x128xf32>
      %128 = arith.subf %123, %127 : vector<1x128xf32>
      %129 = arith.mulf %arg9, %31 : vector<1x128xf32>
      %130 = arith.mulf %128, %129 : vector<1x128xf32>
      %cst_56 = arith.constant 0.000000e+00 : f32
      %131 = vector.broadcast %cst_56 : f32 to vector<1x128xf32>
      %132 = arith.maximumf %130, %131 : vector<1x128xf32>
      %133 = arith.subf %arg8, %127 : vector<1x128xf32>
      %134 = arith.subf %6, %133 : vector<1x128xf32>
      %135 = arith.subf %111, %134 : vector<1x128xf32>
      %cst_57 = arith.constant 0.000000e+00 : f32
      %136 = vector.broadcast %cst_57 : f32 to vector<1x128xf32>
      %137 = arith.maximumf %135, %136 : vector<1x128xf32>
      %138 = arith.subf %arg9, %132 : vector<1x128xf32>
      %139 = arith.mulf %138, %26 : vector<1x128xf32>
      %140 = arith.mulf %137, %139 : vector<1x128xf32>
      %cst_58 = arith.constant 0.000000e+00 : f32
      %141 = vector.broadcast %cst_58 : f32 to vector<1x128xf32>
      %142 = arith.maximumf %140, %141 : vector<1x128xf32>
      %143 = arith.subf %137, %142 : vector<1x128xf32>
      %144 = arith.subf %arg9, %132 : vector<1x128xf32>
      %145 = arith.addf %143, %144 : vector<1x128xf32>
      %146 = arith.subf %145, %8 : vector<1x128xf32>
      %cst_59 = arith.constant 0.000000e+00 : f32
      %147 = vector.broadcast %cst_59 : f32 to vector<1x128xf32>
      %148 = arith.maximumf %146, %147 : vector<1x128xf32>
      %149 = arith.subf %arg8, %127 : vector<1x128xf32>
      %150 = arith.addf %149, %111 : vector<1x128xf32>
      %151 = arith.minimumf %6, %150 : vector<1x128xf32>
      %cst_60 = arith.constant 0.000000e+00 : f32
      %152 = vector.broadcast %cst_60 : f32 to vector<1x128xf32>
      %153 = arith.maximumf %151, %152 : vector<1x128xf32>
      %154 = arith.subf %137, %142 : vector<1x128xf32>
      %155 = arith.subf %arg9, %132 : vector<1x128xf32>
      %156 = arith.addf %154, %155 : vector<1x128xf32>
      %157 = arith.minimumf %8, %156 : vector<1x128xf32>
      %cst_61 = arith.constant 0.000000e+00 : f32
      %158 = vector.broadcast %cst_61 : f32 to vector<1x128xf32>
      %159 = arith.maximumf %157, %158 : vector<1x128xf32>
      %160 = arith.mulf %arg10, %24 : vector<1x128xf32>
      %161 = arith.mulf %123, %160 : vector<1x128xf32>
      %162 = arith.minimumf %arg10, %161 : vector<1x128xf32>
      %163 = arith.subf %123, %162 : vector<1x128xf32>
      %164 = arith.minimumf %arg11, %163 : vector<1x128xf32>
      %cst_62 = arith.constant 0.000000e+00 : f32
      %165 = vector.broadcast %cst_62 : f32 to vector<1x128xf32>
      %166 = arith.maximumf %164, %165 : vector<1x128xf32>
      %167 = arith.subf %123, %162 : vector<1x128xf32>
      %168 = arith.subf %167, %166 : vector<1x128xf32>
      %169 = arith.mulf %arg12, %31 : vector<1x128xf32>
      %170 = arith.mulf %168, %169 : vector<1x128xf32>
      %cst_63 = arith.constant 0.000000e+00 : f32
      %171 = vector.broadcast %cst_63 : f32 to vector<1x128xf32>
      %172 = arith.maximumf %170, %171 : vector<1x128xf32>
      %173 = arith.subf %arg12, %172 : vector<1x128xf32>
      %cst_64 = arith.constant 0.000000e+00 : f32
      %174 = vector.broadcast %cst_64 : f32 to vector<1x128xf32>
      %175 = arith.maximumf %173, %174 : vector<1x128xf32>
      %176 = arith.mulf %142, %5 : vector<1x128xf32>
      %177 = arith.mulf %148, %5 : vector<1x128xf32>
      %178 = arith.addf %arg10, %arg11 : vector<1x128xf32>
      %179 = arith.subf %178, %162 : vector<1x128xf32>
      %180 = arith.subf %179, %166 : vector<1x128xf32>
      %181 = arith.addf %111, %180 : vector<1x128xf32>
      %182 = arith.subf %181, %32 : vector<1x128xf32>
      %cst_65 = arith.constant 0.000000e+00 : f32
      %183 = vector.broadcast %cst_65 : f32 to vector<1x128xf32>
      %184 = arith.maximumf %182, %183 : vector<1x128xf32>
      %185 = arith.mulf %184, %37 : vector<1x128xf32>
      %186 = arith.subf %arg10, %162 : vector<1x128xf32>
      %187 = arith.addf %186, %111 : vector<1x128xf32>
      %188 = arith.minimumf %6, %187 : vector<1x128xf32>
      %cst_66 = arith.constant 0.000000e+00 : f32
      %189 = vector.broadcast %cst_66 : f32 to vector<1x128xf32>
      %190 = arith.maximumf %188, %189 : vector<1x128xf32>
      %191 = arith.addf %arg10, %arg11 : vector<1x128xf32>
      %192 = arith.subf %191, %162 : vector<1x128xf32>
      %193 = arith.subf %192, %166 : vector<1x128xf32>
      %194 = arith.addf %111, %193 : vector<1x128xf32>
      %195 = arith.subf %194, %190 : vector<1x128xf32>
      %196 = arith.minimumf %7, %195 : vector<1x128xf32>
      %cst_67 = arith.constant 0.000000e+00 : f32
      %197 = vector.broadcast %cst_67 : f32 to vector<1x128xf32>
      %198 = arith.maximumf %196, %197 : vector<1x128xf32>
      %199 = arith.mulf %198, %15 : vector<1x128xf32>
      %200 = arith.subf %198, %199 : vector<1x128xf32>
      %cst_68 = arith.constant 0.000000e+00 : f32
      %201 = vector.broadcast %cst_68 : f32 to vector<1x128xf32>
      %202 = arith.maximumf %200, %201 : vector<1x128xf32>
      %203 = arith.addf %arg13, %arg14 : vector<1x128xf32>
      %204 = arith.addf %203, %175 : vector<1x128xf32>
      %205 = arith.mulf %204, %48 : vector<1x128xf32>
      %cst_69 = arith.constant 1.000000e+00 : f32
      %206 = vector.broadcast %cst_69 : f32 to vector<1x128xf32>
      %207 = arith.subf %206, %205 : vector<1x128xf32>
      %cst_70 = arith.constant 0.000000e+00 : f32
      %208 = vector.broadcast %cst_70 : f32 to vector<1x128xf32>
      %209 = arith.maximumf %207, %208 : vector<1x128xf32>
      %cst_71 = arith.constant 0.000000e+00 : f32
      %210 = vector.broadcast %cst_71 : f32 to vector<1x128xf32>
      %211 = arith.cmpf ogt, %209, %210 : vector<1x128xf32>
      %cst_72 = arith.constant 0.000000e+00 : f32
      %212 = vector.broadcast %cst_72 : f32 to vector<1x128xf32>
      %213 = arith.cmpf ogt, %209, %212 : vector<1x128xf32>
      %cst_73 = arith.constant 1.000000e+00 : f32
      %214 = vector.broadcast %cst_73 : f32 to vector<1x128xf32>
      %215 = arith.select %213, %209, %214 : vector<1x128xi1>, vector<1x128xf32>
      %216 = math.log %215 : vector<1x128xf32>
      %217 = arith.mulf %14, %216 : vector<1x128xf32>
      %218 = math.exp %217 : vector<1x128xf32>
      %cst_74 = arith.constant 0.000000e+00 : f32
      %219 = vector.broadcast %cst_74 : f32 to vector<1x128xf32>
      %220 = arith.select %211, %218, %219 : vector<1x128xi1>, vector<1x128xf32>
      %221 = arith.mulf %13, %220 : vector<1x128xf32>
      %cst_75 = arith.constant 1.000000e+00 : f32
      %222 = vector.broadcast %cst_75 : f32 to vector<1x128xf32>
      %223 = arith.addf %222, %221 : vector<1x128xf32>
      %224 = arith.mulf %44, %223 : vector<1x128xf32>
      %225 = arith.mulf %224, %202 : vector<1x128xf32>
      %226 = arith.mulf %225, %28 : vector<1x128xf32>
      %227 = arith.addf %arg13, %arg14 : vector<1x128xf32>
      %228 = arith.addf %227, %175 : vector<1x128xf32>
      %229 = arith.subf %46, %228 : vector<1x128xf32>
      %230 = arith.minimumf %226, %229 : vector<1x128xf32>
      %cst_76 = arith.constant 0.000000e+00 : f32
      %231 = vector.broadcast %cst_76 : f32 to vector<1x128xf32>
      %232 = arith.maximumf %230, %231 : vector<1x128xf32>
      %233 = arith.addf %arg13, %arg14 : vector<1x128xf32>
      %234 = arith.subf %45, %233 : vector<1x128xf32>
      %235 = arith.subf %8, %175 : vector<1x128xf32>
      %236 = arith.subf %232, %235 : vector<1x128xf32>
      %237 = arith.mulf %232, %12 : vector<1x128xf32>
      %238 = arith.maximumf %236, %237 : vector<1x128xf32>
      %239 = arith.minimumf %234, %238 : vector<1x128xf32>
      %cst_77 = arith.constant 0.000000e+00 : f32
      %240 = vector.broadcast %cst_77 : f32 to vector<1x128xf32>
      %241 = arith.maximumf %239, %240 : vector<1x128xf32>
      %242 = arith.subf %232, %241 : vector<1x128xf32>
      %cst_78 = arith.constant 0.000000e+00 : f32
      %243 = vector.broadcast %cst_78 : f32 to vector<1x128xf32>
      %244 = arith.maximumf %242, %243 : vector<1x128xf32>
      %245 = arith.mulf %arg14, %50 : vector<1x128xf32>
      %cst_79 = arith.constant 1.000000e+00 : f32
      %246 = vector.broadcast %cst_79 : f32 to vector<1x128xf32>
      %247 = arith.subf %246, %245 : vector<1x128xf32>
      %cst_80 = arith.constant 2.000000e+00 : f32
      %248 = vector.broadcast %cst_80 : f32 to vector<1x128xf32>
      %249 = arith.mulf %248, %247 : vector<1x128xf32>
      %250 = arith.addf %247, %54 : vector<1x128xf32>
      %251 = arith.divf %249, %250 : vector<1x128xf32>
      %252 = arith.mulf %51, %251 : vector<1x128xf32>
      %cst_81 = arith.constant 0.000000e+00 : f32
      %253 = vector.broadcast %cst_81 : f32 to vector<1x128xf32>
      %254 = arith.maximumf %252, %253 : vector<1x128xf32>
      %cst_82 = arith.constant 1.000000e+00 : f32
      %255 = vector.broadcast %cst_82 : f32 to vector<1x128xf32>
      %256 = arith.minimumf %254, %255 : vector<1x128xf32>
      %257 = arith.subf %10, %arg14 : vector<1x128xf32>
      %258 = arith.subf %9, %arg13 : vector<1x128xf32>
      %259 = arith.subf %241, %258 : vector<1x128xf32>
      %260 = arith.mulf %256, %241 : vector<1x128xf32>
      %261 = arith.maximumf %259, %260 : vector<1x128xf32>
      %262 = arith.minimumf %257, %261 : vector<1x128xf32>
      %cst_83 = arith.constant 0.000000e+00 : f32
      %263 = vector.broadcast %cst_83 : f32 to vector<1x128xf32>
      %264 = arith.maximumf %262, %263 : vector<1x128xf32>
      %265 = arith.subf %241, %264 : vector<1x128xf32>
      %cst_84 = arith.constant 0.000000e+00 : f32
      %266 = vector.broadcast %cst_84 : f32 to vector<1x128xf32>
      %267 = arith.maximumf %265, %266 : vector<1x128xf32>
      %268 = arith.addf %175, %244 : vector<1x128xf32>
      %269 = arith.addf %arg13, %267 : vector<1x128xf32>
      %270 = arith.addf %arg14, %264 : vector<1x128xf32>
      %271 = arith.mulf %269, %16 : vector<1x128xf32>
      %272 = arith.subf %269, %271 : vector<1x128xf32>
      %cst_85 = arith.constant 0.000000e+00 : f32
      %273 = vector.broadcast %cst_85 : f32 to vector<1x128xf32>
      %274 = arith.maximumf %272, %273 : vector<1x128xf32>
      %275 = arith.mulf %270, %17 : vector<1x128xf32>
      %276 = arith.subf %270, %275 : vector<1x128xf32>
      %cst_86 = arith.constant 0.000000e+00 : f32
      %277 = vector.broadcast %cst_86 : f32 to vector<1x128xf32>
      %278 = arith.maximumf %276, %277 : vector<1x128xf32>
      %279 = arith.mulf %190, %24 : vector<1x128xf32>
      %280 = arith.mulf %202, %28 : vector<1x128xf32>
      %281 = arith.addf %190, %202 : vector<1x128xf32>
      %282 = arith.mulf %281, %34 : vector<1x128xf32>
      %283 = arith.cmpf olt, %279, %280 : vector<1x128xf32>
      %284 = arith.mulf %6, %282 : vector<1x128xf32>
      %285 = arith.select %283, %284, %190 : vector<1x128xi1>, vector<1x128xf32>
      %286 = arith.mulf %7, %282 : vector<1x128xf32>
      %287 = arith.select %283, %286, %202 : vector<1x128xi1>, vector<1x128xf32>
      %288 = arith.addf %269, %270 : vector<1x128xf32>
      %289 = arith.subf %288, %55 : vector<1x128xf32>
      %290 = arith.addf %289, %268 : vector<1x128xf32>
      %291 = arith.mulf %290, %59 : vector<1x128xf32>
      %cst_87 = arith.constant 0.000000e+00 : f32
      %292 = vector.broadcast %cst_87 : f32 to vector<1x128xf32>
      %293 = arith.maximumf %291, %292 : vector<1x128xf32>
      %294 = arith.mulf %268, %26 : vector<1x128xf32>
      %295 = arith.cmpf olt, %294, %293 : vector<1x128xf32>
      %296 = arith.mulf %8, %293 : vector<1x128xf32>
      %297 = arith.select %295, %296, %268 : vector<1x128xi1>, vector<1x128xf32>
      %298 = arith.subf %297, %268 : vector<1x128xf32>
      %299 = arith.subf %269, %298 : vector<1x128xf32>
      %cst_88 = arith.constant 0.000000e+00 : f32
      %300 = vector.broadcast %cst_88 : f32 to vector<1x128xf32>
      %301 = arith.maximumf %299, %300 : vector<1x128xf32>
      %302 = arith.select %295, %301, %274 : vector<1x128xi1>, vector<1x128xf32>
      %303 = arith.subf %297, %268 : vector<1x128xf32>
      %304 = arith.subf %303, %269 : vector<1x128xf32>
      %cst_89 = arith.constant 0.000000e+00 : f32
      %305 = vector.broadcast %cst_89 : f32 to vector<1x128xf32>
      %306 = arith.maximumf %304, %305 : vector<1x128xf32>
      %307 = arith.subf %270, %306 : vector<1x128xf32>
      %308 = arith.select %295, %307, %278 : vector<1x128xi1>, vector<1x128xf32>
      %309 = arith.addf %arg15, %arg16 : vector<1x128xf32>
      %310 = arith.addf %309, %arg17 : vector<1x128xf32>
      %311 = arith.addf %310, %arg18 : vector<1x128xf32>
      %312 = arith.addf %176, %177 : vector<1x128xf32>
      %313 = arith.mulf %312, %5 : vector<1x128xf32>
      %314 = arith.addf %124, %313 : vector<1x128xf32>
      %315 = arith.mulf %185, %39 : vector<1x128xf32>
      %316 = arith.addf %314, %315 : vector<1x128xf32>
      %cst_90 = arith.constant 1.000000e+03 : f32
      %317 = vector.broadcast %cst_90 : f32 to vector<1x128xf32>
      %318 = arith.mulf %316, %317 : vector<1x128xf32>
      %319 = arith.mulf %18, %arg16 : vector<1x128xf32>
      %cst_91 = arith.constant 1.000000e+00 : f32
      %320 = vector.broadcast %cst_91 : f32 to vector<1x128xf32>
      %321 = arith.subf %320, %18 : vector<1x128xf32>
      %322 = arith.mulf %321, %199 : vector<1x128xf32>
      %323 = arith.mulf %322, %41 : vector<1x128xf32>
      %324 = arith.addf %319, %323 : vector<1x128xf32>
      %cst_92 = arith.constant 0.000000e+00 : f32
      %325 = vector.broadcast %cst_92 : f32 to vector<1x128xf32>
      %326 = arith.maximumf %324, %325 : vector<1x128xf32>
      %327 = arith.mulf %19, %arg17 : vector<1x128xf32>
      %cst_93 = arith.constant 1.000000e+00 : f32
      %328 = vector.broadcast %cst_93 : f32 to vector<1x128xf32>
      %329 = arith.subf %328, %19 : vector<1x128xf32>
      %330 = arith.mulf %329, %271 : vector<1x128xf32>
      %331 = arith.mulf %330, %41 : vector<1x128xf32>
      %332 = arith.addf %327, %331 : vector<1x128xf32>
      %cst_94 = arith.constant 0.000000e+00 : f32
      %333 = vector.broadcast %cst_94 : f32 to vector<1x128xf32>
      %334 = arith.maximumf %332, %333 : vector<1x128xf32>
      %335 = arith.mulf %20, %arg18 : vector<1x128xf32>
      %cst_95 = arith.constant 1.000000e+00 : f32
      %336 = vector.broadcast %cst_95 : f32 to vector<1x128xf32>
      %337 = arith.subf %336, %20 : vector<1x128xf32>
      %338 = arith.mulf %337, %275 : vector<1x128xf32>
      %339 = arith.mulf %338, %41 : vector<1x128xf32>
      %340 = arith.addf %335, %339 : vector<1x128xf32>
      %cst_96 = arith.constant 0.000000e+00 : f32
      %341 = vector.broadcast %cst_96 : f32 to vector<1x128xf32>
      %342 = arith.maximumf %340, %341 : vector<1x128xf32>
      %343 = arith.addf %318, %326 : vector<1x128xf32>
      %344 = arith.addf %343, %334 : vector<1x128xf32>
      %345 = arith.addf %344, %342 : vector<1x128xf32>
      %346 = arith.mulf %90, %311 : vector<1x128xf32>
      %347 = arith.mulf %78, %345 : vector<1x128xf32>
      %348 = arith.addf %346, %347 : vector<1x128xf32>
      %349 = arith.mulf %86, %arg19 : vector<1x128xf32>
      %350 = arith.addf %348, %349 : vector<1x128xf32>
      %351 = arith.index_cast %arg7 : i32 to index
      %c0_97 = arith.constant 0 : index
      %352 = vector.load %arg5[%351, %c0_97] : memref<8x128xf32, #tpu.memory_space<vmem>>, vector<1x128xf32>
      tpu.vector_store %arg5[%351, %c0_97], %350 {strides = array<i32>} : memref<8x128xf32, #tpu.memory_space<vmem>>, vector<1x128xf32>,
      scf.yield %153, %159, %285, %287, %297, %302, %308, %318, %326, %334, %342, %350 : vector<1x128xf32>, vector<1x128xf32>, vector<1x128xf32>, vector<1x128xf32>, vector<1x128xf32>, vector<1x128xf32>, vector<1x128xf32>, vector<1x128xf32>, vector<1x128xf32>, vector<1x128xf32>, vector<1x128xf32>, vector<1x128xf32>
    }
    %c8_i32_47 = arith.constant 8 : i32
    %106 = tpu.concatenate %105#0, %105#1, %105#2, %105#3, %105#4, %105#5, %105#6, %105#7, %105#8, %105#9, %105#10, %105#11 in 0 : vector<1x128xf32>, vector<1x128xf32>, vector<1x128xf32>, vector<1x128xf32>, vector<1x128xf32>, vector<1x128xf32>, vector<1x128xf32>, vector<1x128xf32>, vector<1x128xf32>, vector<1x128xf32>, vector<1x128xf32>, vector<1x128xf32> -> vector<12x128xf32>
    %c0_48 = arith.constant 0 : index
    %c0_49 = arith.constant 0 : index
    %107 = vector.load %arg6[%c0_48, %c0_49] : memref<12x128xf32, #tpu.memory_space<vmem>>, vector<12x128xf32>
    tpu.vector_store %arg6[%c0_48, %c0_49], %106 {strides = array<i32>} : memref<12x128xf32, #tpu.memory_space<vmem>>, vector<12x128xf32>,
    return
  }
  func.func @transform_0(%arg0: i32, %arg1: i32) -> (i32, i32) {
    %c0_i32 = arith.constant 0 : i32
    %c0_i32_0 = arith.constant 0 : i32
    return %c0_i32, %arg0 : i32, i32
  }
  func.func @transform_1(%arg0: i32, %arg1: i32) -> (i32, i32) {
    %c0_i32 = arith.constant 0 : i32
    return %arg1, %arg0 : i32, i32
  }
  func.func @transform_2(%arg0: i32, %arg1: i32) -> (i32, i32) {
    %c0_i32 = arith.constant 0 : i32
    return %arg1, %arg0 : i32, i32
  }
  func.func @transform_3(%arg0: i32, %arg1: i32) -> (i32, i32) {
    %c0_i32 = arith.constant 0 : i32
    return %arg1, %arg0 : i32, i32
  }
}

</mosaic_0001>

<llo_original>
// kernel: sub.0
$region0: #{sub.0}
  #allocation0 [shape = 's32[1]{0}', space=sflag, size = 0x4, scoped, tag = 'scoped memory for sub.0']
  %s0 = inlined_call_operand.vmem [shape: f32[21,1], index: 0, kind: input, shape index: {}]
  %s1 = inlined_call_operand.vmem [shape: f32[21,1], index: 1, kind: input, shape index: {}]
  %s2 = inlined_call_operand.vmem [shape: f32[21,1], index: 2, kind: output, shape index: {}]
  %v3 = vld [vmem:[%s0] sm:$0xff]
  %v4 = vld [vmem:[%s1] sm:$0xff]
  %5 = xla_tuple %v3, %v4
  %6 = xla_tuple %5
  %v7 = vsub.f32 %v3, %v4
  %8 = xla_tuple %v7
  %9 = vst [vmem:[%s2] sm:$0xff] %v7
  %s10 = scalar_lea.vmem %s0, 8
  %v11 = vld [vmem:[%s10] sm:$0xff]
  %s12 = scalar_lea.vmem %s1, 8
  %v13 = vld [vmem:[%s12] sm:$0xff]
  %14 = xla_tuple %v11, %v13
  %15 = xla_tuple %14
  %v16 = vsub.f32 %v11, %v13
  %17 = xla_tuple %v16
  %s18 = scalar_lea.vmem %s2, 8
  %19 = vst [vmem:[%s18] sm:$0xff] %v16
  %s20 = scalar_lea.vmem %s0, 16
  %v21 = vld [vmem:[%s20] sm:$0xff]
  %s22 = scalar_lea.vmem %s1, 16
  %v23 = vld [vmem:[%s22] sm:$0xff]
  %24 = xla_tuple %v21, %v23
  %25 = xla_tuple %24
  %v26 = vsub.f32 %v21, %v23
  %27 = xla_tuple %v26
  %s28 = scalar_lea.vmem %s2, 16
  %29 = vst [vmem:[%s28] sm:$0xff] %v26

// kernel: dpl_lstm_sac_forward.3
$region0: #{dpl_lstm_sac_forward.3}
  #allocation0 [shape = 'u32[]', space=smem, size = 0x4, offset = 0x4, fixed_abs, tag = 'smem constant byte address 0x4 - core index']
  #allocation1 [shape = 'u32[72,128]{1,0:T(1,128)}', space=vmem, size = 0x9000, scoped, tag = 'internal scratch']
  #allocation2 [shape = 'f32[12,128]{1,0:T(8,128)}', space=vmem, size = 0x2000, scoped, tag = 'scratch operand']
  %s0 = inlined_call_operand.vmem [shape: f32[128,128], index: 0, kind: input, shape index: {}]
  %s1 = inlined_call_operand.vmem [shape: f32[32,128], index: 1, kind: input, shape index: {}]
  %s2 = inlined_call_operand.vmem [shape: f32[32,128], index: 2, kind: input, shape index: {}]
  %s3 = inlined_call_operand.vmem [shape: f32[32,128], index: 3, kind: output, shape index: {}]
  %s4 = sld [smem:[#allocation0]]
  $region56: #{dpl_lstm_sac_forward.3} parent=0
    _
  %s6 = ssub.s32 1, %s4
  %s7 = scalar_select 0, %s6, %s4
  loop: start=0, step=1, limit=6
  $region2: #{dpl_lstm_sac_forward.3} parent=0 // loop_pre_header
    _
  $region3: #{dpl_lstm_sac_forward.3} parent=0 // loop_header
    %s9 = sphi 0, %s13
    %p10 = scmp.ge.s32.totalorder %s9, 6
    %s16 = sphi 0, %s28
    %s17 = sphi 0, %s24
    %s18 = sphi 0, %s16
    %s19 = sphi 0, %s17
    %s20 = sphi 0, %s18
    %s21 = sphi 0, %s19
    %s31 = sphi 0, %s33
    %s34 = sphi 0, %s31
    %s35 = sphi 0, %s34
    %s51 = sphi 0, %s35
    %s59 = sphi 0, %s61
    %s62 = sphi 0, %s59
    %s63 = sphi 0, %s62
    %s79 = sphi 0, %s63
    %s87 = sphi 0, %s89
    %s90 = sphi 0, %s87
    %s91 = sphi 0, %s90
    %s107 = sphi 0, %s91
    %s115 = sphi 0, %s117
    %s118 = sphi 0, %s115
    %s119 = sphi 0, %s118
    %s135 = sphi 0, %s119
  $region4: #{dpl_lstm_sac_forward.3} parent=0 // loop_header_branch
    %12 = sbr.rel (%p10) target = $region8
  $region5: #{dpl_lstm_sac_forward.3} parent=0 // loop_body
    %s14 = ssub.s32 %s9, 1
    %s15 = ssub.s32 %s9, 2
    %s22 = sadd.s32 1, %s17
    %p23 = scmp.ge.s32.totalorder %s22, 4
    %s24 = scalar_select %p23, 0, %s22
    %s25 = sadd.s32 1, %s16
    %s26 = scalar_select %p23, %s25, %s16
    %p27 = scmp.ge.s32.totalorder %s26, 1
    %s28 = scalar_select %p27, 0, %s26
    %s29 = ssub.s32 %s16, %s28
    %p30 = scmp.eq.s32.totalorder %s29, 0
    %s32 = sadd.s32 %s31, 1
    %s33 = scalar_select %p30, %s31, %s32
    %p36 = pneg %p30
    %p37 = scmp.eq.s32.totalorder %s9, 3
    %p38 = por %p36, %p37
    %p39 = scmp.ne.s32.totalorder %s31, %s34
    %p40 = scmp.eq.s32.totalorder %s9, 0
    %p41 = por %p39, %p40
    %p42 = scmp.ne.s32.totalorder %s31, %s34
    %p43 = scmp.eq.s32.totalorder %s14, 3
    %p44 = por %p42, %p43
    %p45 = scmp.ne.s32.totalorder %s34, %s35
    %p46 = scmp.eq.s32.totalorder %s14, 0
    %p47 = por %p45, %p46
    %p48 = scmp.ne.s32.totalorder %s34, %s35
    %p49 = scmp.eq.s32.totalorder %s15, 3
    %p50 = por %p48, %p49
    %p52 = scmp.ne.s32.totalorder %s35, %s51
    %p53 = scmp.eq.s32.totalorder %s15, 0
    %p54 = por %p52, %p53
    %s55 = ssub.s32 %s17, %s24
    %s56 = ssub.s32 %s16, %s28
    %s57 = sor.u32 %s55, %s56
    %p58 = scmp.eq.s32.totalorder %s57, 0
    %s60 = sadd.s32 %s59, 1
    %s61 = scalar_select %p58, %s59, %s60
    %p64 = pneg %p58
    %p65 = scmp.eq.s32.totalorder %s9, 3
    %p66 = por %p64, %p65
    %p67 = scmp.ne.s32.totalorder %s59, %s62
    %p68 = scmp.eq.s32.totalorder %s9, 0
    %p69 = por %p67, %p68
    %p70 = scmp.ne.s32.totalorder %s59, %s62
    %p71 = scmp.eq.s32.totalorder %s14, 3
    %p72 = por %p70, %p71
    %p73 = scmp.ne.s32.totalorder %s62, %s63
    %p74 = scmp.eq.s32.totalorder %s14, 0
    %p75 = por %p73, %p74
    %p76 = scmp.ne.s32.totalorder %s62, %s63
    %p77 = scmp.eq.s32.totalorder %s15, 3
    %p78 = por %p76, %p77
    %p80 = scmp.ne.s32.totalorder %s63, %s79
    %p81 = scmp.eq.s32.totalorder %s15, 0
    %p82 = por %p80, %p81
    %s83 = ssub.s32 %s17, %s24
    %s84 = ssub.s32 %s16, %s28
    %s85 = sor.u32 %s83, %s84
    %p86 = scmp.eq.s32.totalorder %s85, 0
    %s88 = sadd.s32 %s87, 1
    %s89 = scalar_select %p86, %s87, %s88
    %p92 = pneg %p86
    %p93 = scmp.eq.s32.totalorder %s9, 3
    %p94 = por %p92, %p93
    %p95 = scmp.ne.s32.totalorder %s87, %s90
    %p96 = scmp.eq.s32.totalorder %s9, 0
    %p97 = por %p95, %p96
    %p98 = scmp.ne.s32.totalorder %s87, %s90
    %p99 = scmp.eq.s32.totalorder %s14, 3
    %p100 = por %p98, %p99
    %p101 = scmp.ne.s32.totalorder %s90, %s91
    %p102 = scmp.eq.s32.totalorder %s14, 0
    %p103 = por %p101, %p102
    %p104 = scmp.ne.s32.totalorder %s90, %s91
    %p105 = scmp.eq.s32.totalorder %s15, 3
    %p106 = por %p104, %p105
    %p108 = scmp.ne.s32.totalorder %s91, %s107
    %p109 = scmp.eq.s32.totalorder %s15, 0
    %p110 = por %p108, %p109
    %s111 = ssub.s32 %s17, %s24
    %s112 = ssub.s32 %s16, %s28
    %s113 = sor.u32 %s111, %s112
    %p114 = scmp.eq.s32.totalorder %s113, 0
    %s116 = sadd.s32 %s115, 1
    %s117 = scalar_select %p114, %s115, %s116
    %p120 = pneg %p114
    %p121 = scmp.eq.s32.totalorder %s9, 3
    %p122 = por %p120, %p121
    %p123 = scmp.ne.s32.totalorder %s115, %s118
    %p124 = scmp.eq.s32.totalorder %s9, 0
    %p125 = por %p123, %p124
    %p126 = scmp.ne.s32.totalorder %s115, %s118
    %p127 = scmp.eq.s32.totalorder %s14, 3
    %p128 = por %p126, %p127
    %p129 = scmp.ne.s32.totalorder %s118, %s119
    %p130 = scmp.eq.s32.totalorder %s14, 0
    %p131 = por %p129, %p130
    %p132 = scmp.ne.s32.totalorder %s118, %s119
    %p133 = scmp.eq.s32.totalorder %s15, 3
    %p134 = por %p132, %p133
    %p136 = scmp.ne.s32.totalorder %s119, %s135
    %p137 = scmp.eq.s32.totalorder %s15, 0
    %p138 = por %p136, %p137
    %p139 = scmp.le.s32.totalorder 1, %s9
    %p140 = scmp.lt.s32.totalorder %s9, 5
    %p141 = pnand %p139, %p140
    %p142 = pneg %p141
    // Predicated region
    $region9: #{dpl_lstm_sac_forward.3} parent=5 // pred_check
      _
    $region10: #{dpl_lstm_sac_forward.3} parent=5 // pred_check_branch
      %144 = sbr.rel (%p141) target = $region12
    $region11: #{dpl_lstm_sac_forward.3} parent=5 // pred_region
      %s145 = ssub.s32 %s9, 1
      // Predicated region
      $region13: #{dpl_lstm_sac_forward.3} parent=11 // pred_check
        %p146 = pneg %p47
      $region14: #{dpl_lstm_sac_forward.3} parent=11 // pred_check_branch
        %148 = sbr.rel (%p146) target = $region16
      $region15: #{dpl_lstm_sac_forward.3} parent=11 // pred_region
        %p149 = scmp.lt.s32.totalorder %s18, 0
        %s150 = scalar_select %p149, %s18, 0
        %s151 = smul.addr %s150, 8
        %s152 = scalar_lea.vmem %s0, %s151
      $region16: #{dpl_lstm_sac_forward.3} parent=11 // pred_fallthru
        _
    $region12: #{dpl_lstm_sac_forward.3} parent=5 // pred_fallthru
      _
    %p153 = scmp.lt.s32.totalorder %s9, 4
    // Predicated region
    $region17: #{dpl_lstm_sac_forward.3} parent=5 // pred_check
      %p154 = pneg %p153
    $region18: #{dpl_lstm_sac_forward.3} parent=5 // pred_check_branch
      %156 = sbr.rel (%p154) target = $region20
    $region19: #{dpl_lstm_sac_forward.3} parent=5 // pred_region
      // Predicated region
      $region21: #{dpl_lstm_sac_forward.3} parent=19 // pred_check
        %p157 = pneg %p69
      $region22: #{dpl_lstm_sac_forward.3} parent=19 // pred_check_branch
        %159 = sbr.rel (%p157) target = $region24
      $region23: #{dpl_lstm_sac_forward.3} parent=19 // pred_region
        %p160 = scmp.lt.s32.totalorder %s17, 3
        %s161 = scalar_select %p160, %s17, 3
        %p162 = scmp.lt.s32.totalorder %s16, 0
        %s163 = scalar_select %p162, %s16, 0
        %s164 = sadd.s32 %s163, %s161
        %s165 = smul.addr %s164, 8
        %s166 = scalar_lea.vmem %s1, %s165
      $region24: #{dpl_lstm_sac_forward.3} parent=19 // pred_fallthru
        _
      // Predicated region
      $region25: #{dpl_lstm_sac_forward.3} parent=19 // pred_check
        %p167 = pneg %p97
      $region26: #{dpl_lstm_sac_forward.3} parent=19 // pred_check_branch
        %169 = sbr.rel (%p167) target = $region28
      $region27: #{dpl_lstm_sac_forward.3} parent=19 // pred_region
        %p170 = scmp.lt.s32.totalorder %s17, 3
        %s171 = scalar_select %p170, %s17, 3
        %p172 = scmp.lt.s32.totalorder %s16, 0
        %s173 = scalar_select %p172, %s16, 0
        %s174 = sadd.s32 %s173, %s171
        %s175 = smul.addr %s174, 8
        %s176 = scalar_lea.vmem %s2, %s175
      $region28: #{dpl_lstm_sac_forward.3} parent=19 // pred_fallthru
        _
    $region20: #{dpl_lstm_sac_forward.3} parent=5 // pred_fallthru
      _
    %p177 = scmp.le.s32.totalorder 1, %s9
    %p178 = scmp.lt.s32.totalorder %s9, 5
    %p179 = pnand %p177, %p178
    %p180 = pneg %p179
    // Predicated region
    $region29: #{dpl_lstm_sac_forward.3} parent=5 // pred_check
      _
    $region30: #{dpl_lstm_sac_forward.3} parent=5 // pred_check_branch
      %182 = sbr.rel (%p179) target = $region32
    $region31: #{dpl_lstm_sac_forward.3} parent=5 // pred_region
      %s183 = ssub.s32 %s9, 1
      %p184 = scmp.lt.s32.totalorder %s18, 0
      %s185 = scalar_select %p184, %s18, 0
      %s186 = smul.addr %s185, 8
      %s187 = scalar_lea.vmem %s0, %s186
      %p188 = pneg %p47
      %p189 = pneg %p44
      %p190 = scmp.lt.s32.totalorder %s19, 3
      %s191 = scalar_select %p190, %s19, 3
      %p192 = scmp.lt.s32.totalorder %s18, 0
      %s193 = scalar_select %p192, %s18, 0
      %s194 = sadd.s32 %s193, %s191
      %s195 = smul.addr %s194, 8
      %s196 = scalar_lea.vmem %s1, %s195
      %p197 = pneg %p75
      %p198 = pneg %p72
      %p199 = scmp.lt.s32.totalorder %s19, 3
      %s200 = scalar_select %p199, %s19, 3
      %p201 = scmp.lt.s32.totalorder %s18, 0
      %s202 = scalar_select %p201, %s18, 0
      %s203 = sadd.s32 %s202, %s200
      %s204 = smul.addr %s203, 8
      %s205 = scalar_lea.vmem %s2, %s204
      %p206 = pneg %p103
      %p207 = pneg %p100
      %p208 = pneg %p131
      %p209 = pneg %p128
      %p210 = scmp.lt.s32.totalorder %s19, 3
      %s211 = scalar_select %p210, %s19, 3
      %p212 = scmp.lt.s32.totalorder %s18, 0
      %s213 = scalar_select %p212, %s18, 0
      %s214 = sadd.s32 %s213, %s211
      %s215 = smul.addr %s214, 8
      %s216 = scalar_lea.vmem %s3, %s215
      %p217 = scmp.lt.s32.totalorder %s18, 0
      %s218 = scalar_select %p217, %s18, 0
      %s219 = smul.addr %s218, 8
      %s220 = scalar_lea.vmem %s0, %s219
      %p221 = scmp.lt.s32.totalorder %s19, 3
      %s222 = scalar_select %p221, %s19, 3
      %p223 = scmp.lt.s32.totalorder %s18, 0
      %s224 = scalar_select %p223, %s18, 0
      %s225 = sadd.s32 %s224, %s222
      %s226 = smul.addr %s225, 8
      %s227 = scalar_lea.vmem %s1, %s226
      %p228 = scmp.lt.s32.totalorder %s19, 3
      %s229 = scalar_select %p228, %s19, 3
      %p230 = scmp.lt.s32.totalorder %s18, 0
      %s231 = scalar_select %p230, %s18, 0
      %s232 = sadd.s32 %s231, %s229
      %s233 = smul.addr %s232, 8
      %s234 = scalar_lea.vmem %s2, %s233
      %p235 = scmp.lt.s32.totalorder %s19, 3
      %s236 = scalar_select %p235, %s19, 3
      %p237 = scmp.lt.s32.totalorder %s18, 0
      %s238 = scalar_select %p237, %s18, 0
      %s239 = sadd.s32 %s238, %s236
      %s240 = smul.addr %s239, 8
      %s241 = scalar_lea.vmem %s3, %s240
      %p242 = scmp.eq.s32.totalorder %s19, 0
      // Predicated region
      $region33: #{dpl_lstm_sac_forward.3} parent=31 // pred_check
        %p243 = pneg %p242
      $region34: #{dpl_lstm_sac_forward.3} parent=31 // pred_check_branch
        %245 = sbr.rel (%p243) target = $region36
      $region35: #{dpl_lstm_sac_forward.3} parent=31 // pred_region
        %246 = vst [vmem:[#allocation2] sm:$0xff] 0.01
        %247 = vst [vmem:[#allocation2 + $0x8] sm:$0xf] 0.01
      $region36: #{dpl_lstm_sac_forward.3} parent=31 // pred_fallthru
        _
      %v248 = vld [vmem:[%s220] sm:$0x1]
      %v249 = vld [vmem:[%s220 + $0x1] sm:$0x1]
      %v250 = vld [vmem:[%s220 + $0x2] sm:$0x1]
      %v251 = vld [vmem:[%s220 + $0x3] sm:$0x1]
      %v252 = vld [vmem:[%s220 + $0x4] sm:$0x1]
      %v253 = vld [vmem:[%s220 + $0x5] sm:$0x1]
      %v254 = vld [vmem:[%s220 + $0x6] sm:$0x1]
      %v255 = vld [vmem:[%s220 + $0x7] sm:$0x1]
      %v256 = vld [vmem:[%s220 + $0x8] sm:$0x1]
      %v257 = vld [vmem:[%s220 + $0x9] sm:$0x1]
      %v258 = vld [vmem:[%s220 + $0xb] sm:$0x1]
      %v259 = vld [vmem:[%s220 + $0xc] sm:$0x1]
      %v260 = vld [vmem:[%s220 + $0xd] sm:$0x1]
      %v261 = vld [vmem:[%s220 + $0xe] sm:$0x1]
      %v262 = vld [vmem:[%s220 + $0xf] sm:$0x1]
      %v263 = vld [vmem:[%s220 + $0x10] sm:$0x1]
      %v264 = vld [vmem:[%s220 + $0x11] sm:$0x1]
      %v265 = vld [vmem:[%s220 + $0x12] sm:$0x1]
      %v266 = vld [vmem:[%s220 + $0x13] sm:$0x1]
      %v267 = vld [vmem:[%s220 + $0x14] sm:$0x1]
      %v268 = vrcp.pop %v251
      %v269 = vmul.f32 %v251, %v268
      %v270 = vsub.f32 1.0, %v269
      %v271 = vmul.f32 %v268, %v270
      %v272 = vadd.f32 %v268, %v271
      %vm273 = vweird.f32 %v251
      %vm274 = vweird.f32 %v268
      %vm275 = vmor %vm273, %vm274
      %v276 = vsel %vm275, %v268, %v272
      %v277 = vand.u32 2147483647, %v251
      %vm278 = vcmp.eq.f32.partialorder %v277, 8.507059e+37
      %v279 = vand.u32 %v251, 2147483648
      %v280 = vor.u32 1.1754944e-38, %v279
      %v281 = vsel %vm278, %v280, %v276
      %v282 = vmul.f32 1.0, %v281
      %v283 = vrcp.pop %v253
      %v284 = vmul.f32 %v253, %v283
      %v285 = vsub.f32 1.0, %v284
      %v286 = vmul.f32 %v283, %v285
      %v287 = vadd.f32 %v283, %v286
      %vm288 = vweird.f32 %v253
      %vm289 = vweird.f32 %v283
      %vm290 = vmor %vm288, %vm289
      %v291 = vsel %vm290, %v283, %v287
      %v292 = vand.u32 2147483647, %v253
      %vm293 = vcmp.eq.f32.partialorder %v292, 8.507059e+37
      %v294 = vand.u32 %v253, 2147483648
      %v295 = vor.u32 1.1754944e-38, %v294
      %v296 = vsel %vm293, %v295, %v291
      %v297 = vmul.f32 1.0, %v296
      %v298 = vrcp.pop %v252
      %v299 = vmul.f32 %v252, %v298
      %v300 = vsub.f32 1.0, %v299
      %v301 = vmul.f32 %v298, %v300
      %v302 = vadd.f32 %v298, %v301
      %vm303 = vweird.f32 %v252
      %vm304 = vweird.f32 %v298
      %vm305 = vmor %vm303, %vm304
      %v306 = vsel %vm305, %v298, %v302
      %v307 = vand.u32 2147483647, %v252
      %vm308 = vcmp.eq.f32.partialorder %v307, 8.507059e+37
      %v309 = vand.u32 %v252, 2147483648
      %v310 = vor.u32 1.1754944e-38, %v309
      %v311 = vsel %vm308, %v310, %v306
      %v312 = vmul.f32 1.0, %v311
      %v313 = vadd.f32 %v251, %v253
      %v314 = vrcp.pop %v313
      %v315 = vmul.f32 %v313, %v314
      %v316 = vsub.f32 1.0, %v315
      %v317 = vmul.f32 %v314, %v316
      %v318 = vadd.f32 %v314, %v317
      %vm319 = vweird.f32 %v313
      %vm320 = vweird.f32 %v314
      %vm321 = vmor %vm319, %vm320
      %v322 = vsel %vm321, %v314, %v318
      %v323 = vand.u32 2147483647, %v313
      %vm324 = vcmp.eq.f32.partialorder %v323, 8.507059e+37
      %v325 = vand.u32 %v313, 2147483648
      %v326 = vor.u32 1.1754944e-38, %v325
      %v327 = vsel %vm324, %v326, %v322
      %v328 = vmul.f32 1.0, %v327
      %v329 = vadd.f32 %v251, %v252
      %v330 = vrcp.pop %v329
      %v331 = vmul.f32 %v329, %v330
      %v332 = vsub.f32 1.0, %v331
      %v333 = vmul.f32 %v330, %v332
      %v334 = vadd.f32 %v330, %v333
      %vm335 = vweird.f32 %v329
      %vm336 = vweird.f32 %v330
      %vm337 = vmor %vm335, %vm336
      %v338 = vsel %vm337, %v330, %v334
      %v339 = vand.u32 2147483647, %v329
      %vm340 = vcmp.eq.f32.partialorder %v339, 8.507059e+37
      %v341 = vand.u32 %v329, 2147483648
      %v342 = vor.u32 1.1754944e-38, %v341
      %v343 = vsel %vm340, %v342, %v338
      %v344 = vmul.f32 1.0, %v343
      %v345 = vsub.f32 1.0, %v249
      %v346 = vsub.f32 %v345, %v250
      %v347 = vmax.f32 %v346, 0.0
      %v348 = vmul.f32 %v346, 1000.0
      %v349 = vmul.f32 %v254, %v261
      %v350 = vmul.f32 %v255, %v262
      %v351 = vadd.f32 %v349, %v350
      %v352 = vadd.f32 %v254, %v255
      %v353 = vadd.f32 %v352, %v253
      %v354 = vrcp.pop %v353
      %v355 = vmul.f32 %v353, %v354
      %v356 = vsub.f32 1.0, %v355
      %v357 = vmul.f32 %v354, %v356
      %v358 = vadd.f32 %v354, %v357
      %vm359 = vweird.f32 %v353
      %vm360 = vweird.f32 %v354
      %vm361 = vmor %vm359, %vm360
      %v362 = vsel %vm361, %v354, %v358
      %v363 = vand.u32 2147483647, %v353
      %vm364 = vcmp.eq.f32.partialorder %v363, 8.507059e+37
      %v365 = vand.u32 %v353, 2147483648
      %v366 = vor.u32 1.1754944e-38, %v365
      %v367 = vsel %vm364, %v366, %v362
      %v368 = vmul.f32 1.0, %v367
      %v369 = vrcp.pop %v255
      %v370 = vmul.f32 %v255, %v369
      %v371 = vsub.f32 1.0, %v370
      %v372 = vmul.f32 %v369, %v371
      %v373 = vadd.f32 %v369, %v372
      %vm374 = vweird.f32 %v255
      %vm375 = vweird.f32 %v369
      %vm376 = vmor %vm374, %vm375
      %v377 = vsel %vm376, %v369, %v373
      %v378 = vand.u32 2147483647, %v255
      %vm379 = vcmp.eq.f32.partialorder %v378, 8.507059e+37
      %v380 = vand.u32 %v255, 2147483648
      %v381 = vor.u32 1.1754944e-38, %v380
      %v382 = vsel %vm379, %v381, %v377
      %v383 = vmul.f32 1.0, %v382
      %v384 = vrcp.pop %v352
      %v385 = vmul.f32 %v352, %v384
      %v386 = vsub.f32 1.0, %v385
      %v387 = vmul.f32 %v384, %v386
      %v388 = vadd.f32 %v384, %v387
      %vm389 = vweird.f32 %v352
      %vm390 = vweird.f32 %v384
      %vm391 = vmor %vm389, %vm390
      %v392 = vsel %vm391, %v384, %v388
      %v393 = vand.u32 2147483647, %v352
      %vm394 = vcmp.eq.f32.partialorder %v393, 8.507059e+37
      %v395 = vand.u32 %v352, 2147483648
      %v396 = vor.u32 1.1754944e-38, %v395
      %v397 = vsel %vm394, %v396, %v392
      %v398 = vmul.f32 %v255, %v397
      %v399 = vrcp.pop %v254
      %v400 = vmul.f32 %v254, %v399
      %v401 = vsub.f32 1.0, %v400
      %v402 = vmul.f32 %v399, %v401
      %v403 = vadd.f32 %v399, %v402
      %vm404 = vweird.f32 %v254
      %vm405 = vweird.f32 %v399
      %vm406 = vmor %vm404, %vm405
      %v407 = vsel %vm406, %v399, %v403
      %v408 = vand.u32 2147483647, %v254
      %vm409 = vcmp.eq.f32.partialorder %v408, 8.507059e+37
      %v410 = vand.u32 %v254, 2147483648
      %v411 = vor.u32 1.1754944e-38, %v410
      %v412 = vsel %vm409, %v411, %v407
      %v413 = vmul.f32 %v254, %v412
      %v414 = vsub.f32 1.0, %v413
      %v415 = vmul.f32 %v256, %v352
      %v416 = vsub.f32 %v352, %v415
      %v417 = vadd.f32 %v416, %v253
      %v418 = vrcp.pop %v417
      %v419 = vmul.f32 %v417, %v418
      %v420 = vsub.f32 1.0, %v419
      %v421 = vmul.f32 %v418, %v420
      %v422 = vadd.f32 %v418, %v421
      %vm423 = vweird.f32 %v417
      %vm424 = vweird.f32 %v418
      %vm425 = vmor %vm423, %vm424
      %v426 = vsel %vm425, %v418, %v422
      %v427 = vand.u32 2147483647, %v417
      %vm428 = vcmp.eq.f32.partialorder %v427, 8.507059e+37
      %v429 = vand.u32 %v417, 2147483648
      %v430 = vor.u32 1.1754944e-38, %v429
      %v431 = vsel %vm428, %v430, %v426
      %v432 = vmul.f32 1.0, %v431
      %v433 = vmul.f32 %v266, 24.0
      %v434 = vsub.f32 1.0, %v267
      %v435 = vmul.f32 %v433, %v434
      %v436 = vadd.f32 %v435, 12.0
      %v437 = vmax.f32 %v436, 0.0
      %v438 = vrcp.pop %v437
      %v439 = vmul.f32 %v437, %v438
      %v440 = vsub.f32 1.0, %v439
      %v441 = vmul.f32 %v438, %v440
      %v442 = vadd.f32 %v438, %v441
      %vm443 = vweird.f32 %v437
      %vm444 = vweird.f32 %v438
      %vm445 = vmor %vm443, %vm444
      %v446 = vsel %vm445, %v438, %v442
      %v447 = vand.u32 2147483647, %v437
      %vm448 = vcmp.eq.f32.partialorder %v447, 8.507059e+37
      %v449 = vand.u32 %v437, 2147483648
      %v450 = vor.u32 1.1754944e-38, %v449
      %v451 = vsel %vm448, %v450, %v446
      %v452 = vmul.f32 1.0, %v451
      %v453 = vsub.f32 0.0, %v433
      %v454 = vmul.f32 %v453, %v267
      %v455 = vadd.f32 %v454, 12.0
      %v456 = vmul.f32 %v455, %v452
      %v457 = vmax.f32 %v456, 0.0
      %v458 = vsub.f32 %v435, 12.0
      %v459 = vmul.f32 %v458, %v452
      %v460 = vmax.f32 %v459, 0.0
      %v461 = vmul.f32 %v433, %v267
      %v462 = vadd.f32 %v461, 12.0
      %v463 = vmul.f32 %v462, %v452
      %v464 = vld [vmem:[#allocation2] sm:$0xff]
      %v465 = vld [vmem:[#allocation2 + $0x8] sm:$0xf]
      %v467 = vrot.slane %v464, 1
      %v469 = vrot.slane %v464, 2
      %v471 = vrot.slane %v464, 3
      %v473 = vrot.slane %v464, 5
      %v475 = vrot.slane %v464, 6
      %v477 = vrot.slane %v464, 7
      %v480 = vrot.slane %v465, 1
      %v482 = vrot.slane %v465, 2
      %v484 = vrot.slane %v465, 3
      loop: start=0, step=1, limit=8
      $region37: #{dpl_lstm_sac_forward.3} parent=31 // loop_pre_header
        _
      $region38: #{dpl_lstm_sac_forward.3} parent=31 // loop_header
        %s487 = sphi 0, %s491
        %p488 = scmp.ge.s32.totalorder %s487, 8
        %v492 = vphi %v464, %v538
        %v493 = vphi %v467, %v540
        %v494 = vphi %v469, %v663
        %v495 = vphi %v471, %v665
        %v496 = vphi %v464, %v686
        %v497 = vphi %v473, %v754
        %v498 = vphi %v475, %v757
        %v499 = vphi %v477, %v724
        %v500 = vphi %v465, %v730
        %v501 = vphi %v480, %v736
        %v502 = vphi %v482, %v742
        %v503 = vphi %v484, %v750
      $region39: #{dpl_lstm_sac_forward.3} parent=31 // loop_header_branch
        %490 = sbr.rel (%p488) target = $region43
      $region40: #{dpl_lstm_sac_forward.3} parent=31 // loop_body
        %s504 = scalar_lea.vmem %s227, %s487
        %v505 = vld [vmem:[%s504] sm:$0x1]
        %v506 = vmax.f32 %v505, 0.0
        %s507 = scalar_lea.vmem %s234, %s487
        %v508 = vld [vmem:[%s507] sm:$0x1]
        %vm509 = vcmp.eq.f32.partialorder %v508, %v508
        %v510 = vand.u32 2147483647, %v508
        %vm511 = vcmp.lt.f32.partialorder %v510, inf
        %vm512 = vmand %vm509, %vm511
        %v513 = vsel %vm512, %v508, 0.0
        %v514 = vmax.f32 %v513, 0.0
        %v515 = vmul.f32 %v248, %v514
        %v516 = vmul.f32 %v249, %v506
        %v517 = vmul.f32 %v492, %v282
        %v518 = vmul.f32 %v515, %v517
        %v519 = vmin.f32 %v492, %v518
        %v520 = vsub.f32 %v515, %v519
        %v521 = vmul.f32 %v493, %v328
        %v522 = vmul.f32 %v520, %v521
        %v523 = vmax.f32 %v522, 0.0
        %v524 = vsub.f32 %v492, %v519
        %v525 = vsub.f32 %v251, %v524
        %v526 = vsub.f32 %v506, %v525
        %v527 = vmax.f32 %v526, 0.0
        %v528 = vsub.f32 %v493, %v523
        %v529 = vmul.f32 %v528, %v297
        %v530 = vmul.f32 %v527, %v529
        %v531 = vmax.f32 %v530, 0.0
        %v532 = vsub.f32 %v527, %v531
        %v533 = vadd.f32 %v532, %v528
        %v534 = vsub.f32 %v533, %v253
        %v535 = vmax.f32 %v534, 0.0
        %v536 = vadd.f32 %v524, %v506
        %v537 = vmin.f32 %v251, %v536
        %v538 = vmax.f32 %v537, 0.0
        %v539 = vmin.f32 %v253, %v533
        %v540 = vmax.f32 %v539, 0.0
        %v541 = vmul.f32 %v494, %v282
        %v542 = vmul.f32 %v515, %v541
        %v543 = vmin.f32 %v494, %v542
        %v544 = vsub.f32 %v515, %v543
        %v545 = vmin.f32 %v495, %v544
        %v546 = vmax.f32 %v545, 0.0
        %v547 = vsub.f32 %v544, %v546
        %v549 = vrot.slane %v328, 4
        %v551 = vmul.f32 %v496, %v549
        %v553 = vrot.slane %v551, 4
        %v555 = vmul.f32 %v547, %v553
        %v556 = vmax.f32 %v555, 0.0
        %v558 = vrot.slane %v556, 4
        %v560 = vsub.f32 %v496, %v558
        %v561 = vmax.f32 %v560, 0.0
        %v562 = vmul.f32 %v531, %v250
        %v563 = vmul.f32 %v535, %v250
        %v564 = vadd.f32 %v494, %v495
        %v565 = vsub.f32 %v564, %v543
        %v566 = vsub.f32 %v565, %v546
        %v567 = vadd.f32 %v506, %v566
        %v568 = vsub.f32 %v567, %v329
        %v569 = vmax.f32 %v568, 0.0
        %v570 = vmul.f32 %v569, %v346
        %v571 = vsub.f32 %v494, %v543
        %v572 = vadd.f32 %v571, %v506
        %v573 = vmin.f32 %v251, %v572
        %v574 = vmax.f32 %v573, 0.0
        %v575 = vsub.f32 %v567, %v574
        %v576 = vmin.f32 %v252, %v575
        %v577 = vmax.f32 %v576, 0.0
        %v578 = vmul.f32 %v577, %v260
        %v579 = vsub.f32 %v577, %v578
        %v580 = vmax.f32 %v579, 0.0
        %v581 = vadd.f32 %v497, %v498
        %v583 = vrot.slane %v561, 4
        %v585 = vadd.f32 %v581, %v583
        %v586 = vmul.f32 %v585, %v368
        %v587 = vsub.f32 1.0, %v586
        %v588 = vmax.f32 %v587, 0.0
        %vm589 = vcmp.gt.f32.partialorder %v588, 0.0
        %v590 = vsel %vm589, %v588, 1.0
        %v591 = vlog2.pop %v590
        %v592 = vmul.f32 %v591, 0.6931472
        %v593 = vmul.f32 %v259, %v592
        %v594 = vmul.f32 %v593, 1.442695
        %v595 = vpow.pop %v594
        %v596 = vsel %vm589, %v595, 0.0
        %v597 = vmul.f32 %v258, %v596
        %v598 = vadd.f32 %v597, 1.0
        %v599 = vmul.f32 %v351, %v598
        %v600 = vmul.f32 %v599, %v580
        %v601 = vmul.f32 %v600, %v312
        %v602 = vsub.f32 %v353, %v585
        %v603 = vmin.f32 %v601, %v602
        %v604 = vmax.f32 %v603, 0.0
        %v605 = vsub.f32 %v352, %v581
        %v606 = vsub.f32 %v253, %v583
        %v607 = vsub.f32 %v604, %v606
        %v608 = vmul.f32 %v604, %v257
        %v609 = vmax.f32 %v607, %v608
        %v610 = vmin.f32 %v605, %v609
        %v611 = vmax.f32 %v610, 0.0
        %v612 = vsub.f32 %v604, %v611
        %v613 = vmax.f32 %v612, 0.0
        %v614 = vmul.f32 %v498, %v383
        %v615 = vsub.f32 1.0, %v614
        %v616 = vmul.f32 %v615, 2.0
        %v617 = vadd.f32 %v615, %v414
        %v618 = vrcp.pop %v617
        %v619 = vmul.f32 %v617, %v618
        %v620 = vsub.f32 1.0, %v619
        %v621 = vmul.f32 %v618, %v620
        %v622 = vadd.f32 %v618, %v621
        %vm623 = vweird.f32 %v617
        %vm624 = vweird.f32 %v618
        %vm625 = vmor %vm623, %vm624
        %v626 = vsel %vm625, %v618, %v622
        %v627 = vand.u32 2147483647, %v617
        %vm628 = vcmp.eq.f32.partialorder %v627, 8.507059e+37
        %v629 = vand.u32 %v617, 2147483648
        %v630 = vor.u32 1.1754944e-38, %v629
        %v631 = vsel %vm628, %v630, %v626
        %v632 = vmul.f32 %v616, %v631
        %v633 = vmul.f32 %v398, %v632
        %v634 = vmax.f32 %v633, 0.0
        %v635 = vmin.f32 %v634, 1.0
        %v636 = vsub.f32 %v255, %v498
        %v637 = vsub.f32 %v254, %v497
        %v638 = vsub.f32 %v611, %v637
        %v639 = vmul.f32 %v635, %v611
        %v640 = vmax.f32 %v638, %v639
        %v641 = vmin.f32 %v636, %v640
        %v642 = vmax.f32 %v641, 0.0
        %v643 = vsub.f32 %v611, %v642
        %v644 = vmax.f32 %v643, 0.0
        %v646 = vrot.slane %v613, 4
        %v648 = vadd.f32 %v561, %v646
        %v649 = vadd.f32 %v497, %v644
        %v650 = vadd.f32 %v498, %v642
        %v651 = vmul.f32 %v649, %v261
        %v652 = vsub.f32 %v649, %v651
        %v653 = vmax.f32 %v652, 0.0
        %v654 = vmul.f32 %v650, %v262
        %v655 = vsub.f32 %v650, %v654
        %v656 = vmax.f32 %v655, 0.0
        %v657 = vmul.f32 %v574, %v282
        %v658 = vmul.f32 %v580, %v312
        %v659 = vadd.f32 %v574, %v580
        %v660 = vmul.f32 %v659, %v344
        %vm661 = vcmp.lt.f32.partialorder %v657, %v658
        %v662 = vmul.f32 %v251, %v660
        %v663 = vsel %vm661, %v662, %v574
        %v664 = vmul.f32 %v252, %v660
        %v665 = vsel %vm661, %v664, %v580
        %v666 = vadd.f32 %v649, %v650
        %v667 = vsub.f32 %v666, %v415
        %v669 = vrot.slane %v648, 4
        %v671 = vadd.f32 %v667, %v669
        %v672 = vmul.f32 %v671, %v432
        %v673 = vmax.f32 %v672, 0.0
        %v675 = vrot.slane %v297, 4
        %v677 = vmul.f32 %v648, %v675
        %v679 = vrot.slane %v673, 4
        %vm681 = vcmp.lt.f32.partialorder %v677, %v679
        %v682 = vmul.f32 %v253, %v673
        %v684 = vrot.slane %v682, 4
        %v686 = vsel %vm681, %v684, %v648
        %v687 = vsub.f32 %v686, %v648
        %v689 = vrot.slane %v687, 4
        %v691 = vsub.f32 %v649, %v689
        %v692 = vmax.f32 %v691, 0.0
        %v694 = vrot.slane %v692, 4
        %v697 = vrot.slane %v653, 4
        %v699 = vsel %vm681, %v694, %v697
        %v701 = vrot.slane %v649, 4
        %v703 = vsub.f32 %v687, %v701
        %v704 = vmax.f32 %v703, 0.0
        %v706 = vrot.slane %v704, 4
        %v708 = vsub.f32 %v650, %v706
        %v710 = vrot.slane %v708, 4
        %v713 = vrot.slane %v656, 4
        %v715 = vsel %vm681, %v710, %v713
        %v716 = vadd.f32 %v499, %v500
        %v717 = vadd.f32 %v716, %v501
        %v718 = vadd.f32 %v717, %v502
        %v719 = vadd.f32 %v562, %v563
        %v720 = vmul.f32 %v719, %v250
        %v721 = vadd.f32 %v516, %v720
        %v722 = vmul.f32 %v570, %v347
        %v723 = vadd.f32 %v721, %v722
        %v724 = vmul.f32 %v723, 1000.0
        %v725 = vmul.f32 %v263, %v500
        %v726 = vsub.f32 1.0, %v263
        %v727 = vmul.f32 %v726, %v578
        %v728 = vmul.f32 %v727, %v348
        %v729 = vadd.f32 %v725, %v728
        %v730 = vmax.f32 %v729, 0.0
        %v731 = vmul.f32 %v264, %v501
        %v732 = vsub.f32 1.0, %v264
        %v733 = vmul.f32 %v732, %v651
        %v734 = vmul.f32 %v733, %v348
        %v735 = vadd.f32 %v731, %v734
        %v736 = vmax.f32 %v735, 0.0
        %v737 = vmul.f32 %v265, %v502
        %v738 = vsub.f32 1.0, %v265
        %v739 = vmul.f32 %v738, %v654
        %v740 = vmul.f32 %v739, %v348
        %v741 = vadd.f32 %v737, %v740
        %v742 = vmax.f32 %v741, 0.0
        %v743 = vadd.f32 %v724, %v730
        %v744 = vadd.f32 %v743, %v736
        %v745 = vadd.f32 %v744, %v742
        %v746 = vmul.f32 %v463, %v718
        %v747 = vmul.f32 %v457, %v745
        %v748 = vadd.f32 %v746, %v747
        %v749 = vmul.f32 %v460, %v503
        %v750 = vadd.f32 %v748, %v749
        %s751 = scalar_lea.vmem %s241, %s487
        %752 = vst [vmem:[%s751] sm:$0x1] %v750
        %v754 = vrot.slane %v699, 4
        %v757 = vrot.slane %v715, 4
      $region41: #{dpl_lstm_sac_forward.3} parent=31 // loop_footer
        %s491 = sadd.s32 1, %s487
      $region42: #{dpl_lstm_sac_forward.3} parent=31 // loop_footer_branch
        %486 = sbr.rel target = $region38
      $region43: #{dpl_lstm_sac_forward.3} parent=31 // loop_exit
        _
      %v760 = vrot.slane %v493, 7
      %v763 = vrot.slane %v494, 6
      %v766 = vrot.slane %v495, 5
      %v769 = vrot.slane %v497, 3
      %v772 = vrot.slane %v498, 2
      %v775 = vrot.slane %v499, 1
      %v778 = vrot.slane %v501, 7
      %v781 = vrot.slane %v502, 6
      %v784 = vrot.slane %v503, 5
      %vm786 = vcmask 1040384
      %v787 = vsel %vm786, %v492, %v760
      %vm788 = vcmask 1041408
      %v789 = vsel %vm788, %v787, %v763
      %vm790 = vcmask 1042432
      %v791 = vsel %vm790, %v789, %v766
      %vm792 = vcmask 1043456
      %v793 = vsel %vm792, %v791, %v496
      %vm794 = vcmask 1044480
      %v795 = vsel %vm794, %v793, %v769
      %vm796 = vcmask 1045504
      %v797 = vsel %vm796, %v795, %v772
      %vm798 = vcmask 1046528
      %v799 = vsel %vm798, %v797, %v775
      %v800 = vsel %vm786, %v500, %v778
      %v801 = vsel %vm788, %v800, %v781
      %v802 = vsel %vm790, %v801, %v784
      %803 = vst [vmem:[#allocation2] sm:$0xff] %v799
      %804 = vst [vmem:[#allocation2 + $0x8] sm:$0xf] %v802
      %p805 = scmp.lt.s32.totalorder %s19, 3
      %s806 = scalar_select %p805, %s19, 3
      %p807 = scmp.lt.s32.totalorder %s18, 0
      %s808 = scalar_select %p807, %s18, 0
      %s809 = sadd.s32 %s808, %s806
      %s810 = smul.addr %s809, 8
      %s811 = scalar_lea.vmem %s3, %s810
      // Predicated region
      $region44: #{dpl_lstm_sac_forward.3} parent=31 // pred_check
        %p812 = pneg %p128
      $region45: #{dpl_lstm_sac_forward.3} parent=31 // pred_check_branch
        %814 = sbr.rel (%p812) target = $region47
      $region46: #{dpl_lstm_sac_forward.3} parent=31 // pred_region
        _
      $region47: #{dpl_lstm_sac_forward.3} parent=31 // pred_fallthru
        _
    $region32: #{dpl_lstm_sac_forward.3} parent=5 // pred_fallthru
      _
    %p815 = scmp.le.s32.totalorder 2, %s9
    // Predicated region
    $region48: #{dpl_lstm_sac_forward.3} parent=5 // pred_check
      %p816 = pneg %p815
    $region49: #{dpl_lstm_sac_forward.3} parent=5 // pred_check_branch
      %818 = sbr.rel (%p816) target = $region51
    $region50: #{dpl_lstm_sac_forward.3} parent=5 // pred_region
      %s819 = ssub.s32 %s9, 2
      // Predicated region
      $region52: #{dpl_lstm_sac_forward.3} parent=50 // pred_check
        %p820 = pneg %p134
      $region53: #{dpl_lstm_sac_forward.3} parent=50 // pred_check_branch
        %822 = sbr.rel (%p820) target = $region55
      $region54: #{dpl_lstm_sac_forward.3} parent=50 // pred_region
        %p823 = scmp.lt.s32.totalorder %s21, 3
        %s824 = scalar_select %p823, %s21, 3
        %p825 = scmp.lt.s32.totalorder %s20, 0
        %s826 = scalar_select %p825, %s20, 0
        %s827 = sadd.s32 %s826, %s824
        %s828 = smul.addr %s827, 8
        %s829 = scalar_lea.vmem %s3, %s828
      $region55: #{dpl_lstm_sac_forward.3} parent=50 // pred_fallthru
        _
    $region51: #{dpl_lstm_sac_forward.3} parent=5 // pred_fallthru
      _
  $region6: #{dpl_lstm_sac_forward.3} parent=0 // loop_footer
    %s13 = sadd.s32 1, %s9
  $region7: #{dpl_lstm_sac_forward.3} parent=0 // loop_footer_branch
    %8 = sbr.rel target = $region3
  $region8: #{dpl_lstm_sac_forward.3} parent=0 // loop_exit
    _

// kernel: dpl_lstm_sac_forward.2
$region0: #{dpl_lstm_sac_forward.2}
  #allocation0 [shape = 'u32[]', space=smem, size = 0x4, offset = 0x4, fixed_abs, tag = 'smem constant byte address 0x4 - core index']
  #allocation1 [shape = 'u32[72,128]{1,0:T(1,128)}', space=vmem, size = 0x9000, scoped, tag = 'internal scratch']
  #allocation2 [shape = 'f32[128,32]{1,0:T(8,128)}', space=vmem, size = 0x10000, scoped, tag = 'scratch operand']
  #allocation3 [shape = 'f32[128,32]{1,0:T(8,128)}', space=vmem, size = 0x10000, scoped, tag = 'scratch operand']
  %s0 = inlined_call_operand.vmem [shape: f32[32,128,8], index: 0, kind: input, shape index: {}]
  %s1 = inlined_call_operand.vmem [shape: f32[8,128], index: 1, kind: input, shape index: {}]
  %s2 = inlined_call_operand.vmem [shape: f32[32,128], index: 2, kind: input, shape index: {}]
  %s3 = inlined_call_operand.vmem [shape: f32[1,128], index: 3, kind: input, shape index: {}]
  %s4 = inlined_call_operand.vmem [shape: f32[32,128], index: 4, kind: input, shape index: {}]
  %s5 = inlined_call_operand.vmem [shape: f32[1,128], index: 5, kind: input, shape index: {}]
  %s6 = inlined_call_operand.vmem [shape: f32[128,1], index: 6, kind: input, shape index: {}]
  %s7 = inlined_call_operand.vmem [shape: f32[128,1], index: 7, kind: input, shape index: {}]
  %s8 = inlined_call_operand.vmem [shape: f32[128,128], index: 8, kind: output, shape index: {}]
  %s9 = sld [smem:[#allocation0]]
  $region80: #{dpl_lstm_sac_forward.2} parent=0
    _
  %s11 = ssub.s32 1, %s9
  %s12 = scalar_select 0, %s11, %s9
  loop: start=0, step=1, limit=6
  $region2: #{dpl_lstm_sac_forward.2} parent=0 // loop_pre_header
    _
  $region3: #{dpl_lstm_sac_forward.2} parent=0 // loop_header
    %s14 = sphi 0, %s18
    %p15 = scmp.ge.s32.totalorder %s14, 6
    %s21 = sphi 0, %s33
    %s22 = sphi 0, %s29
    %s23 = sphi 0, %s21
    %s24 = sphi 0, %s22
    %s25 = sphi 0, %s23
    %s26 = sphi 0, %s24
    %s38 = sphi 0, %s40
    %s41 = sphi 0, %s38
    %s42 = sphi 0, %s41
    %s58 = sphi 0, %s42
    %s62 = sphi 0, %s62
    %s64 = sphi 0, %s62
    %s65 = sphi 0, %s64
    %s79 = sphi 0, %s65
    %s83 = sphi 0, %s83
    %s85 = sphi 0, %s83
    %s86 = sphi 0, %s85
    %s100 = sphi 0, %s86
    %s104 = sphi 0, %s104
    %s106 = sphi 0, %s104
    %s107 = sphi 0, %s106
    %s121 = sphi 0, %s107
    %s125 = sphi 0, %s125
    %s127 = sphi 0, %s125
    %s128 = sphi 0, %s127
    %s142 = sphi 0, %s128
    %s146 = sphi 0, %s146
    %s148 = sphi 0, %s146
    %s149 = sphi 0, %s148
    %s163 = sphi 0, %s149
    %s167 = sphi 0, %s167
    %s169 = sphi 0, %s167
    %s170 = sphi 0, %s169
    %s184 = sphi 0, %s170
    %s188 = sphi 0, %s188
    %s190 = sphi 0, %s188
    %s191 = sphi 0, %s190
    %s205 = sphi 0, %s191
    %s211 = sphi 0, %s213
    %s214 = sphi 0, %s211
    %s215 = sphi 0, %s214
    %s231 = sphi 0, %s215
  $region4: #{dpl_lstm_sac_forward.2} parent=0 // loop_header_branch
    %17 = sbr.rel (%p15) target = $region8
  $region5: #{dpl_lstm_sac_forward.2} parent=0 // loop_body
    %s19 = ssub.s32 %s14, 1
    %s20 = ssub.s32 %s14, 2
    %s27 = sadd.s32 1, %s22
    %p28 = scmp.ge.s32.totalorder %s27, 4
    %s29 = scalar_select %p28, 0, %s27
    %s30 = sadd.s32 1, %s21
    %s31 = scalar_select %p28, %s30, %s21
    %p32 = scmp.ge.s32.totalorder %s31, 1
    %s33 = scalar_select %p32, 0, %s31
    %s34 = ssub.s32 %s22, %s29
    %s35 = ssub.s32 %s21, %s33
    %s36 = sor.u32 %s34, %s35
    %p37 = scmp.eq.s32.totalorder %s36, 0
    %s39 = sadd.s32 %s38, 1
    %s40 = scalar_select %p37, %s38, %s39
    %p43 = pneg %p37
    %p44 = scmp.eq.s32.totalorder %s14, 3
    %p45 = por %p43, %p44
    %p46 = scmp.ne.s32.totalorder %s38, %s41
    %p47 = scmp.eq.s32.totalorder %s14, 0
    %p48 = por %p46, %p47
    %p49 = scmp.ne.s32.totalorder %s38, %s41
    %p50 = scmp.eq.s32.totalorder %s19, 3
    %p51 = por %p49, %p50
    %p52 = scmp.ne.s32.totalorder %s41, %s42
    %p53 = scmp.eq.s32.totalorder %s19, 0
    %p54 = por %p52, %p53
    %p55 = scmp.ne.s32.totalorder %s41, %s42
    %p56 = scmp.eq.s32.totalorder %s20, 3
    %p57 = por %p55, %p56
    %p59 = scmp.ne.s32.totalorder %s42, %s58
    %p60 = scmp.eq.s32.totalorder %s20, 0
    %p61 = por %p59, %p60
    %s63 = sadd.s32 %s62, 1
    %p66 = scmp.eq.s32.totalorder %s14, 3
    %p67 = scmp.ne.s32.totalorder %s62, %s64
    %p68 = scmp.eq.s32.totalorder %s14, 0
    %p69 = por %p67, %p68
    %p70 = scmp.ne.s32.totalorder %s62, %s64
    %p71 = scmp.eq.s32.totalorder %s19, 3
    %p72 = por %p70, %p71
    %p73 = scmp.ne.s32.totalorder %s64, %s65
    %p74 = scmp.eq.s32.totalorder %s19, 0
    %p75 = por %p73, %p74
    %p76 = scmp.ne.s32.totalorder %s64, %s65
    %p77 = scmp.eq.s32.totalorder %s20, 3
    %p78 = por %p76, %p77
    %p80 = scmp.ne.s32.totalorder %s65, %s79
    %p81 = scmp.eq.s32.totalorder %s20, 0
    %p82 = por %p80, %p81
    %s84 = sadd.s32 %s83, 1
    %p87 = scmp.eq.s32.totalorder %s14, 3
    %p88 = scmp.ne.s32.totalorder %s83, %s85
    %p89 = scmp.eq.s32.totalorder %s14, 0
    %p90 = por %p88, %p89
    %p91 = scmp.ne.s32.totalorder %s83, %s85
    %p92 = scmp.eq.s32.totalorder %s19, 3
    %p93 = por %p91, %p92
    %p94 = scmp.ne.s32.totalorder %s85, %s86
    %p95 = scmp.eq.s32.totalorder %s19, 0
    %p96 = por %p94, %p95
    %p97 = scmp.ne.s32.totalorder %s85, %s86
    %p98 = scmp.eq.s32.totalorder %s20, 3
    %p99 = por %p97, %p98
    %p101 = scmp.ne.s32.totalorder %s86, %s100
    %p102 = scmp.eq.s32.totalorder %s20, 0
    %p103 = por %p101, %p102
    %s105 = sadd.s32 %s104, 1
    %p108 = scmp.eq.s32.totalorder %s14, 3
    %p109 = scmp.ne.s32.totalorder %s104, %s106
    %p110 = scmp.eq.s32.totalorder %s14, 0
    %p111 = por %p109, %p110
    %p112 = scmp.ne.s32.totalorder %s104, %s106
    %p113 = scmp.eq.s32.totalorder %s19, 3
    %p114 = por %p112, %p113
    %p115 = scmp.ne.s32.totalorder %s106, %s107
    %p116 = scmp.eq.s32.totalorder %s19, 0
    %p117 = por %p115, %p116
    %p118 = scmp.ne.s32.totalorder %s106, %s107
    %p119 = scmp.eq.s32.totalorder %s20, 3
    %p120 = por %p118, %p119
    %p122 = scmp.ne.s32.totalorder %s107, %s121
    %p123 = scmp.eq.s32.totalorder %s20, 0
    %p124 = por %p122, %p123
    %s126 = sadd.s32 %s125, 1
    %p129 = scmp.eq.s32.totalorder %s14, 3
    %p130 = scmp.ne.s32.totalorder %s125, %s127
    %p131 = scmp.eq.s32.totalorder %s14, 0
    %p132 = por %p130, %p131
    %p133 = scmp.ne.s32.totalorder %s125, %s127
    %p134 = scmp.eq.s32.totalorder %s19, 3
    %p135 = por %p133, %p134
    %p136 = scmp.ne.s32.totalorder %s127, %s128
    %p137 = scmp.eq.s32.totalorder %s19, 0
    %p138 = por %p136, %p137
    %p139 = scmp.ne.s32.totalorder %s127, %s128
    %p140 = scmp.eq.s32.totalorder %s20, 3
    %p141 = por %p139, %p140
    %p143 = scmp.ne.s32.totalorder %s128, %s142
    %p144 = scmp.eq.s32.totalorder %s20, 0
    %p145 = por %p143, %p144
    %s147 = sadd.s32 %s146, 1
    %p150 = scmp.eq.s32.totalorder %s14, 3
    %p151 = scmp.ne.s32.totalorder %s146, %s148
    %p152 = scmp.eq.s32.totalorder %s14, 0
    %p153 = por %p151, %p152
    %p154 = scmp.ne.s32.totalorder %s146, %s148
    %p155 = scmp.eq.s32.totalorder %s19, 3
    %p156 = por %p154, %p155
    %p157 = scmp.ne.s32.totalorder %s148, %s149
    %p158 = scmp.eq.s32.totalorder %s19, 0
    %p159 = por %p157, %p158
    %p160 = scmp.ne.s32.totalorder %s148, %s149
    %p161 = scmp.eq.s32.totalorder %s20, 3
    %p162 = por %p160, %p161
    %p164 = scmp.ne.s32.totalorder %s149, %s163
    %p165 = scmp.eq.s32.totalorder %s20, 0
    %p166 = por %p164, %p165
    %s168 = sadd.s32 %s167, 1
    %p171 = scmp.eq.s32.totalorder %s14, 3
    %p172 = scmp.ne.s32.totalorder %s167, %s169
    %p173 = scmp.eq.s32.totalorder %s14, 0
    %p174 = por %p172, %p173
    %p175 = scmp.ne.s32.totalorder %s167, %s169
    %p176 = scmp.eq.s32.totalorder %s19, 3
    %p177 = por %p175, %p176
    %p178 = scmp.ne.s32.totalorder %s169, %s170
    %p179 = scmp.eq.s32.totalorder %s19, 0
    %p180 = por %p178, %p179
    %p181 = scmp.ne.s32.totalorder %s169, %s170
    %p182 = scmp.eq.s32.totalorder %s20, 3
    %p183 = por %p181, %p182
    %p185 = scmp.ne.s32.totalorder %s170, %s184
    %p186 = scmp.eq.s32.totalorder %s20, 0
    %p187 = por %p185, %p186
    %s189 = sadd.s32 %s188, 1
    %p192 = scmp.eq.s32.totalorder %s14, 3
    %p193 = scmp.ne.s32.totalorder %s188, %s190
    %p194 = scmp.eq.s32.totalorder %s14, 0
    %p195 = por %p193, %p194
    %p196 = scmp.ne.s32.totalorder %s188, %s190
    %p197 = scmp.eq.s32.totalorder %s19, 3
    %p198 = por %p196, %p197
    %p199 = scmp.ne.s32.totalorder %s190, %s191
    %p200 = scmp.eq.s32.totalorder %s19, 0
    %p201 = por %p199, %p200
    %p202 = scmp.ne.s32.totalorder %s190, %s191
    %p203 = scmp.eq.s32.totalorder %s20, 3
    %p204 = por %p202, %p203
    %p206 = scmp.ne.s32.totalorder %s191, %s205
    %p207 = scmp.eq.s32.totalorder %s20, 0
    %p208 = por %p206, %p207
    %s209 = ssub.s32 %s21, %s33
    %p210 = scmp.eq.s32.totalorder %s209, 0
    %s212 = sadd.s32 %s211, 1
    %s213 = scalar_select %p210, %s211, %s212
    %p216 = pneg %p210
    %p217 = scmp.eq.s32.totalorder %s14, 3
    %p218 = por %p216, %p217
    %p219 = scmp.ne.s32.totalorder %s211, %s214
    %p220 = scmp.eq.s32.totalorder %s14, 0
    %p221 = por %p219, %p220
    %p222 = scmp.ne.s32.totalorder %s211, %s214
    %p223 = scmp.eq.s32.totalorder %s19, 3
    %p224 = por %p222, %p223
    %p225 = scmp.ne.s32.totalorder %s214, %s215
    %p226 = scmp.eq.s32.totalorder %s19, 0
    %p227 = por %p225, %p226
    %p228 = scmp.ne.s32.totalorder %s214, %s215
    %p229 = scmp.eq.s32.totalorder %s20, 3
    %p230 = por %p228, %p229
    %p232 = scmp.ne.s32.totalorder %s215, %s231
    %p233 = scmp.eq.s32.totalorder %s20, 0
    %p234 = por %p232, %p233
    %p235 = scmp.le.s32.totalorder 1, %s14
    %p236 = scmp.lt.s32.totalorder %s14, 5
    %p237 = pnand %p235, %p236
    %p238 = pneg %p237
    // Predicated region
    $region9: #{dpl_lstm_sac_forward.2} parent=5 // pred_check
      _
    $region10: #{dpl_lstm_sac_forward.2} parent=5 // pred_check_branch
      %240 = sbr.rel (%p237) target = $region12
    $region11: #{dpl_lstm_sac_forward.2} parent=5 // pred_region
      %s241 = ssub.s32 %s14, 1
      // Predicated region
      $region13: #{dpl_lstm_sac_forward.2} parent=11 // pred_check
        %p242 = pneg %p75
      $region14: #{dpl_lstm_sac_forward.2} parent=11 // pred_check_branch
        %244 = sbr.rel (%p242) target = $region16
      $region15: #{dpl_lstm_sac_forward.2} parent=11 // pred_region
        _
      $region16: #{dpl_lstm_sac_forward.2} parent=11 // pred_fallthru
        _
      // Predicated region
      $region17: #{dpl_lstm_sac_forward.2} parent=11 // pred_check
        %p245 = pneg %p96
      $region18: #{dpl_lstm_sac_forward.2} parent=11 // pred_check_branch
        %247 = sbr.rel (%p245) target = $region20
      $region19: #{dpl_lstm_sac_forward.2} parent=11 // pred_region
        _
      $region20: #{dpl_lstm_sac_forward.2} parent=11 // pred_fallthru
        _
      // Predicated region
      $region21: #{dpl_lstm_sac_forward.2} parent=11 // pred_check
        %p248 = pneg %p117
      $region22: #{dpl_lstm_sac_forward.2} parent=11 // pred_check_branch
        %250 = sbr.rel (%p248) target = $region24
      $region23: #{dpl_lstm_sac_forward.2} parent=11 // pred_region
        _
      $region24: #{dpl_lstm_sac_forward.2} parent=11 // pred_fallthru
        _
      // Predicated region
      $region25: #{dpl_lstm_sac_forward.2} parent=11 // pred_check
        %p251 = pneg %p138
      $region26: #{dpl_lstm_sac_forward.2} parent=11 // pred_check_branch
        %253 = sbr.rel (%p251) target = $region28
      $region27: #{dpl_lstm_sac_forward.2} parent=11 // pred_region
        _
      $region28: #{dpl_lstm_sac_forward.2} parent=11 // pred_fallthru
        _
      // Predicated region
      $region29: #{dpl_lstm_sac_forward.2} parent=11 // pred_check
        %p254 = pneg %p159
      $region30: #{dpl_lstm_sac_forward.2} parent=11 // pred_check_branch
        %256 = sbr.rel (%p254) target = $region32
      $region31: #{dpl_lstm_sac_forward.2} parent=11 // pred_region
        _
      $region32: #{dpl_lstm_sac_forward.2} parent=11 // pred_fallthru
        _
      // Predicated region
      $region33: #{dpl_lstm_sac_forward.2} parent=11 // pred_check
        %p257 = pneg %p180
      $region34: #{dpl_lstm_sac_forward.2} parent=11 // pred_check_branch
        %259 = sbr.rel (%p257) target = $region36
      $region35: #{dpl_lstm_sac_forward.2} parent=11 // pred_region
        _
      $region36: #{dpl_lstm_sac_forward.2} parent=11 // pred_fallthru
        _
      // Predicated region
      $region37: #{dpl_lstm_sac_forward.2} parent=11 // pred_check
        %p260 = pneg %p201
      $region38: #{dpl_lstm_sac_forward.2} parent=11 // pred_check_branch
        %262 = sbr.rel (%p260) target = $region40
      $region39: #{dpl_lstm_sac_forward.2} parent=11 // pred_region
        _
      $region40: #{dpl_lstm_sac_forward.2} parent=11 // pred_fallthru
        _
    $region12: #{dpl_lstm_sac_forward.2} parent=5 // pred_fallthru
      _
    %p263 = scmp.lt.s32.totalorder %s14, 4
    // Predicated region
    $region41: #{dpl_lstm_sac_forward.2} parent=5 // pred_check
      %p264 = pneg %p263
    $region42: #{dpl_lstm_sac_forward.2} parent=5 // pred_check_branch
      %266 = sbr.rel (%p264) target = $region44
    $region43: #{dpl_lstm_sac_forward.2} parent=5 // pred_region
      // Predicated region
      $region45: #{dpl_lstm_sac_forward.2} parent=43 // pred_check
        %p267 = pneg %p48
      $region46: #{dpl_lstm_sac_forward.2} parent=43 // pred_check_branch
        %269 = sbr.rel (%p267) target = $region48
      $region47: #{dpl_lstm_sac_forward.2} parent=43 // pred_region
        %s270 = smul.u32 8, %s22
        %s271 = smul.u32 16, %s21
        %p272 = scmp.lt.s32.totalorder %s270, 31
        %s273 = scalar_select %p272, %s270, 31
        %p274 = scmp.lt.s32.totalorder %s271, 15
        %s275 = scalar_select %p274, %s271, 15
        %s276 = smul.addr %s273, 16
        %s277 = sadd.s32 %s275, %s276
        %s278 = smul.addr %s277, 8
        %s279 = scalar_lea.vmem %s0, %s278
        %s280 = smul.u32 8, %s22
        %s281 = smul.u32 16, %s21
      $region48: #{dpl_lstm_sac_forward.2} parent=43 // pred_fallthru
        _
    $region44: #{dpl_lstm_sac_forward.2} parent=5 // pred_fallthru
      _
    %p282 = scmp.le.s32.totalorder 1, %s14
    %p283 = scmp.lt.s32.totalorder %s14, 5
    %p284 = pnand %p282, %p283
    %p285 = pneg %p284
    // Predicated region
    $region49: #{dpl_lstm_sac_forward.2} parent=5 // pred_check
      _
    $region50: #{dpl_lstm_sac_forward.2} parent=5 // pred_check_branch
      %287 = sbr.rel (%p284) target = $region52
    $region51: #{dpl_lstm_sac_forward.2} parent=5 // pred_region
      %s288 = ssub.s32 %s14, 1
      %s289 = smul.u32 8, %s24
      %s290 = smul.u32 16, %s23
      %p291 = scmp.lt.s32.totalorder %s289, 31
      %s292 = scalar_select %p291, %s289, 31
      %p293 = scmp.lt.s32.totalorder %s290, 15
      %s294 = scalar_select %p293, %s290, 15
      %s295 = smul.addr %s292, 16
      %s296 = sadd.s32 %s294, %s295
      %s297 = smul.addr %s296, 8
      %s298 = scalar_lea.vmem %s0, %s297
      %p299 = pneg %p54
      %p300 = pneg %p51
      %p301 = pneg %p75
      %p302 = pneg %p72
      %p303 = pneg %p96
      %p304 = pneg %p93
      %p305 = pneg %p117
      %p306 = pneg %p114
      %p307 = pneg %p138
      %p308 = pneg %p135
      %p309 = pneg %p159
      %p310 = pneg %p156
      %p311 = pneg %p180
      %p312 = pneg %p177
      %p313 = pneg %p201
      %p314 = pneg %p198
      %p315 = pneg %p227
      %p316 = pneg %p224
      %p317 = scmp.lt.s32.totalorder %s23, 0
      %s318 = scalar_select %p317, %s23, 0
      %s319 = smul.addr %s318, 8
      %s320 = scalar_lea.vmem %s8, %s319
      %s321 = smul.u32 8, %s24
      %s322 = smul.u32 16, %s23
      %p323 = scmp.lt.s32.totalorder %s321, 31
      %s324 = scalar_select %p323, %s321, 31
      %p325 = scmp.lt.s32.totalorder %s322, 15
      %s326 = scalar_select %p325, %s322, 15
      %s327 = smul.addr %s324, 16
      %s328 = sadd.s32 %s326, %s327
      %s329 = smul.addr %s328, 8
      %s330 = scalar_lea.vmem %s0, %s329
      %s331 = smul.u32 8, %s24
      %s332 = smul.u32 16, %s23
      %p333 = scmp.lt.s32.totalorder %s23, 0
      %s334 = scalar_select %p333, %s23, 0
      %s335 = smul.addr %s334, 8
      %s336 = scalar_lea.vmem %s8, %s335
      %p337 = scmp.eq.s32.totalorder %s24, 0
      // Predicated region
      $region53: #{dpl_lstm_sac_forward.2} parent=51 // pred_check
        %p338 = pneg %p337
      $region54: #{dpl_lstm_sac_forward.2} parent=51 // pred_check_branch
        %340 = sbr.rel (%p338) target = $region56
      $region55: #{dpl_lstm_sac_forward.2} parent=51 // pred_region
        %vm341 = vcmask 261120
        %342 = vst.msk [vmem:[#allocation2] sm:$0xff] %vm341, 0.0
        %343 = vst.msk [vmem:[#allocation2 + $0x8] sm:$0xff] %vm341, 0.0
        %344 = vst.msk [vmem:[#allocation2 + $0x10] sm:$0xff] %vm341, 0.0
        %345 = vst.msk [vmem:[#allocation2 + $0x18] sm:$0xff] %vm341, 0.0
        %346 = vst.msk [vmem:[#allocation2 + $0x20] sm:$0xff] %vm341, 0.0
        %347 = vst.msk [vmem:[#allocation2 + $0x28] sm:$0xff] %vm341, 0.0
        %348 = vst.msk [vmem:[#allocation2 + $0x30] sm:$0xff] %vm341, 0.0
        %349 = vst.msk [vmem:[#allocation2 + $0x38] sm:$0xff] %vm341, 0.0
        %350 = vst.msk [vmem:[#allocation2 + $0x40] sm:$0xff] %vm341, 0.0
        %351 = vst.msk [vmem:[#allocation2 + $0x48] sm:$0xff] %vm341, 0.0
        %352 = vst.msk [vmem:[#allocation2 + $0x50] sm:$0xff] %vm341, 0.0
        %353 = vst.msk [vmem:[#allocation2 + $0x58] sm:$0xff] %vm341, 0.0
        %354 = vst.msk [vmem:[#allocation2 + $0x60] sm:$0xff] %vm341, 0.0
        %355 = vst.msk [vmem:[#allocation2 + $0x68] sm:$0xff] %vm341, 0.0
        %356 = vst.msk [vmem:[#allocation2 + $0x70] sm:$0xff] %vm341, 0.0
        %357 = vst.msk [vmem:[#allocation2 + $0x78] sm:$0xff] %vm341, 0.0
        %358 = vst.msk [vmem:[#allocation3] sm:$0xff] %vm341, 0.0
        %359 = vst.msk [vmem:[#allocation3 + $0x8] sm:$0xff] %vm341, 0.0
        %360 = vst.msk [vmem:[#allocation3 + $0x10] sm:$0xff] %vm341, 0.0
        %361 = vst.msk [vmem:[#allocation3 + $0x18] sm:$0xff] %vm341, 0.0
        %362 = vst.msk [vmem:[#allocation3 + $0x20] sm:$0xff] %vm341, 0.0
        %363 = vst.msk [vmem:[#allocation3 + $0x28] sm:$0xff] %vm341, 0.0
        %364 = vst.msk [vmem:[#allocation3 + $0x30] sm:$0xff] %vm341, 0.0
        %365 = vst.msk [vmem:[#allocation3 + $0x38] sm:$0xff] %vm341, 0.0
        %366 = vst.msk [vmem:[#allocation3 + $0x40] sm:$0xff] %vm341, 0.0
        %367 = vst.msk [vmem:[#allocation3 + $0x48] sm:$0xff] %vm341, 0.0
        %368 = vst.msk [vmem:[#allocation3 + $0x50] sm:$0xff] %vm341, 0.0
        %369 = vst.msk [vmem:[#allocation3 + $0x58] sm:$0xff] %vm341, 0.0
        %370 = vst.msk [vmem:[#allocation3 + $0x60] sm:$0xff] %vm341, 0.0
        %371 = vst.msk [vmem:[#allocation3 + $0x68] sm:$0xff] %vm341, 0.0
        %372 = vst.msk [vmem:[#allocation3 + $0x70] sm:$0xff] %vm341, 0.0
        %373 = vst.msk [vmem:[#allocation3 + $0x78] sm:$0xff] %vm341, 0.0
      $region56: #{dpl_lstm_sac_forward.2} parent=51 // pred_fallthru
        _
      %v374 = vld [vmem:[%s1] sm:$0xff]
      %v375 = vld [vmem:[%s2] sm:$0xff]
      %v376 = vld [vmem:[%s2 + $0x8] sm:$0xff]
      %v377 = vld [vmem:[%s2 + $0x10] sm:$0xff]
      %v378 = vld [vmem:[%s2 + $0x18] sm:$0xff]
      %v379 = vld [vmem:[%s3] sm:$0x1]
      %v380 = vld [vmem:[#allocation2] sm:$0xff]
      %v381 = vld [vmem:[#allocation2 + $0x8] sm:$0xff]
      %v382 = vld [vmem:[#allocation2 + $0x10] sm:$0xff]
      %v383 = vld [vmem:[#allocation2 + $0x18] sm:$0xff]
      %v384 = vld [vmem:[#allocation2 + $0x20] sm:$0xff]
      %v385 = vld [vmem:[#allocation2 + $0x28] sm:$0xff]
      %v386 = vld [vmem:[#allocation2 + $0x30] sm:$0xff]
      %v387 = vld [vmem:[#allocation2 + $0x38] sm:$0xff]
      %v388 = vld [vmem:[#allocation2 + $0x40] sm:$0xff]
      %v389 = vld [vmem:[#allocation2 + $0x48] sm:$0xff]
      %v390 = vld [vmem:[#allocation2 + $0x50] sm:$0xff]
      %v391 = vld [vmem:[#allocation2 + $0x58] sm:$0xff]
      %v392 = vld [vmem:[#allocation2 + $0x60] sm:$0xff]
      %v393 = vld [vmem:[#allocation2 + $0x68] sm:$0xff]
      %v394 = vld [vmem:[#allocation2 + $0x70] sm:$0xff]
      %v395 = vld [vmem:[#allocation2 + $0x78] sm:$0xff]
      %v396 = vld [vmem:[#allocation3] sm:$0xff]
      %v397 = vld [vmem:[#allocation3 + $0x8] sm:$0xff]
      %v398 = vld [vmem:[#allocation3 + $0x10] sm:$0xff]
      %v399 = vld [vmem:[#allocation3 + $0x18] sm:$0xff]
      %v400 = vld [vmem:[#allocation3 + $0x20] sm:$0xff]
      %v401 = vld [vmem:[#allocation3 + $0x28] sm:$0xff]
      %v402 = vld [vmem:[#allocation3 + $0x30] sm:$0xff]
      %v403 = vld [vmem:[#allocation3 + $0x38] sm:$0xff]
      %v404 = vld [vmem:[#allocation3 + $0x40] sm:$0xff]
      %v405 = vld [vmem:[#allocation3 + $0x48] sm:$0xff]
      %v406 = vld [vmem:[#allocation3 + $0x50] sm:$0xff]
      %v407 = vld [vmem:[#allocation3 + $0x58] sm:$0xff]
      %v408 = vld [vmem:[#allocation3 + $0x60] sm:$0xff]
      %v409 = vld [vmem:[#allocation3 + $0x68] sm:$0xff]
      %v410 = vld [vmem:[#allocation3 + $0x70] sm:$0xff]
      %v411 = vld [vmem:[#allocation3 + $0x78] sm:$0xff]
      loop: start=0, step=1, limit=8
      $region57: #{dpl_lstm_sac_forward.2} parent=51 // loop_pre_header
        _
      $region58: #{dpl_lstm_sac_forward.2} parent=51 // loop_header
        %s413 = sphi 0, %s417
        %p414 = scmp.ge.s32.totalorder %s413, 8
        %v418 = vphi %v380, %v1388
        %v419 = vphi %v381, %v1390
        %v420 = vphi %v382, %v1392
        %v421 = vphi %v383, %v1394
        %v422 = vphi %v384, %v1396
        %v423 = vphi %v385, %v1398
        %v424 = vphi %v386, %v1400
        %v425 = vphi %v387, %v1402
        %v426 = vphi %v388, %v1404
        %v427 = vphi %v389, %v1406
        %v428 = vphi %v390, %v1408
        %v429 = vphi %v391, %v1410
        %v430 = vphi %v392, %v1412
        %v431 = vphi %v393, %v1414
        %v432 = vphi %v394, %v1416
        %v433 = vphi %v395, %v1418
        %v434 = vphi %v396, %v1452
        %v435 = vphi %v397, %v1454
        %v436 = vphi %v398, %v1456
        %v437 = vphi %v399, %v1458
        %v438 = vphi %v400, %v1460
        %v439 = vphi %v401, %v1462
        %v440 = vphi %v402, %v1464
        %v441 = vphi %v403, %v1466
        %v442 = vphi %v404, %v1468
        %v443 = vphi %v405, %v1470
        %v444 = vphi %v406, %v1472
        %v445 = vphi %v407, %v1474
        %v446 = vphi %v408, %v1476
        %v447 = vphi %v409, %v1478
        %v448 = vphi %v410, %v1480
        %v449 = vphi %v411, %v1482
      $region59: #{dpl_lstm_sac_forward.2} parent=51 // loop_header_branch
        %416 = sbr.rel (%p414) target = $region63
      $region60: #{dpl_lstm_sac_forward.2} parent=51 // loop_body
        %s450 = smul.u32 %s413, 128
        %s451 = scalar_lea.vmem %s330, %s450
        %v452 = vld [vmem:[%s451] sm:$0xff]
        %v453 = vld [vmem:[%s451 + $0x8] sm:$0xff]
        %v454 = vld [vmem:[%s451 + $0x10] sm:$0xff]
        %v455 = vld [vmem:[%s451 + $0x18] sm:$0xff]
        %v456 = vld [vmem:[%s451 + $0x20] sm:$0xff]
        %v457 = vld [vmem:[%s451 + $0x28] sm:$0xff]
        %v458 = vld [vmem:[%s451 + $0x30] sm:$0xff]
        %v459 = vld [vmem:[%s451 + $0x38] sm:$0xff]
        %v460 = vld [vmem:[%s451 + $0x40] sm:$0xff]
        %v461 = vld [vmem:[%s451 + $0x48] sm:$0xff]
        %v462 = vld [vmem:[%s451 + $0x50] sm:$0xff]
        %v463 = vld [vmem:[%s451 + $0x58] sm:$0xff]
        %v464 = vld [vmem:[%s451 + $0x60] sm:$0xff]
        %v465 = vld [vmem:[%s451 + $0x68] sm:$0xff]
        %v466 = vld [vmem:[%s451 + $0x70] sm:$0xff]
        %v467 = vld [vmem:[%s451 + $0x78] sm:$0xff]
        %vm468 = vcmask 261120
        %v470 = vsel %vm468, %v418, 0
        %v473 = vsel %vm468, %v419, 0
        %v476 = vsel %vm468, %v420, 0
        %v479 = vsel %vm468, %v421, 0
        %v482 = vsel %vm468, %v422, 0
        %v485 = vsel %vm468, %v423, 0
        %v488 = vsel %vm468, %v424, 0
        %v491 = vsel %vm468, %v425, 0
        %v494 = vsel %vm468, %v426, 0
        %v497 = vsel %vm468, %v427, 0
        %v500 = vsel %vm468, %v428, 0
        %v503 = vsel %vm468, %v429, 0
        %v506 = vsel %vm468, %v430, 0
        %v509 = vsel %vm468, %v431, 0
        %v512 = vsel %vm468, %v432, 0
        %v515 = vsel %vm468, %v433, 0
        %517 = vmatpush.msra.mxu0 0.0
        %518 = vmatpush.msra.mxu0 0.0
        %519 = vmatpush.msra.mxu0 0.0
        %520 = vmatpush.msra.mxu0 0.0
        %521 = vmatpush.msra.mxu0 0.0
        %522 = vmatpush.msra.mxu0 0.0
        %523 = vmatpush.msra.mxu0 0.0
        %524 = vmatpush.msra.mxu0 0.0
        %525 = vmatpush.msra.mxu0 0.0
        %526 = vmatpush.msra.mxu0 0.0
        %527 = vmatpush.msra.mxu0 0.0
        %528 = vmatpush.msra.mxu0 0.0
        %529 = vmatpush.msra.mxu0 %v378
        %530 = vmatpush.msra.mxu0 %v377
        %531 = vmatpush.msra.mxu0 %v376
        %532 = vmatpush.msra.mxu0 %v375
        %533 = vmatmul.f32.gmra.mxu0 %v470
        %v534 = vpop.f32.mrf.mxu0
        %v535 = vadd.f32 0.0, %v534
        %536 = vmatmul.f32.gmra.mxu0 %v473
        %v537 = vpop.f32.mrf.mxu0
        %v538 = vadd.f32 0.0, %v537
        %539 = vmatmul.f32.gmra.mxu0 %v476
        %v540 = vpop.f32.mrf.mxu0
        %v541 = vadd.f32 0.0, %v540
        %542 = vmatmul.f32.gmra.mxu0 %v479
        %v543 = vpop.f32.mrf.mxu0
        %v544 = vadd.f32 0.0, %v543
        %545 = vmatmul.f32.gmra.mxu0 %v482
        %v546 = vpop.f32.mrf.mxu0
        %v547 = vadd.f32 0.0, %v546
        %548 = vmatmul.f32.gmra.mxu0 %v485
        %v549 = vpop.f32.mrf.mxu0
        %v550 = vadd.f32 0.0, %v549
        %551 = vmatmul.f32.gmra.mxu0 %v488
        %v552 = vpop.f32.mrf.mxu0
        %v553 = vadd.f32 0.0, %v552
        %554 = vmatmul.f32.gmra.mxu0 %v491
        %v555 = vpop.f32.mrf.mxu0
        %v556 = vadd.f32 0.0, %v555
        %557 = vmatmul.f32.gmra.mxu0 %v494
        %v558 = vpop.f32.mrf.mxu0
        %v559 = vadd.f32 0.0, %v558
        %560 = vmatmul.f32.gmra.mxu0 %v497
        %v561 = vpop.f32.mrf.mxu0
        %v562 = vadd.f32 0.0, %v561
        %563 = vmatmul.f32.gmra.mxu0 %v500
        %v564 = vpop.f32.mrf.mxu0
        %v565 = vadd.f32 0.0, %v564
        %566 = vmatmul.f32.gmra.mxu0 %v503
        %v567 = vpop.f32.mrf.mxu0
        %v568 = vadd.f32 0.0, %v567
        %569 = vmatmul.f32.gmra.mxu0 %v506
        %v570 = vpop.f32.mrf.mxu0
        %v571 = vadd.f32 0.0, %v570
        %572 = vmatmul.f32.gmra.mxu0 %v509
        %v573 = vpop.f32.mrf.mxu0
        %v574 = vadd.f32 0.0, %v573
        %575 = vmatmul.f32.gmra.mxu0 %v512
        %v576 = vpop.f32.mrf.mxu0
        %v577 = vadd.f32 0.0, %v576
        %578 = vmatmul.f32.gmra.mxu0 %v515
        %v579 = vpop.f32.mrf.mxu0
        %v580 = vadd.f32 0.0, %v579
        %581 = vdwg.mxu0
        %vm582 = vcmask 64512
        %v584 = vsel %vm582, %v452, 0
        %v587 = vsel %vm582, %v453, 0
        %v590 = vsel %vm582, %v454, 0
        %v593 = vsel %vm582, %v455, 0
        %v596 = vsel %vm582, %v456, 0
        %v599 = vsel %vm582, %v457, 0
        %v602 = vsel %vm582, %v458, 0
        %v605 = vsel %vm582, %v459, 0
        %v608 = vsel %vm582, %v460, 0
        %v611 = vsel %vm582, %v461, 0
        %v614 = vsel %vm582, %v462, 0
        %v617 = vsel %vm582, %v463, 0
        %v620 = vsel %vm582, %v464, 0
        %v623 = vsel %vm582, %v465, 0
        %v626 = vsel %vm582, %v466, 0
        %v629 = vsel %vm582, %v467, 0
        %631 = vmatpush.msra.mxu0 0.0
        %632 = vmatpush.msra.mxu0 0.0
        %633 = vmatpush.msra.mxu0 0.0
        %634 = vmatpush.msra.mxu0 0.0
        %635 = vmatpush.msra.mxu0 0.0
        %636 = vmatpush.msra.mxu0 0.0
        %637 = vmatpush.msra.mxu0 0.0
        %638 = vmatpush.msra.mxu0 0.0
        %639 = vmatpush.msra.mxu0 0.0
        %640 = vmatpush.msra.mxu0 0.0
        %641 = vmatpush.msra.mxu0 0.0
        %642 = vmatpush.msra.mxu0 0.0
        %643 = vmatpush.msra.mxu0 0.0
        %644 = vmatpush.msra.mxu0 0.0
        %645 = vmatpush.msra.mxu0 0.0
        %646 = vmatpush.msra.mxu0 %v374
        %647 = vmatmul.f32.gmra.mxu0 %v584
        %v648 = vpop.f32.mrf.mxu0
        %v649 = vadd.f32 %v535, %v648
        %650 = vmatmul.f32.gmra.mxu0 %v587
        %v651 = vpop.f32.mrf.mxu0
        %v652 = vadd.f32 %v538, %v651
        %653 = vmatmul.f32.gmra.mxu0 %v590
        %v654 = vpop.f32.mrf.mxu0
        %v655 = vadd.f32 %v541, %v654
        %656 = vmatmul.f32.gmra.mxu0 %v593
        %v657 = vpop.f32.mrf.mxu0
        %v658 = vadd.f32 %v544, %v657
        %659 = vmatmul.f32.gmra.mxu0 %v596
        %v660 = vpop.f32.mrf.mxu0
        %v661 = vadd.f32 %v547, %v660
        %662 = vmatmul.f32.gmra.mxu0 %v599
        %v663 = vpop.f32.mrf.mxu0
        %v664 = vadd.f32 %v550, %v663
        %665 = vmatmul.f32.gmra.mxu0 %v602
        %v666 = vpop.f32.mrf.mxu0
        %v667 = vadd.f32 %v553, %v666
        %668 = vmatmul.f32.gmra.mxu0 %v605
        %v669 = vpop.f32.mrf.mxu0
        %v670 = vadd.f32 %v556, %v669
        %671 = vmatmul.f32.gmra.mxu0 %v608
        %v672 = vpop.f32.mrf.mxu0
        %v673 = vadd.f32 %v559, %v672
        %674 = vmatmul.f32.gmra.mxu0 %v611
        %v675 = vpop.f32.mrf.mxu0
        %v676 = vadd.f32 %v562, %v675
        %677 = vmatmul.f32.gmra.mxu0 %v614
        %v678 = vpop.f32.mrf.mxu0
        %v679 = vadd.f32 %v565, %v678
        %680 = vmatmul.f32.gmra.mxu0 %v617
        %v681 = vpop.f32.mrf.mxu0
        %v682 = vadd.f32 %v568, %v681
        %683 = vmatmul.f32.gmra.mxu0 %v620
        %v684 = vpop.f32.mrf.mxu0
        %v685 = vadd.f32 %v571, %v684
        %686 = vmatmul.f32.gmra.mxu0 %v623
        %v687 = vpop.f32.mrf.mxu0
        %v688 = vadd.f32 %v574, %v687
        %689 = vmatmul.f32.gmra.mxu0 %v626
        %v690 = vpop.f32.mrf.mxu0
        %v691 = vadd.f32 %v577, %v690
        %692 = vmatmul.f32.gmra.mxu0 %v629
        %v693 = vpop.f32.mrf.mxu0
        %v694 = vadd.f32 %v580, %v693
        %695 = vdwg.mxu0
        %v697 = vperm.slane %v379, 0
        %v699 = vadd.f32 %v649, %v697
        %v700 = vadd.f32 %v652, %v697
        %v701 = vadd.f32 %v655, %v697
        %v702 = vadd.f32 %v658, %v697
        %v703 = vadd.f32 %v661, %v697
        %v704 = vadd.f32 %v664, %v697
        %v705 = vadd.f32 %v667, %v697
        %v706 = vadd.f32 %v670, %v697
        %v707 = vadd.f32 %v673, %v697
        %v708 = vadd.f32 %v676, %v697
        %v709 = vadd.f32 %v679, %v697
        %v710 = vadd.f32 %v682, %v697
        %v711 = vadd.f32 %v685, %v697
        %v712 = vadd.f32 %v688, %v697
        %v713 = vadd.f32 %v691, %v697
        %v714 = vadd.f32 %v694, %v697
        %v715 = vxor.u32 %v699, 2147483648
        %v716 = vxor.u32 %v700, 2147483648
        %v717 = vxor.u32 %v701, 2147483648
        %v718 = vxor.u32 %v702, 2147483648
        %v719 = vxor.u32 %v703, 2147483648
        %v720 = vxor.u32 %v704, 2147483648
        %v721 = vxor.u32 %v705, 2147483648
        %v722 = vxor.u32 %v706, 2147483648
        %v723 = vxor.u32 %v707, 2147483648
        %v724 = vxor.u32 %v708, 2147483648
        %v725 = vxor.u32 %v709, 2147483648
        %v726 = vxor.u32 %v710, 2147483648
        %v727 = vxor.u32 %v711, 2147483648
        %v728 = vxor.u32 %v712, 2147483648
        %v729 = vxor.u32 %v713, 2147483648
        %v730 = vxor.u32 %v714, 2147483648
        %v731 = vmul.f32 %v715, 1.442695
        %v732 = vpow.pop %v731
        %v733 = vmul.f32 %v716, 1.442695
        %v734 = vpow.pop %v733
        %v735 = vmul.f32 %v717, 1.442695
        %v736 = vpow.pop %v735
        %v737 = vmul.f32 %v718, 1.442695
        %v738 = vpow.pop %v737
        %v739 = vmul.f32 %v719, 1.442695
        %v740 = vpow.pop %v739
        %v741 = vmul.f32 %v720, 1.442695
        %v742 = vpow.pop %v741
        %v743 = vmul.f32 %v721, 1.442695
        %v744 = vpow.pop %v743
        %v745 = vmul.f32 %v722, 1.442695
        %v746 = vpow.pop %v745
        %v747 = vmul.f32 %v723, 1.442695
        %v748 = vpow.pop %v747
        %v749 = vmul.f32 %v724, 1.442695
        %v750 = vpow.pop %v749
        %v751 = vmul.f32 %v725, 1.442695
        %v752 = vpow.pop %v751
        %v753 = vmul.f32 %v726, 1.442695
        %v754 = vpow.pop %v753
        %v755 = vmul.f32 %v727, 1.442695
        %v756 = vpow.pop %v755
        %v757 = vmul.f32 %v728, 1.442695
        %v758 = vpow.pop %v757
        %v759 = vmul.f32 %v729, 1.442695
        %v760 = vpow.pop %v759
        %v761 = vmul.f32 %v730, 1.442695
        %v762 = vpow.pop %v761
        %v763 = vadd.f32 %v732, 1.0
        %v764 = vadd.f32 %v734, 1.0
        %v765 = vadd.f32 %v736, 1.0
        %v766 = vadd.f32 %v738, 1.0
        %v767 = vadd.f32 %v740, 1.0
        %v768 = vadd.f32 %v742, 1.0
        %v769 = vadd.f32 %v744, 1.0
        %v770 = vadd.f32 %v746, 1.0
        %v771 = vadd.f32 %v748, 1.0
        %v772 = vadd.f32 %v750, 1.0
        %v773 = vadd.f32 %v752, 1.0
        %v774 = vadd.f32 %v754, 1.0
        %v775 = vadd.f32 %v756, 1.0
        %v776 = vadd.f32 %v758, 1.0
        %v777 = vadd.f32 %v760, 1.0
        %v778 = vadd.f32 %v762, 1.0
        %v779 = vrcp.pop %v763
        %v780 = vmul.f32 %v763, %v779
        %v781 = vsub.f32 1.0, %v780
        %v782 = vmul.f32 %v779, %v781
        %v783 = vadd.f32 %v779, %v782
        %vm784 = vweird.f32 %v763
        %vm785 = vweird.f32 %v779
        %vm786 = vmor %vm784, %vm785
        %v787 = vsel %vm786, %v779, %v783
        %v788 = vand.u32 2147483647, %v763
        %vm789 = vcmp.eq.f32.partialorder %v788, 8.507059e+37
        %v790 = vand.u32 %v763, 2147483648
        %v791 = vor.u32 1.1754944e-38, %v790
        %v792 = vsel %vm789, %v791, %v787
        %v793 = vmul.f32 1.0, %v792
        %v794 = vrcp.pop %v764
        %v795 = vmul.f32 %v764, %v794
        %v796 = vsub.f32 1.0, %v795
        %v797 = vmul.f32 %v794, %v796
        %v798 = vadd.f32 %v794, %v797
        %vm799 = vweird.f32 %v764
        %vm800 = vweird.f32 %v794
        %vm801 = vmor %vm799, %vm800
        %v802 = vsel %vm801, %v794, %v798
        %v803 = vand.u32 2147483647, %v764
        %vm804 = vcmp.eq.f32.partialorder %v803, 8.507059e+37
        %v805 = vand.u32 %v764, 2147483648
        %v806 = vor.u32 1.1754944e-38, %v805
        %v807 = vsel %vm804, %v806, %v802
        %v808 = vmul.f32 1.0, %v807
        %v809 = vrcp.pop %v765
        %v810 = vmul.f32 %v765, %v809
        %v811 = vsub.f32 1.0, %v810
        %v812 = vmul.f32 %v809, %v811
        %v813 = vadd.f32 %v809, %v812
        %vm814 = vweird.f32 %v765
        %vm815 = vweird.f32 %v809
        %vm816 = vmor %vm814, %vm815
        %v817 = vsel %vm816, %v809, %v813
        %v818 = vand.u32 2147483647, %v765
        %vm819 = vcmp.eq.f32.partialorder %v818, 8.507059e+37
        %v820 = vand.u32 %v765, 2147483648
        %v821 = vor.u32 1.1754944e-38, %v820
        %v822 = vsel %vm819, %v821, %v817
        %v823 = vmul.f32 1.0, %v822
        %v824 = vrcp.pop %v766
        %v825 = vmul.f32 %v766, %v824
        %v826 = vsub.f32 1.0, %v825
        %v827 = vmul.f32 %v824, %v826
        %v828 = vadd.f32 %v824, %v827
        %vm829 = vweird.f32 %v766
        %vm830 = vweird.f32 %v824
        %vm831 = vmor %vm829, %vm830
        %v832 = vsel %vm831, %v824, %v828
        %v833 = vand.u32 2147483647, %v766
        %vm834 = vcmp.eq.f32.partialorder %v833, 8.507059e+37
        %v835 = vand.u32 %v766, 2147483648
        %v836 = vor.u32 1.1754944e-38, %v835
        %v837 = vsel %vm834, %v836, %v832
        %v838 = vmul.f32 1.0, %v837
        %v839 = vrcp.pop %v767
        %v840 = vmul.f32 %v767, %v839
        %v841 = vsub.f32 1.0, %v840
        %v842 = vmul.f32 %v839, %v841
        %v843 = vadd.f32 %v839, %v842
        %vm844 = vweird.f32 %v767
        %vm845 = vweird.f32 %v839
        %vm846 = vmor %vm844, %vm845
        %v847 = vsel %vm846, %v839, %v843
        %v848 = vand.u32 2147483647, %v767
        %vm849 = vcmp.eq.f32.partialorder %v848, 8.507059e+37
        %v850 = vand.u32 %v767, 2147483648
        %v851 = vor.u32 1.1754944e-38, %v850
        %v852 = vsel %vm849, %v851, %v847
        %v853 = vmul.f32 1.0, %v852
        %v854 = vrcp.pop %v768
        %v855 = vmul.f32 %v768, %v854
        %v856 = vsub.f32 1.0, %v855
        %v857 = vmul.f32 %v854, %v856
        %v858 = vadd.f32 %v854, %v857
        %vm859 = vweird.f32 %v768
        %vm860 = vweird.f32 %v854
        %vm861 = vmor %vm859, %vm860
        %v862 = vsel %vm861, %v854, %v858
        %v863 = vand.u32 2147483647, %v768
        %vm864 = vcmp.eq.f32.partialorder %v863, 8.507059e+37
        %v865 = vand.u32 %v768, 2147483648
        %v866 = vor.u32 1.1754944e-38, %v865
        %v867 = vsel %vm864, %v866, %v862
        %v868 = vmul.f32 1.0, %v867
        %v869 = vrcp.pop %v769
        %v870 = vmul.f32 %v769, %v869
        %v871 = vsub.f32 1.0, %v870
        %v872 = vmul.f32 %v869, %v871
        %v873 = vadd.f32 %v869, %v872
        %vm874 = vweird.f32 %v769
        %vm875 = vweird.f32 %v869
        %vm876 = vmor %vm874, %vm875
        %v877 = vsel %vm876, %v869, %v873
        %v878 = vand.u32 2147483647, %v769
        %vm879 = vcmp.eq.f32.partialorder %v878, 8.507059e+37
        %v880 = vand.u32 %v769, 2147483648
        %v881 = vor.u32 1.1754944e-38, %v880
        %v882 = vsel %vm879, %v881, %v877
        %v883 = vmul.f32 1.0, %v882
        %v884 = vrcp.pop %v770
        %v885 = vmul.f32 %v770, %v884
        %v886 = vsub.f32 1.0, %v885
        %v887 = vmul.f32 %v884, %v886
        %v888 = vadd.f32 %v884, %v887
        %vm889 = vweird.f32 %v770
        %vm890 = vweird.f32 %v884
        %vm891 = vmor %vm889, %vm890
        %v892 = vsel %vm891, %v884, %v888
        %v893 = vand.u32 2147483647, %v770
        %vm894 = vcmp.eq.f32.partialorder %v893, 8.507059e+37
        %v895 = vand.u32 %v770, 2147483648
        %v896 = vor.u32 1.1754944e-38, %v895
        %v897 = vsel %vm894, %v896, %v892
        %v898 = vmul.f32 1.0, %v897
        %v899 = vrcp.pop %v771
        %v900 = vmul.f32 %v771, %v899
        %v901 = vsub.f32 1.0, %v900
        %v902 = vmul.f32 %v899, %v901
        %v903 = vadd.f32 %v899, %v902
        %vm904 = vweird.f32 %v771
        %vm905 = vweird.f32 %v899
        %vm906 = vmor %vm904, %vm905
        %v907 = vsel %vm906, %v899, %v903
        %v908 = vand.u32 2147483647, %v771
        %vm909 = vcmp.eq.f32.partialorder %v908, 8.507059e+37
        %v910 = vand.u32 %v771, 2147483648
        %v911 = vor.u32 1.1754944e-38, %v910
        %v912 = vsel %vm909, %v911, %v907
        %v913 = vmul.f32 1.0, %v912
        %v914 = vrcp.pop %v772
        %v915 = vmul.f32 %v772, %v914
        %v916 = vsub.f32 1.0, %v915
        %v917 = vmul.f32 %v914, %v916
        %v918 = vadd.f32 %v914, %v917
        %vm919 = vweird.f32 %v772
        %vm920 = vweird.f32 %v914
        %vm921 = vmor %vm919, %vm920
        %v922 = vsel %vm921, %v914, %v918
        %v923 = vand.u32 2147483647, %v772
        %vm924 = vcmp.eq.f32.partialorder %v923, 8.507059e+37
        %v925 = vand.u32 %v772, 2147483648
        %v926 = vor.u32 1.1754944e-38, %v925
        %v927 = vsel %vm924, %v926, %v922
        %v928 = vmul.f32 1.0, %v927
        %v929 = vrcp.pop %v773
        %v930 = vmul.f32 %v773, %v929
        %v931 = vsub.f32 1.0, %v930
        %v932 = vmul.f32 %v929, %v931
        %v933 = vadd.f32 %v929, %v932
        %vm934 = vweird.f32 %v773
        %vm935 = vweird.f32 %v929
        %vm936 = vmor %vm934, %vm935
        %v937 = vsel %vm936, %v929, %v933
        %v938 = vand.u32 2147483647, %v773
        %vm939 = vcmp.eq.f32.partialorder %v938, 8.507059e+37
        %v940 = vand.u32 %v773, 2147483648
        %v941 = vor.u32 1.1754944e-38, %v940
        %v942 = vsel %vm939, %v941, %v937
        %v943 = vmul.f32 1.0, %v942
        %v944 = vrcp.pop %v774
        %v945 = vmul.f32 %v774, %v944
        %v946 = vsub.f32 1.0, %v945
        %v947 = vmul.f32 %v944, %v946
        %v948 = vadd.f32 %v944, %v947
        %vm949 = vweird.f32 %v774
        %vm950 = vweird.f32 %v944
        %vm951 = vmor %vm949, %vm950
        %v952 = vsel %vm951, %v944, %v948
        %v953 = vand.u32 2147483647, %v774
        %vm954 = vcmp.eq.f32.partialorder %v953, 8.507059e+37
        %v955 = vand.u32 %v774, 2147483648
        %v956 = vor.u32 1.1754944e-38, %v955
        %v957 = vsel %vm954, %v956, %v952
        %v958 = vmul.f32 1.0, %v957
        %v959 = vrcp.pop %v775
        %v960 = vmul.f32 %v775, %v959
        %v961 = vsub.f32 1.0, %v960
        %v962 = vmul.f32 %v959, %v961
        %v963 = vadd.f32 %v959, %v962
        %vm964 = vweird.f32 %v775
        %vm965 = vweird.f32 %v959
        %vm966 = vmor %vm964, %vm965
        %v967 = vsel %vm966, %v959, %v963
        %v968 = vand.u32 2147483647, %v775
        %vm969 = vcmp.eq.f32.partialorder %v968, 8.507059e+37
        %v970 = vand.u32 %v775, 2147483648
        %v971 = vor.u32 1.1754944e-38, %v970
        %v972 = vsel %vm969, %v971, %v967
        %v973 = vmul.f32 1.0, %v972
        %v974 = vrcp.pop %v776
        %v975 = vmul.f32 %v776, %v974
        %v976 = vsub.f32 1.0, %v975
        %v977 = vmul.f32 %v974, %v976
        %v978 = vadd.f32 %v974, %v977
        %vm979 = vweird.f32 %v776
        %vm980 = vweird.f32 %v974
        %vm981 = vmor %vm979, %vm980
        %v982 = vsel %vm981, %v974, %v978
        %v983 = vand.u32 2147483647, %v776
        %vm984 = vcmp.eq.f32.partialorder %v983, 8.507059e+37
        %v985 = vand.u32 %v776, 2147483648
        %v986 = vor.u32 1.1754944e-38, %v985
        %v987 = vsel %vm984, %v986, %v982
        %v988 = vmul.f32 1.0, %v987
        %v989 = vrcp.pop %v777
        %v990 = vmul.f32 %v777, %v989
        %v991 = vsub.f32 1.0, %v990
        %v992 = vmul.f32 %v989, %v991
        %v993 = vadd.f32 %v989, %v992
        %vm994 = vweird.f32 %v777
        %vm995 = vweird.f32 %v989
        %vm996 = vmor %vm994, %vm995
        %v997 = vsel %vm996, %v989, %v993
        %v998 = vand.u32 2147483647, %v777
        %vm999 = vcmp.eq.f32.partialorder %v998, 8.507059e+37
        %v1000 = vand.u32 %v777, 2147483648
        %v1001 = vor.u32 1.1754944e-38, %v1000
        %v1002 = vsel %vm999, %v1001, %v997
        %v1003 = vmul.f32 1.0, %v1002
        %v1004 = vrcp.pop %v778
        %v1005 = vmul.f32 %v778, %v1004
        %v1006 = vsub.f32 1.0, %v1005
        %v1007 = vmul.f32 %v1004, %v1006
        %v1008 = vadd.f32 %v1004, %v1007
        %vm1009 = vweird.f32 %v778
        %vm1010 = vweird.f32 %v1004
        %vm1011 = vmor %vm1009, %vm1010
        %v1012 = vsel %vm1011, %v1004, %v1008
        %v1013 = vand.u32 2147483647, %v778
        %vm1014 = vcmp.eq.f32.partialorder %v1013, 8.507059e+37
        %v1015 = vand.u32 %v778, 2147483648
        %v1016 = vor.u32 1.1754944e-38, %v1015
        %v1017 = vsel %vm1014, %v1016, %v1012
        %v1018 = vmul.f32 1.0, %v1017
        %v1019 = vtanh.pop %v699
        %v1020 = vtanh.pop %v700
        %v1021 = vtanh.pop %v701
        %v1022 = vtanh.pop %v702
        %v1023 = vtanh.pop %v703
        %v1024 = vtanh.pop %v704
        %v1025 = vtanh.pop %v705
        %v1026 = vtanh.pop %v706
        %v1027 = vtanh.pop %v707
        %v1028 = vtanh.pop %v708
        %v1029 = vtanh.pop %v709
        %v1030 = vtanh.pop %v710
        %v1031 = vtanh.pop %v711
        %v1032 = vtanh.pop %v712
        %v1033 = vtanh.pop %v713
        %v1034 = vtanh.pop %v714
        %1051 = vrot.lane.b32.xlu0 %v434, 32
        %v1052 = vpop.permute.xlu0 %1051
        %1053 = vrot.lane.b32.xlu0 %v435, 32
        %v1054 = vpop.permute.xlu0 %1053
        %1055 = vrot.lane.b32.xlu0 %v436, 32
        %v1056 = vpop.permute.xlu0 %1055
        %1057 = vrot.lane.b32.xlu0 %v437, 32
        %v1058 = vpop.permute.xlu0 %1057
        %1059 = vrot.lane.b32.xlu0 %v438, 32
        %v1060 = vpop.permute.xlu0 %1059
        %1061 = vrot.lane.b32.xlu0 %v439, 32
        %v1062 = vpop.permute.xlu0 %1061
        %1063 = vrot.lane.b32.xlu0 %v440, 32
        %v1064 = vpop.permute.xlu0 %1063
        %1065 = vrot.lane.b32.xlu0 %v441, 32
        %v1066 = vpop.permute.xlu0 %1065
        %1067 = vrot.lane.b32.xlu0 %v442, 32
        %v1068 = vpop.permute.xlu0 %1067
        %1069 = vrot.lane.b32.xlu0 %v443, 32
        %v1070 = vpop.permute.xlu0 %1069
        %1071 = vrot.lane.b32.xlu0 %v444, 32
        %v1072 = vpop.permute.xlu0 %1071
        %1073 = vrot.lane.b32.xlu0 %v445, 32
        %v1074 = vpop.permute.xlu0 %1073
        %1075 = vrot.lane.b32.xlu0 %v446, 32
        %v1076 = vpop.permute.xlu0 %1075
        %1077 = vrot.lane.b32.xlu0 %v447, 32
        %v1078 = vpop.permute.xlu0 %1077
        %1079 = vrot.lane.b32.xlu0 %v448, 32
        %v1080 = vpop.permute.xlu0 %1079
        %1081 = vrot.lane.b32.xlu0 %v449, 32
        %v1082 = vpop.permute.xlu0 %1081
        %v1099 = vmul.f32 %v793, %v1052
        %v1100 = vmul.f32 %v808, %v1054
        %v1101 = vmul.f32 %v823, %v1056
        %v1102 = vmul.f32 %v838, %v1058
        %v1103 = vmul.f32 %v853, %v1060
        %v1104 = vmul.f32 %v868, %v1062
        %v1105 = vmul.f32 %v883, %v1064
        %v1106 = vmul.f32 %v898, %v1066
        %v1107 = vmul.f32 %v913, %v1068
        %v1108 = vmul.f32 %v928, %v1070
        %v1109 = vmul.f32 %v943, %v1072
        %v1110 = vmul.f32 %v958, %v1074
        %v1111 = vmul.f32 %v973, %v1076
        %v1112 = vmul.f32 %v988, %v1078
        %v1113 = vmul.f32 %v1003, %v1080
        %v1114 = vmul.f32 %v1018, %v1082
        %1131 = vrot.lane.b32.xlu0 %v1019, 64
        %v1132 = vpop.permute.xlu0 %1131
        %1133 = vrot.lane.b32.xlu0 %v1020, 64
        %v1134 = vpop.permute.xlu0 %1133
        %1135 = vrot.lane.b32.xlu0 %v1021, 64
        %v1136 = vpop.permute.xlu0 %1135
        %1137 = vrot.lane.b32.xlu0 %v1022, 64
        %v1138 = vpop.permute.xlu0 %1137
        %1139 = vrot.lane.b32.xlu0 %v1023, 64
        %v1140 = vpop.permute.xlu0 %1139
        %1141 = vrot.lane.b32.xlu0 %v1024, 64
        %v1142 = vpop.permute.xlu0 %1141
        %1143 = vrot.lane.b32.xlu0 %v1025, 64
        %v1144 = vpop.permute.xlu0 %1143
        %1145 = vrot.lane.b32.xlu0 %v1026, 64
        %v1146 = vpop.permute.xlu0 %1145
        %1147 = vrot.lane.b32.xlu0 %v1027, 64
        %v1148 = vpop.permute.xlu0 %1147
        %1149 = vrot.lane.b32.xlu0 %v1028, 64
        %v1150 = vpop.permute.xlu0 %1149
        %1151 = vrot.lane.b32.xlu0 %v1029, 64
        %v1152 = vpop.permute.xlu0 %1151
        %1153 = vrot.lane.b32.xlu0 %v1030, 64
        %v1154 = vpop.permute.xlu0 %1153
        %1155 = vrot.lane.b32.xlu0 %v1031, 64
        %v1156 = vpop.permute.xlu0 %1155
        %1157 = vrot.lane.b32.xlu0 %v1032, 64
        %v1158 = vpop.permute.xlu0 %1157
        %1159 = vrot.lane.b32.xlu0 %v1033, 64
        %v1160 = vpop.permute.xlu0 %1159
        %1161 = vrot.lane.b32.xlu0 %v1034, 64
        %v1162 = vpop.permute.xlu0 %1161
        %v1179 = vmul.f32 %v793, %v1132
        %v1180 = vmul.f32 %v808, %v1134
        %v1181 = vmul.f32 %v823, %v1136
        %v1182 = vmul.f32 %v838, %v1138
        %v1183 = vmul.f32 %v853, %v1140
        %v1184 = vmul.f32 %v868, %v1142
        %v1185 = vmul.f32 %v883, %v1144
        %v1186 = vmul.f32 %v898, %v1146
        %v1187 = vmul.f32 %v913, %v1148
        %v1188 = vmul.f32 %v928, %v1150
        %v1189 = vmul.f32 %v943, %v1152
        %v1190 = vmul.f32 %v958, %v1154
        %v1191 = vmul.f32 %v973, %v1156
        %v1192 = vmul.f32 %v988, %v1158
        %v1193 = vmul.f32 %v1003, %v1160
        %v1194 = vmul.f32 %v1018, %v1162
        %1211 = vrot.lane.b32.xlu0 %v1179, 32
        %v1212 = vpop.permute.xlu0 %1211
        %1213 = vrot.lane.b32.xlu0 %v1180, 32
        %v1214 = vpop.permute.xlu0 %1213
        %1215 = vrot.lane.b32.xlu0 %v1181, 32
        %v1216 = vpop.permute.xlu0 %1215
        %1217 = vrot.lane.b32.xlu0 %v1182, 32
        %v1218 = vpop.permute.xlu0 %1217
        %1219 = vrot.lane.b32.xlu0 %v1183, 32
        %v1220 = vpop.permute.xlu0 %1219
        %1221 = vrot.lane.b32.xlu0 %v1184, 32
        %v1222 = vpop.permute.xlu0 %1221
        %1223 = vrot.lane.b32.xlu0 %v1185, 32
        %v1224 = vpop.permute.xlu0 %1223
        %1225 = vrot.lane.b32.xlu0 %v1186, 32
        %v1226 = vpop.permute.xlu0 %1225
        %1227 = vrot.lane.b32.xlu0 %v1187, 32
        %v1228 = vpop.permute.xlu0 %1227
        %1229 = vrot.lane.b32.xlu0 %v1188, 32
        %v1230 = vpop.permute.xlu0 %1229
        %1231 = vrot.lane.b32.xlu0 %v1189, 32
        %v1232 = vpop.permute.xlu0 %1231
        %1233 = vrot.lane.b32.xlu0 %v1190, 32
        %v1234 = vpop.permute.xlu0 %1233
        %1235 = vrot.lane.b32.xlu0 %v1191, 32
        %v1236 = vpop.permute.xlu0 %1235
        %1237 = vrot.lane.b32.xlu0 %v1192, 32
        %v1238 = vpop.permute.xlu0 %1237
        %1239 = vrot.lane.b32.xlu0 %v1193, 32
        %v1240 = vpop.permute.xlu0 %1239
        %1241 = vrot.lane.b32.xlu0 %v1194, 32
        %v1242 = vpop.permute.xlu0 %1241
        %v1259 = vadd.f32 %v1099, %v1212
        %v1260 = vadd.f32 %v1100, %v1214
        %v1261 = vadd.f32 %v1101, %v1216
        %v1262 = vadd.f32 %v1102, %v1218
        %v1263 = vadd.f32 %v1103, %v1220
        %v1264 = vadd.f32 %v1104, %v1222
        %v1265 = vadd.f32 %v1105, %v1224
        %v1266 = vadd.f32 %v1106, %v1226
        %v1267 = vadd.f32 %v1107, %v1228
        %v1268 = vadd.f32 %v1108, %v1230
        %v1269 = vadd.f32 %v1109, %v1232
        %v1270 = vadd.f32 %v1110, %v1234
        %v1271 = vadd.f32 %v1111, %v1236
        %v1272 = vadd.f32 %v1112, %v1238
        %v1273 = vadd.f32 %v1113, %v1240
        %v1274 = vadd.f32 %v1114, %v1242
        %v1275 = vtanh.pop %v1259
        %v1276 = vtanh.pop %v1260
        %v1277 = vtanh.pop %v1261
        %v1278 = vtanh.pop %v1262
        %v1279 = vtanh.pop %v1263
        %v1280 = vtanh.pop %v1264
        %v1281 = vtanh.pop %v1265
        %v1282 = vtanh.pop %v1266
        %v1283 = vtanh.pop %v1267
        %v1284 = vtanh.pop %v1268
        %v1285 = vtanh.pop %v1269
        %v1286 = vtanh.pop %v1270
        %v1287 = vtanh.pop %v1271
        %v1288 = vtanh.pop %v1272
        %v1289 = vtanh.pop %v1273
        %v1290 = vtanh.pop %v1274
        %1307 = vrot.lane.b32.xlu0 %v1275, 64
        %v1308 = vpop.permute.xlu0 %1307
        %1309 = vrot.lane.b32.xlu0 %v1276, 64
        %v1310 = vpop.permute.xlu0 %1309
        %1311 = vrot.lane.b32.xlu0 %v1277, 64
        %v1312 = vpop.permute.xlu0 %1311
        %1313 = vrot.lane.b32.xlu0 %v1278, 64
        %v1314 = vpop.permute.xlu0 %1313
        %1315 = vrot.lane.b32.xlu0 %v1279, 64
        %v1316 = vpop.permute.xlu0 %1315
        %1317 = vrot.lane.b32.xlu0 %v1280, 64
        %v1318 = vpop.permute.xlu0 %1317
        %1319 = vrot.lane.b32.xlu0 %v1281, 64
        %v1320 = vpop.permute.xlu0 %1319
        %1321 = vrot.lane.b32.xlu0 %v1282, 64
        %v1322 = vpop.permute.xlu0 %1321
        %1323 = vrot.lane.b32.xlu0 %v1283, 64
        %v1324 = vpop.permute.xlu0 %1323
        %1325 = vrot.lane.b32.xlu0 %v1284, 64
        %v1326 = vpop.permute.xlu0 %1325
        %1327 = vrot.lane.b32.xlu0 %v1285, 64
        %v1328 = vpop.permute.xlu0 %1327
        %1329 = vrot.lane.b32.xlu0 %v1286, 64
        %v1330 = vpop.permute.xlu0 %1329
        %1331 = vrot.lane.b32.xlu0 %v1287, 64
        %v1332 = vpop.permute.xlu0 %1331
        %1333 = vrot.lane.b32.xlu0 %v1288, 64
        %v1334 = vpop.permute.xlu0 %1333
        %1335 = vrot.lane.b32.xlu0 %v1289, 64
        %v1336 = vpop.permute.xlu0 %1335
        %1337 = vrot.lane.b32.xlu0 %v1290, 64
        %v1338 = vpop.permute.xlu0 %1337
        %v1355 = vmul.f32 %v793, %v1308
        %v1356 = vmul.f32 %v808, %v1310
        %v1357 = vmul.f32 %v823, %v1312
        %v1358 = vmul.f32 %v838, %v1314
        %v1359 = vmul.f32 %v853, %v1316
        %v1360 = vmul.f32 %v868, %v1318
        %v1361 = vmul.f32 %v883, %v1320
        %v1362 = vmul.f32 %v898, %v1322
        %v1363 = vmul.f32 %v913, %v1324
        %v1364 = vmul.f32 %v928, %v1326
        %v1365 = vmul.f32 %v943, %v1328
        %v1366 = vmul.f32 %v958, %v1330
        %v1367 = vmul.f32 %v973, %v1332
        %v1368 = vmul.f32 %v988, %v1334
        %v1369 = vmul.f32 %v1003, %v1336
        %v1370 = vmul.f32 %v1018, %v1338
        %1387 = vrot.lane.b32.xlu0 %v1355, 32
        %v1388 = vpop.permute.xlu0 %1387
        %1389 = vrot.lane.b32.xlu0 %v1356, 32
        %v1390 = vpop.permute.xlu0 %1389
        %1391 = vrot.lane.b32.xlu0 %v1357, 32
        %v1392 = vpop.permute.xlu0 %1391
        %1393 = vrot.lane.b32.xlu0 %v1358, 32
        %v1394 = vpop.permute.xlu0 %1393
        %1395 = vrot.lane.b32.xlu0 %v1359, 32
        %v1396 = vpop.permute.xlu0 %1395
        %1397 = vrot.lane.b32.xlu0 %v1360, 32
        %v1398 = vpop.permute.xlu0 %1397
        %1399 = vrot.lane.b32.xlu0 %v1361, 32
        %v1400 = vpop.permute.xlu0 %1399
        %1401 = vrot.lane.b32.xlu0 %v1362, 32
        %v1402 = vpop.permute.xlu0 %1401
        %1403 = vrot.lane.b32.xlu0 %v1363, 32
        %v1404 = vpop.permute.xlu0 %1403
        %1405 = vrot.lane.b32.xlu0 %v1364, 32
        %v1406 = vpop.permute.xlu0 %1405
        %1407 = vrot.lane.b32.xlu0 %v1365, 32
        %v1408 = vpop.permute.xlu0 %1407
        %1409 = vrot.lane.b32.xlu0 %v1366, 32
        %v1410 = vpop.permute.xlu0 %1409
        %1411 = vrot.lane.b32.xlu0 %v1367, 32
        %v1412 = vpop.permute.xlu0 %1411
        %1413 = vrot.lane.b32.xlu0 %v1368, 32
        %v1414 = vpop.permute.xlu0 %1413
        %1415 = vrot.lane.b32.xlu0 %v1369, 32
        %v1416 = vpop.permute.xlu0 %1415
        %1417 = vrot.lane.b32.xlu0 %v1370, 32
        %v1418 = vpop.permute.xlu0 %1417
        %1451 = vrot.lane.b32.xlu0 %v1259, 96
        %v1452 = vpop.permute.xlu0 %1451
        %1453 = vrot.lane.b32.xlu0 %v1260, 96
        %v1454 = vpop.permute.xlu0 %1453
        %1455 = vrot.lane.b32.xlu0 %v1261, 96
        %v1456 = vpop.permute.xlu0 %1455
        %1457 = vrot.lane.b32.xlu0 %v1262, 96
        %v1458 = vpop.permute.xlu0 %1457
        %1459 = vrot.lane.b32.xlu0 %v1263, 96
        %v1460 = vpop.permute.xlu0 %1459
        %1461 = vrot.lane.b32.xlu0 %v1264, 96
        %v1462 = vpop.permute.xlu0 %1461
        %1463 = vrot.lane.b32.xlu0 %v1265, 96
        %v1464 = vpop.permute.xlu0 %1463
        %1465 = vrot.lane.b32.xlu0 %v1266, 96
        %v1466 = vpop.permute.xlu0 %1465
        %1467 = vrot.lane.b32.xlu0 %v1267, 96
        %v1468 = vpop.permute.xlu0 %1467
        %1469 = vrot.lane.b32.xlu0 %v1268, 96
        %v1470 = vpop.permute.xlu0 %1469
        %1471 = vrot.lane.b32.xlu0 %v1269, 96
        %v1472 = vpop.permute.xlu0 %1471
        %1473 = vrot.lane.b32.xlu0 %v1270, 96
        %v1474 = vpop.permute.xlu0 %1473
        %1475 = vrot.lane.b32.xlu0 %v1271, 96
        %v1476 = vpop.permute.xlu0 %1475
        %1477 = vrot.lane.b32.xlu0 %v1272, 96
        %v1478 = vpop.permute.xlu0 %1477
        %1479 = vrot.lane.b32.xlu0 %v1273, 96
        %v1480 = vpop.permute.xlu0 %1479
        %1481 = vrot.lane.b32.xlu0 %v1274, 96
        %v1482 = vpop.permute.xlu0 %1481
      $region61: #{dpl_lstm_sac_forward.2} parent=51 // loop_footer
        %s417 = sadd.s32 1, %s413
      $region62: #{dpl_lstm_sac_forward.2} parent=51 // loop_footer_branch
        %412 = sbr.rel target = $region58
      $region63: #{dpl_lstm_sac_forward.2} parent=51 // loop_exit
        _
      %vm1499 = vcmask 261120
      %1500 = vst.msk [vmem:[#allocation2] sm:$0xff] %vm1499, %v418
      %1501 = vst.msk [vmem:[#allocation2 + $0x8] sm:$0xff] %vm1499, %v419
      %1502 = vst.msk [vmem:[#allocation2 + $0x10] sm:$0xff] %vm1499, %v420
      %1503 = vst.msk [vmem:[#allocation2 + $0x18] sm:$0xff] %vm1499, %v421
      %1504 = vst.msk [vmem:[#allocation2 + $0x20] sm:$0xff] %vm1499, %v422
      %1505 = vst.msk [vmem:[#allocation2 + $0x28] sm:$0xff] %vm1499, %v423
      %1506 = vst.msk [vmem:[#allocation2 + $0x30] sm:$0xff] %vm1499, %v424
      %1507 = vst.msk [vmem:[#allocation2 + $0x38] sm:$0xff] %vm1499, %v425
      %1508 = vst.msk [vmem:[#allocation2 + $0x40] sm:$0xff] %vm1499, %v426
      %1509 = vst.msk [vmem:[#allocation2 + $0x48] sm:$0xff] %vm1499, %v427
      %1510 = vst.msk [vmem:[#allocation2 + $0x50] sm:$0xff] %vm1499, %v428
      %1511 = vst.msk [vmem:[#allocation2 + $0x58] sm:$0xff] %vm1499, %v429
      %1512 = vst.msk [vmem:[#allocation2 + $0x60] sm:$0xff] %vm1499, %v430
      %1513 = vst.msk [vmem:[#allocation2 + $0x68] sm:$0xff] %vm1499, %v431
      %1514 = vst.msk [vmem:[#allocation2 + $0x70] sm:$0xff] %vm1499, %v432
      %1515 = vst.msk [vmem:[#allocation2 + $0x78] sm:$0xff] %vm1499, %v433
      %1516 = vst.msk [vmem:[#allocation3] sm:$0xff] %vm1499, %v434
      %1517 = vst.msk [vmem:[#allocation3 + $0x8] sm:$0xff] %vm1499, %v435
      %1518 = vst.msk [vmem:[#allocation3 + $0x10] sm:$0xff] %vm1499, %v436
      %1519 = vst.msk [vmem:[#allocation3 + $0x18] sm:$0xff] %vm1499, %v437
      %1520 = vst.msk [vmem:[#allocation3 + $0x20] sm:$0xff] %vm1499, %v438
      %1521 = vst.msk [vmem:[#allocation3 + $0x28] sm:$0xff] %vm1499, %v439
      %1522 = vst.msk [vmem:[#allocation3 + $0x30] sm:$0xff] %vm1499, %v440
      %1523 = vst.msk [vmem:[#allocation3 + $0x38] sm:$0xff] %vm1499, %v441
      %1524 = vst.msk [vmem:[#allocation3 + $0x40] sm:$0xff] %vm1499, %v442
      %1525 = vst.msk [vmem:[#allocation3 + $0x48] sm:$0xff] %vm1499, %v443
      %1526 = vst.msk [vmem:[#allocation3 + $0x50] sm:$0xff] %vm1499, %v444
      %1527 = vst.msk [vmem:[#allocation3 + $0x58] sm:$0xff] %vm1499, %v445
      %1528 = vst.msk [vmem:[#allocation3 + $0x60] sm:$0xff] %vm1499, %v446
      %1529 = vst.msk [vmem:[#allocation3 + $0x68] sm:$0xff] %vm1499, %v447
      %1530 = vst.msk [vmem:[#allocation3 + $0x70] sm:$0xff] %vm1499, %v448
      %1531 = vst.msk [vmem:[#allocation3 + $0x78] sm:$0xff] %vm1499, %v449
      %p1532 = scmp.eq.s32.totalorder %s24, 3
      // Predicated region
      $region64: #{dpl_lstm_sac_forward.2} parent=51 // pred_check
        %p1533 = pneg %p1532
      $region65: #{dpl_lstm_sac_forward.2} parent=51 // pred_check_branch
        %1535 = sbr.rel (%p1533) target = $region67
      $region66: #{dpl_lstm_sac_forward.2} parent=51 // pred_region
        %v1536 = vld [vmem:[%s4] sm:$0xff]
        %v1537 = vld [vmem:[%s4 + $0x8] sm:$0xff]
        %v1538 = vld [vmem:[%s4 + $0x10] sm:$0xff]
        %v1539 = vld [vmem:[%s4 + $0x18] sm:$0xff]
        %v1540 = vld [vmem:[%s5] sm:$0x1]
        %v1542 = vperm.slane %v1540, 0
        %v1545 = vsel %vm1499, %v418, 0
        %v1548 = vsel %vm1499, %v419, 0
        %v1551 = vsel %vm1499, %v420, 0
        %v1554 = vsel %vm1499, %v421, 0
        %v1557 = vsel %vm1499, %v422, 0
        %v1560 = vsel %vm1499, %v423, 0
        %v1563 = vsel %vm1499, %v424, 0
        %v1566 = vsel %vm1499, %v425, 0
        %v1569 = vsel %vm1499, %v426, 0
        %v1572 = vsel %vm1499, %v427, 0
        %v1575 = vsel %vm1499, %v428, 0
        %v1578 = vsel %vm1499, %v429, 0
        %v1581 = vsel %vm1499, %v430, 0
        %v1584 = vsel %vm1499, %v431, 0
        %v1587 = vsel %vm1499, %v432, 0
        %v1590 = vsel %vm1499, %v433, 0
        %1592 = vmatpush.msra.mxu0 0.0
        %1593 = vmatpush.msra.mxu0 0.0
        %1594 = vmatpush.msra.mxu0 0.0
        %1595 = vmatpush.msra.mxu0 0.0
        %1596 = vmatpush.msra.mxu0 0.0
        %1597 = vmatpush.msra.mxu0 0.0
        %1598 = vmatpush.msra.mxu0 0.0
        %1599 = vmatpush.msra.mxu0 0.0
        %1600 = vmatpush.msra.mxu0 0.0
        %1601 = vmatpush.msra.mxu0 0.0
        %1602 = vmatpush.msra.mxu0 0.0
        %1603 = vmatpush.msra.mxu0 0.0
        %1604 = vmatpush.msra.mxu0 %v1539
        %1605 = vmatpush.msra.mxu0 %v1538
        %1606 = vmatpush.msra.mxu0 %v1537
        %1607 = vmatpush.msra.mxu0 %v1536
        %1608 = vmatmul.f32.gmra.mxu0 %v1545
        %v1609 = vpop.f32.mrf.mxu0
        %v1610 = vadd.f32 %v1542, %v1609
        %1611 = vmatmul.f32.gmra.mxu0 %v1548
        %v1612 = vpop.f32.mrf.mxu0
        %v1613 = vadd.f32 %v1542, %v1612
        %1614 = vmatmul.f32.gmra.mxu0 %v1551
        %v1615 = vpop.f32.mrf.mxu0
        %v1616 = vadd.f32 %v1542, %v1615
        %1617 = vmatmul.f32.gmra.mxu0 %v1554
        %v1618 = vpop.f32.mrf.mxu0
        %v1619 = vadd.f32 %v1542, %v1618
        %1620 = vmatmul.f32.gmra.mxu0 %v1557
        %v1621 = vpop.f32.mrf.mxu0
        %v1622 = vadd.f32 %v1542, %v1621
        %1623 = vmatmul.f32.gmra.mxu0 %v1560
        %v1624 = vpop.f32.mrf.mxu0
        %v1625 = vadd.f32 %v1542, %v1624
        %1626 = vmatmul.f32.gmra.mxu0 %v1563
        %v1627 = vpop.f32.mrf.mxu0
        %v1628 = vadd.f32 %v1542, %v1627
        %1629 = vmatmul.f32.gmra.mxu0 %v1566
        %v1630 = vpop.f32.mrf.mxu0
        %v1631 = vadd.f32 %v1542, %v1630
        %1632 = vmatmul.f32.gmra.mxu0 %v1569
        %v1633 = vpop.f32.mrf.mxu0
        %v1634 = vadd.f32 %v1542, %v1633
        %1635 = vmatmul.f32.gmra.mxu0 %v1572
        %v1636 = vpop.f32.mrf.mxu0
        %v1637 = vadd.f32 %v1542, %v1636
        %1638 = vmatmul.f32.gmra.mxu0 %v1575
        %v1639 = vpop.f32.mrf.mxu0
        %v1640 = vadd.f32 %v1542, %v1639
        %1641 = vmatmul.f32.gmra.mxu0 %v1578
        %v1642 = vpop.f32.mrf.mxu0
        %v1643 = vadd.f32 %v1542, %v1642
        %1644 = vmatmul.f32.gmra.mxu0 %v1581
        %v1645 = vpop.f32.mrf.mxu0
        %v1646 = vadd.f32 %v1542, %v1645
        %1647 = vmatmul.f32.gmra.mxu0 %v1584
        %v1648 = vpop.f32.mrf.mxu0
        %v1649 = vadd.f32 %v1542, %v1648
        %1650 = vmatmul.f32.gmra.mxu0 %v1587
        %v1651 = vpop.f32.mrf.mxu0
        %v1652 = vadd.f32 %v1542, %v1651
        %1653 = vmatmul.f32.gmra.mxu0 %v1590
        %v1654 = vpop.f32.mrf.mxu0
        %v1655 = vadd.f32 %v1542, %v1654
        %1656 = vdwg.mxu0
        %v1657 = vmax.f32 %v1610, 0.0
        %v1658 = vmax.f32 %v1613, 0.0
        %v1659 = vmax.f32 %v1616, 0.0
        %v1660 = vmax.f32 %v1619, 0.0
        %v1661 = vmax.f32 %v1622, 0.0
        %v1662 = vmax.f32 %v1625, 0.0
        %v1663 = vmax.f32 %v1628, 0.0
        %v1664 = vmax.f32 %v1631, 0.0
        %v1665 = vmax.f32 %v1634, 0.0
        %v1666 = vmax.f32 %v1637, 0.0
        %v1667 = vmax.f32 %v1640, 0.0
        %v1668 = vmax.f32 %v1643, 0.0
        %v1669 = vmax.f32 %v1646, 0.0
        %v1670 = vmax.f32 %v1649, 0.0
        %v1671 = vmax.f32 %v1652, 0.0
        %v1672 = vmax.f32 %v1655, 0.0
        %v1673 = vmin.f32 %v1657, 1.0
        %v1674 = vmin.f32 %v1658, 1.0
        %v1675 = vmin.f32 %v1659, 1.0
        %v1676 = vmin.f32 %v1660, 1.0
        %v1677 = vmin.f32 %v1661, 1.0
        %v1678 = vmin.f32 %v1662, 1.0
        %v1679 = vmin.f32 %v1663, 1.0
        %v1680 = vmin.f32 %v1664, 1.0
        %v1681 = vmin.f32 %v1665, 1.0
        %v1682 = vmin.f32 %v1666, 1.0
        %v1683 = vmin.f32 %v1667, 1.0
        %v1684 = vmin.f32 %v1668, 1.0
        %v1685 = vmin.f32 %v1669, 1.0
        %v1686 = vmin.f32 %v1670, 1.0
        %v1687 = vmin.f32 %v1671, 1.0
        %v1688 = vmin.f32 %v1672, 1.0
        %v1689 = vld [vmem:[%s6] sm:$0xff]
        %v1690 = vld [vmem:[%s6 + $0x8] sm:$0xff]
        %v1691 = vld [vmem:[%s6 + $0x10] sm:$0xff]
        %v1692 = vld [vmem:[%s6 + $0x18] sm:$0xff]
        %v1693 = vld [vmem:[%s6 + $0x20] sm:$0xff]
        %v1694 = vld [vmem:[%s6 + $0x28] sm:$0xff]
        %v1695 = vld [vmem:[%s6 + $0x30] sm:$0xff]
        %v1696 = vld [vmem:[%s6 + $0x38] sm:$0xff]
        %v1697 = vld [vmem:[%s6 + $0x40] sm:$0xff]
        %v1698 = vld [vmem:[%s6 + $0x48] sm:$0xff]
        %v1699 = vld [vmem:[%s6 + $0x50] sm:$0xff]
        %v1700 = vld [vmem:[%s6 + $0x58] sm:$0xff]
        %v1701 = vld [vmem:[%s6 + $0x60] sm:$0xff]
        %v1702 = vld [vmem:[%s6 + $0x68] sm:$0xff]
        %v1703 = vld [vmem:[%s6 + $0x70] sm:$0xff]
        %v1704 = vld [vmem:[%s6 + $0x78] sm:$0xff]
        %1705 = vxpose.xlu0.b32.start [1/16] %v1673, 128
        %1706 = vxpose.xlu0.b32.cont [2/16] %v1674, 128
        %1707 = vxpose.xlu0.b32.cont [3/16] %v1675, 128
        %1708 = vxpose.xlu0.b32.cont [4/16] %v1676, 128
        %1709 = vxpose.xlu0.b32.cont [5/16] %v1677, 128
        %1710 = vxpose.xlu0.b32.cont [6/16] %v1678, 128
        %1711 = vxpose.xlu0.b32.cont [7/16] %v1679, 128
        %1712 = vxpose.xlu0.b32.cont [8/16] %v1680, 128
        %1713 = vxpose.xlu0.b32.cont [9/16] %v1681, 128
        %1714 = vxpose.xlu0.b32.cont [10/16] %v1682, 128
        %1715 = vxpose.xlu0.b32.cont [11/16] %v1683, 128
        %1716 = vxpose.xlu0.b32.cont [12/16] %v1684, 128
        %1717 = vxpose.xlu0.b32.cont [13/16] %v1685, 128
        %1718 = vxpose.xlu0.b32.cont [14/16] %v1686, 128
        %1719 = vxpose.xlu0.b32.cont [15/16] %v1687, 128
        %1720 = vxpose.xlu0.b32.end [16/16] %v1688, 128
        %v1721 = vpop.trf.xlu0
        %v1722 = vpop.trf.xlu0
        %v1723 = vpop.trf.xlu0
        %v1724 = vpop.trf.xlu0
        %v1725 = vpop.trf.xlu0
        %v1726 = vpop.trf.xlu0
        %v1727 = vpop.trf.xlu0
        %v1728 = vpop.trf.xlu0
        %v1729 = vpop.trf.xlu0
        %v1730 = vpop.trf.xlu0
        %v1731 = vpop.trf.xlu0
        %v1732 = vpop.trf.xlu0
        %v1733 = vpop.trf.xlu0
        %v1734 = vpop.trf.xlu0
        %v1735 = vpop.trf.xlu0
        %v1736 = vpop.trf.xlu0
        %v1737 = vld [vmem:[%s7] sm:$0xff]
        %v1738 = vld [vmem:[%s7 + $0x8] sm:$0xff]
        %v1739 = vld [vmem:[%s7 + $0x10] sm:$0xff]
        %v1740 = vld [vmem:[%s7 + $0x18] sm:$0xff]
        %v1741 = vld [vmem:[%s7 + $0x20] sm:$0xff]
        %v1742 = vld [vmem:[%s7 + $0x28] sm:$0xff]
        %v1743 = vld [vmem:[%s7 + $0x30] sm:$0xff]
        %v1744 = vld [vmem:[%s7 + $0x38] sm:$0xff]
        %v1745 = vld [vmem:[%s7 + $0x40] sm:$0xff]
        %v1746 = vld [vmem:[%s7 + $0x48] sm:$0xff]
        %v1747 = vld [vmem:[%s7 + $0x50] sm:$0xff]
        %v1748 = vld [vmem:[%s7 + $0x58] sm:$0xff]
        %v1749 = vld [vmem:[%s7 + $0x60] sm:$0xff]
        %v1750 = vld [vmem:[%s7 + $0x68] sm:$0xff]
        %v1751 = vld [vmem:[%s7 + $0x70] sm:$0xff]
        %v1752 = vld [vmem:[%s7 + $0x78] sm:$0xff]
        %1754 = vset.pattern.permute.xlu0 0
        %1755 = vperm.xlu0 %1754, %v1737
        %v1756 = vpop.permute.xlu0 %1755
        %1759 = vset.pattern.permute.xlu0 0
        %1760 = vperm.xlu0 %1759, %v1738
        %v1761 = vpop.permute.xlu0 %1760
        %1764 = vset.pattern.permute.xlu0 0
        %1765 = vperm.xlu0 %1764, %v1739
        %v1766 = vpop.permute.xlu0 %1765
        %1769 = vset.pattern.permute.xlu0 0
        %1770 = vperm.xlu0 %1769, %v1740
        %v1771 = vpop.permute.xlu0 %1770
        %1774 = vset.pattern.permute.xlu0 0
        %1775 = vperm.xlu0 %1774, %v1741
        %v1776 = vpop.permute.xlu0 %1775
        %1779 = vset.pattern.permute.xlu0 0
        %1780 = vperm.xlu0 %1779, %v1742
        %v1781 = vpop.permute.xlu0 %1780
        %1784 = vset.pattern.permute.xlu0 0
        %1785 = vperm.xlu0 %1784, %v1743
        %v1786 = vpop.permute.xlu0 %1785
        %1789 = vset.pattern.permute.xlu0 0
        %1790 = vperm.xlu0 %1789, %v1744
        %v1791 = vpop.permute.xlu0 %1790
        %1794 = vset.pattern.permute.xlu0 0
        %1795 = vperm.xlu0 %1794, %v1745
        %v1796 = vpop.permute.xlu0 %1795
        %1799 = vset.pattern.permute.xlu0 0
        %1800 = vperm.xlu0 %1799, %v1746
        %v1801 = vpop.permute.xlu0 %1800
        %1804 = vset.pattern.permute.xlu0 0
        %1805 = vperm.xlu0 %1804, %v1747
        %v1806 = vpop.permute.xlu0 %1805
        %1809 = vset.pattern.permute.xlu0 0
        %1810 = vperm.xlu0 %1809, %v1748
        %v1811 = vpop.permute.xlu0 %1810
        %1814 = vset.pattern.permute.xlu0 0
        %1815 = vperm.xlu0 %1814, %v1749
        %v1816 = vpop.permute.xlu0 %1815
        %1819 = vset.pattern.permute.xlu0 0
        %1820 = vperm.xlu0 %1819, %v1750
        %v1821 = vpop.permute.xlu0 %1820
        %1824 = vset.pattern.permute.xlu0 0
        %1825 = vperm.xlu0 %1824, %v1751
        %v1826 = vpop.permute.xlu0 %1825
        %1829 = vset.pattern.permute.xlu0 0
        %1830 = vperm.xlu0 %1829, %v1752
        %v1831 = vpop.permute.xlu0 %1830
        %v1833 = vmul.f32 %v1721, %v1756
        %v1834 = vmul.f32 %v1722, %v1761
        %v1835 = vmul.f32 %v1723, %v1766
        %v1836 = vmul.f32 %v1724, %v1771
        %v1837 = vmul.f32 %v1725, %v1776
        %v1838 = vmul.f32 %v1726, %v1781
        %v1839 = vmul.f32 %v1727, %v1786
        %v1840 = vmul.f32 %v1728, %v1791
        %v1841 = vmul.f32 %v1729, %v1796
        %v1842 = vmul.f32 %v1730, %v1801
        %v1843 = vmul.f32 %v1731, %v1806
        %v1844 = vmul.f32 %v1732, %v1811
        %v1845 = vmul.f32 %v1733, %v1816
        %v1846 = vmul.f32 %v1734, %v1821
        %v1847 = vmul.f32 %v1735, %v1826
        %v1848 = vmul.f32 %v1736, %v1831
        %1850 = vset.pattern.permute.xlu0 0
        %1851 = vperm.xlu0 %1850, %v1689
        %v1852 = vpop.permute.xlu0 %1851
        %1855 = vset.pattern.permute.xlu0 0
        %1856 = vperm.xlu0 %1855, %v1690
        %v1857 = vpop.permute.xlu0 %1856
        %1860 = vset.pattern.permute.xlu0 0
        %1861 = vperm.xlu0 %1860, %v1691
        %v1862 = vpop.permute.xlu0 %1861
        %1865 = vset.pattern.permute.xlu0 0
        %1866 = vperm.xlu0 %1865, %v1692
        %v1867 = vpop.permute.xlu0 %1866
        %1870 = vset.pattern.permute.xlu0 0
        %1871 = vperm.xlu0 %1870, %v1693
        %v1872 = vpop.permute.xlu0 %1871
        %1875 = vset.pattern.permute.xlu0 0
        %1876 = vperm.xlu0 %1875, %v1694
        %v1877 = vpop.permute.xlu0 %1876
        %1880 = vset.pattern.permute.xlu0 0
        %1881 = vperm.xlu0 %1880, %v1695
        %v1882 = vpop.permute.xlu0 %1881
        %1885 = vset.pattern.permute.xlu0 0
        %1886 = vperm.xlu0 %1885, %v1696
        %v1887 = vpop.permute.xlu0 %1886
        %1890 = vset.pattern.permute.xlu0 0
        %1891 = vperm.xlu0 %1890, %v1697
        %v1892 = vpop.permute.xlu0 %1891
        %1895 = vset.pattern.permute.xlu0 0
        %1896 = vperm.xlu0 %1895, %v1698
        %v1897 = vpop.permute.xlu0 %1896
        %1900 = vset.pattern.permute.xlu0 0
        %1901 = vperm.xlu0 %1900, %v1699
        %v1902 = vpop.permute.xlu0 %1901
        %1905 = vset.pattern.permute.xlu0 0
        %1906 = vperm.xlu0 %1905, %v1700
        %v1907 = vpop.permute.xlu0 %1906
        %1910 = vset.pattern.permute.xlu0 0
        %1911 = vperm.xlu0 %1910, %v1701
        %v1912 = vpop.permute.xlu0 %1911
        %1915 = vset.pattern.permute.xlu0 0
        %1916 = vperm.xlu0 %1915, %v1702
        %v1917 = vpop.permute.xlu0 %1916
        %1920 = vset.pattern.permute.xlu0 0
        %1921 = vperm.xlu0 %1920, %v1703
        %v1922 = vpop.permute.xlu0 %1921
        %1925 = vset.pattern.permute.xlu0 0
        %1926 = vperm.xlu0 %1925, %v1704
        %v1927 = vpop.permute.xlu0 %1926
        %v1929 = vadd.f32 %v1852, %v1833
        %v1930 = vadd.f32 %v1857, %v1834
        %v1931 = vadd.f32 %v1862, %v1835
        %v1932 = vadd.f32 %v1867, %v1836
        %v1933 = vadd.f32 %v1872, %v1837
        %v1934 = vadd.f32 %v1877, %v1838
        %v1935 = vadd.f32 %v1882, %v1839
        %v1936 = vadd.f32 %v1887, %v1840
        %v1937 = vadd.f32 %v1892, %v1841
        %v1938 = vadd.f32 %v1897, %v1842
        %v1939 = vadd.f32 %v1902, %v1843
        %v1940 = vadd.f32 %v1907, %v1844
        %v1941 = vadd.f32 %v1912, %v1845
        %v1942 = vadd.f32 %v1917, %v1846
        %v1943 = vadd.f32 %v1922, %v1847
        %v1944 = vadd.f32 %v1927, %v1848
        %1945 = vst [vmem:[%s336] sm:$0xff] %v1929
        %1946 = vst [vmem:[%s336 + $0x8] sm:$0xff] %v1930
        %1947 = vst [vmem:[%s336 + $0x10] sm:$0xff] %v1931
        %1948 = vst [vmem:[%s336 + $0x18] sm:$0xff] %v1932
        %1949 = vst [vmem:[%s336 + $0x20] sm:$0xff] %v1933
        %1950 = vst [vmem:[%s336 + $0x28] sm:$0xff] %v1934
        %1951 = vst [vmem:[%s336 + $0x30] sm:$0xff] %v1935
        %1952 = vst [vmem:[%s336 + $0x38] sm:$0xff] %v1936
        %1953 = vst [vmem:[%s336 + $0x40] sm:$0xff] %v1937
        %1954 = vst [vmem:[%s336 + $0x48] sm:$0xff] %v1938
        %1955 = vst [vmem:[%s336 + $0x50] sm:$0xff] %v1939
        %1956 = vst [vmem:[%s336 + $0x58] sm:$0xff] %v1940
        %1957 = vst [vmem:[%s336 + $0x60] sm:$0xff] %v1941
        %1958 = vst [vmem:[%s336 + $0x68] sm:$0xff] %v1942
        %1959 = vst [vmem:[%s336 + $0x70] sm:$0xff] %v1943
        %1960 = vst [vmem:[%s336 + $0x78] sm:$0xff] %v1944
      $region67: #{dpl_lstm_sac_forward.2} parent=51 // pred_fallthru
        _
      %p1961 = scmp.lt.s32.totalorder %s23, 0
      %s1962 = scalar_select %p1961, %s23, 0
      %s1963 = smul.addr %s1962, 8
      %s1964 = scalar_lea.vmem %s8, %s1963
      // Predicated region
      $region68: #{dpl_lstm_sac_forward.2} parent=51 // pred_check
        %p1965 = pneg %p224
      $region69: #{dpl_lstm_sac_forward.2} parent=51 // pred_check_branch
        %1967 = sbr.rel (%p1965) target = $region71
      $region70: #{dpl_lstm_sac_forward.2} parent=51 // pred_region
        _
      $region71: #{dpl_lstm_sac_forward.2} parent=51 // pred_fallthru
        _
      // Predicated region
      $region72: #{dpl_lstm_sac_forward.2} parent=51 // pred_check
        %p1968 = pneg %p224
      $region73: #{dpl_lstm_sac_forward.2} parent=51 // pred_check_branch
        %1970 = sbr.rel (%p1968) target = $region75
      $region74: #{dpl_lstm_sac_forward.2} parent=51 // pred_region
        %p1971 = scmp.lt.s32.totalorder %s23, 0
        %s1972 = scalar_select %p1971, %s23, 0
        %s1973 = smul.addr %s1972, 8
        %s1974 = scalar_lea.vmem %s8, %s1973
      $region75: #{dpl_lstm_sac_forward.2} parent=51 // pred_fallthru
        _
    $region52: #{dpl_lstm_sac_forward.2} parent=5 // pred_fallthru
      _
    %p1975 = scmp.le.s32.totalorder 2, %s14
    // Predicated region
    $region76: #{dpl_lstm_sac_forward.2} parent=5 // pred_check
      %p1976 = pneg %p1975
    $region77: #{dpl_lstm_sac_forward.2} parent=5 // pred_check_branch
      %1978 = sbr.rel (%p1976) target = $region79
    $region78: #{dpl_lstm_sac_forward.2} parent=5 // pred_region
      %s1979 = ssub.s32 %s14, 2
    $region79: #{dpl_lstm_sac_forward.2} parent=5 // pred_fallthru
      _
  $region6: #{dpl_lstm_sac_forward.2} parent=0 // loop_footer
    %s18 = sadd.s32 1, %s14
  $region7: #{dpl_lstm_sac_forward.2} parent=0 // loop_footer_branch
    %13 = sbr.rel target = $region3
  $region8: #{dpl_lstm_sac_forward.2} parent=0 // loop_exit
    _

</llo_original>
